<compile_context>
chip_gen: v6e
topology: v6e:2x2x1
jax: 0.10.0
libtpu: 0.0.40
codegen_flags: <defaults>
</compile_context>

<pallas_src>
import math

import numpy as np
import jax
import jax.numpy as jnp
from jax.experimental import pallas as pl

# ----------------------- config (small, GPT2-like) -------------------------
VOCAB = 128
N_POSITIONS = 64
N_EMBD = 32
N_HEAD = 4
N_LAYER = 2
EPS = 1e-5
INIT_RANGE = 0.02

BATCH = 2
SEQ = 8


# ----------------------------- shared math ---------------------------------
def _gelu(x):
    # GPT-2 tanh-approximation gelu (matches the torch reference `gelu`)
    return 0.5 * x * (1.0 + jnp.tanh(
        jnp.sqrt(jnp.float32(2.0 / math.pi)) * (x + 0.044715 * x * x * x)))


def _layernorm(x, gamma, beta, eps):
    mean = jnp.mean(x, axis=-1, keepdims=True)
    var = jnp.mean((x - mean) ** 2, axis=-1, keepdims=True)
    return (x - mean) / jnp.sqrt(var + eps) * gamma + beta


# ---------------------- single fused forward kernel -------------------------
# Inputs: hidden (B*S, E), block-causal mask (B*S, B*S),
#         per layer: ln1_g, ln1_b, wq, bq, wk, bk, wv, bv,
#                    attn_proj_w, attn_proj_b, ln2_g, ln2_b,
#                    fc_w, fc_b, mlp_proj_w, mlp_proj_b          (16 refs/layer)
#         then: lnf_g, lnf_b, wte, lm_b
# Output: logits (B*S, V)  -- lane-dense (V = 128).
def gpt2_forward_kernel(x_ref, mask_ref, *refs):
    o_ref = refs[-1]
    p = refs[:-1]

    x = x_ref[...]                                    # (B*S, E) f32
    allowed = mask_ref[...] > 0.0                     # (B*S, B*S) block-causal
    d = N_EMBD // N_HEAD
    inv_sqrt_d = jnp.float32(1.0 / math.sqrt(d))
    neg = jnp.float32(-10000.0)

    idx = 0
    for _ in range(N_LAYER):
        (ln1_g, ln1_b, wq, bq, wk, bk, wv, bv,
         w_ap, b_ap, ln2_g, ln2_b, w_fc, b_fc, w_mp, b_mp) = p[idx:idx + 16]
        idx += 16

        # --- ln_1 + c_attn (q/k/v); 1/sqrt(d) folded into q ---
        h = _layernorm(x, ln1_g[...], ln1_b[...], EPS)
        q = (jnp.dot(h, wq[...], preferred_element_type=jnp.float32)
             + bq[...]) * inv_sqrt_d
        k = jnp.dot(h, wk[...], preferred_element_type=jnp.float32) + bk[...]
        v = jnp.dot(h, wv[...], preferred_element_type=jnp.float32) + bv[...]

        # --- multi-head causal attention over all B*S rows at once ---
        head_outs = []
        for hh in range(N_HEAD):
            sl = slice(hh * d, (hh + 1) * d)
            s = jnp.dot(q[:, sl], k[:, sl].T,
                        preferred_element_type=jnp.float32)      # (BS, BS)
            s = jnp.where(allowed, s, neg)                        # single vselect
            s = s - jnp.max(s, axis=-1, keepdims=True)
            e = jnp.exp(s)
            pr = e / jnp.sum(e, axis=-1, keepdims=True)
            head_outs.append(jnp.dot(pr, v[:, sl],
                                     preferred_element_type=jnp.float32))
        attn = jnp.concatenate(head_outs, axis=-1)                # (BS, E)

        # --- attention output projection + residual ---
        a = jnp.dot(attn, w_ap[...],
                    preferred_element_type=jnp.float32) + b_ap[...]
        x = x + a

        # --- ln_2 + MLP(gelu) + residual ---
        h2 = _layernorm(x, ln2_g[...], ln2_b[...], EPS)
        ff = _gelu(jnp.dot(h2, w_fc[...],
                           preferred_element_type=jnp.float32) + b_fc[...])
        m = jnp.dot(ff, w_mp[...],
                    preferred_element_type=jnp.float32) + b_mp[...]
        x = x + m

    # --- ln_f + tied lm_head: logits = LN(x) @ wte.T + bias (in-kernel T) ---
    lnf_g, lnf_b, wte, lm_b = p[idx:idx + 4]
    hf = _layernorm(x, lnf_g[...], lnf_b[...], EPS)
    logits = jax.lax.dot_general(
        hf, wte[...],
        dimension_numbers=(((1,), (1,)), ((), ())),
        preferred_element_type=jnp.float32) + lm_b[...]
    o_ref[...] = logits                                            # (BS, V)


# ------------------------------- wrappers ------------------------------------
def _flatten_kernel_params(params):
    """Flatten per-layer params; split c_attn into q/k/v outside the hot path."""
    E = N_EMBD
    flat = []
    for (ln1_g, ln1_b, c_attn_w, c_attn_b, c_proj_w, c_proj_b,
         ln2_g, ln2_b, c_fc_w, c_fc_b, c_proj2_w, c_proj2_b) in params["layers"]:
        flat += [ln1_g, ln1_b,
                 c_attn_w[:, 0 * E:1 * E], c_attn_b[:, 0 * E:1 * E],
                 c_attn_w[:, 1 * E:2 * E], c_attn_b[:, 1 * E:2 * E],
                 c_attn_w[:, 2 * E:3 * E], c_attn_b[:, 2 * E:3 * E],
                 c_proj_w, c_proj_b,
                 ln2_g, ln2_b, c_fc_w, c_fc_b, c_proj2_w, c_proj2_b]
    flat += [params["lnf_g"], params["lnf_b"], params["wte"], params["lm_b"]]
    return flat


def _block_causal_mask(B, S):
    """(B*S, B*S) mask: 1.0 where key is in the same batch and <= query pos."""
    m = np.zeros((B * S, B * S), dtype=np.float32)
    tril = np.tril(np.ones((S, S), dtype=np.float32))
    for b in range(B):
        m[b * S:(b + 1) * S, b * S:(b + 1) * S] = tril
    return m


def gpt2_lm_head_forward(input_ids, params):
    B, S = input_ids.shape
    # Embedding lookups (glue in plain JAX).
    inputs_embeds = jnp.take(params["wte"], input_ids, axis=0)            # (B,S,E)
    position_ids = jnp.arange(S, dtype=jnp.int32)
    position_embeds = jnp.take(params["wpe"], position_ids, axis=0)[None]  # (1,S,E)
    hidden = (inputs_embeds + position_embeds).reshape(B * S, N_EMBD)      # drop = id

    mask = jnp.asarray(_block_causal_mask(B, S))
    flat = _flatten_kernel_params(params)

    # Single launch, grid=(); all operands resident in VMEM (full-array specs).
    # TODO(synk): on v7x (2 TCs/chip) a 2-way batch-parallel core split could be
    # added once B grows; at B=2 / this size the split overhead exceeds the win.
    logits_flat = pl.pallas_call(
        gpt2_forward_kernel,
        out_shape=jax.ShapeDtypeStruct((B * S, VOCAB), jnp.float32),
    )(hidden, mask, *flat)

    # TODO(synk): `presents` (per-layer stacked key/value) and the optional
    # label cross-entropy loss of the reference forward are not returned here.
    return logits_flat.reshape(B, S, VOCAB)


# ------------------------- parameter construction ----------------------------
def init_params(key):
    keys = jax.random.split(key, 3 + N_LAYER * 4)
    params = {}
    params["wte"] = INIT_RANGE * jax.random.normal(keys[0], (VOCAB, N_EMBD), jnp.float32)
    params["wpe"] = INIT_RANGE * jax.random.normal(keys[1], (N_POSITIONS, N_EMBD), jnp.float32)
    layers = []
    for i in range(N_LAYER):
        k0, k1, k2, k3 = jax.random.split(keys[3 + i], 4)
        layer = (
            jnp.ones((1, N_EMBD), jnp.float32),          # ln1 gamma
            jnp.zeros((1, N_EMBD), jnp.float32),         # ln1 beta
            INIT_RANGE * jax.random.normal(k0, (N_EMBD, 3 * N_EMBD), jnp.float32),  # c_attn.w
            jnp.zeros((1, 3 * N_EMBD), jnp.float32),     # c_attn.b
            INIT_RANGE * jax.random.normal(k1, (N_EMBD, N_EMBD), jnp.float32),      # attn c_proj.w
            jnp.zeros((1, N_EMBD), jnp.float32),         # attn c_proj.b
            jnp.ones((1, N_EMBD), jnp.float32),          # ln2 gamma
            jnp.zeros((1, N_EMBD), jnp.float32),         # ln2 beta
            INIT_RANGE * jax.random.normal(k2, (N_EMBD, 4 * N_EMBD), jnp.float32),  # mlp c_fc.w
            jnp.zeros((1, 4 * N_EMBD), jnp.float32),     # mlp c_fc.b
            INIT_RANGE * jax.random.normal(k3, (4 * N_EMBD, N_EMBD), jnp.float32),  # mlp c_proj.w
            jnp.zeros((1, N_EMBD), jnp.float32),         # mlp c_proj.b
        )
        layers.append(layer)
    params["layers"] = layers
    params["lnf_g"] = jnp.ones((1, N_EMBD), jnp.float32)
    params["lnf_b"] = jnp.zeros((1, N_EMBD), jnp.float32)
    # lm_head weight is tied to wte; bias is zero-padded to vocab size (all zeros).
    params["lm_b"] = jnp.zeros((1, VOCAB), jnp.float32)
    return params


# --------------------- pure-JAX reference (for self-check) -------------------
def gpt2_reference(input_ids, params):
    B, S = input_ids.shape
    hp = jax.lax.Precision.HIGHEST
    d = N_EMBD // N_HEAD

    def ln(x, g, b):
        mu = jnp.mean(x, axis=-1, keepdims=True)
        var = jnp.mean((x - mu) ** 2, axis=-1, keepdims=True)
        return (x - mu) / jnp.sqrt(var + EPS) * g + b

    h = (jnp.take(params["wte"], input_ids, axis=0)
         + jnp.take(params["wpe"], jnp.arange(S, dtype=jnp.int32), axis=0)[None])
    bias = jnp.tril(jnp.ones((S, S), jnp.float32))[None, None]
    for (ln1_g, ln1_b, caw, cab, cpw, cpb,
         ln2_g, ln2_b, cfw, cfb, cp2w, cp2b) in params["layers"]:
        x = h
        hh = ln(x, ln1_g, ln1_b)
        qkv = jnp.einsum("bse,ef->bsf", hh, caw, precision=hp) + cab
        q, k, v = jnp.split(qkv, 3, axis=-1)
        q = q.reshape(B, S, N_HEAD, d).transpose(0, 2, 1, 3)
        k = k.reshape(B, S, N_HEAD, d).transpose(0, 2, 1, 3)
        v = v.reshape(B, S, N_HEAD, d).transpose(0, 2, 1, 3)
        w = jnp.einsum("bhqd,bhkd->bhqk", q, k, precision=hp) / math.sqrt(d)
        w = w * bias - 10000.0 * (1.0 - bias)
        w = jax.nn.softmax(w, axis=-1)
        a = jnp.einsum("bhqk,bhkd->bhqd", w, v, precision=hp)
        a = a.transpose(0, 2, 1, 3).reshape(B, S, N_EMBD)
        a = jnp.einsum("bse,ef->bsf", a, cpw, precision=hp) + cpb
        x = x + a
        h2 = ln(x, ln2_g, ln2_b)
        ff = _gelu(jnp.einsum("bse,ef->bsf", h2, cfw, precision=hp) + cfb)
        m = jnp.einsum("bsf,fe->bse", ff, cp2w, precision=hp) + cp2b
        h = x + m
    h = ln(h, params["lnf_g"], params["lnf_b"])
    logits = jnp.einsum("bse,ve->bsv", h, params["wte"], precision=hp) + params["lm_b"]
    return logits


# --------------------------------- main ---------------------------------------
if __name__ == "__main__":
    key = jax.random.PRNGKey(0)
    pkey, dkey = jax.random.split(key)
    params = init_params(pkey)
    input_ids = jax.random.randint(dkey, (BATCH, SEQ), 0, VOCAB, dtype=jnp.int32)

    logits = jax.jit(gpt2_lm_head_forward)(input_ids, params)
    jax.block_until_ready(logits)
    assert logits.shape == (BATCH, SEQ, VOCAB), logits.shape
    assert logits.dtype == jnp.float32

    ref = jax.jit(gpt2_reference)(input_ids, params)
    jax.block_until_ready(ref)
    max_err = float(jnp.max(jnp.abs(logits - ref)))
    assert max_err < 3e-3, f"max abs error vs reference: {max_err}"

    print("KERNEL_OK")
</pallas_src>

<mosaic_0001>
module attributes {stable_mosaic.version = 11 : i64} {
  func.func @gpt2_forward_kernel(%arg0: memref<16x32xf32, #tpu.memory_space<vmem>>, %arg1: memref<16x16xf32, #tpu.memory_space<vmem>>, %arg2: memref<1x32xf32, #tpu.memory_space<vmem>>, %arg3: memref<1x32xf32, #tpu.memory_space<vmem>>, %arg4: memref<32x32xf32, #tpu.memory_space<vmem>>, %arg5: memref<1x32xf32, #tpu.memory_space<vmem>>, %arg6: memref<32x32xf32, #tpu.memory_space<vmem>>, %arg7: memref<1x32xf32, #tpu.memory_space<vmem>>, %arg8: memref<32x32xf32, #tpu.memory_space<vmem>>, %arg9: memref<1x32xf32, #tpu.memory_space<vmem>>, %arg10: memref<32x32xf32, #tpu.memory_space<vmem>>, %arg11: memref<1x32xf32, #tpu.memory_space<vmem>>, %arg12: memref<1x32xf32, #tpu.memory_space<vmem>>, %arg13: memref<1x32xf32, #tpu.memory_space<vmem>>, %arg14: memref<32x128xf32, #tpu.memory_space<vmem>>, %arg15: memref<1x128xf32, #tpu.memory_space<vmem>>, %arg16: memref<128x32xf32, #tpu.memory_space<vmem>>, %arg17: memref<1x32xf32, #tpu.memory_space<vmem>>, %arg18: memref<1x32xf32, #tpu.memory_space<vmem>>, %arg19: memref<1x32xf32, #tpu.memory_space<vmem>>, %arg20: memref<32x32xf32, #tpu.memory_space<vmem>>, %arg21: memref<1x32xf32, #tpu.memory_space<vmem>>, %arg22: memref<32x32xf32, #tpu.memory_space<vmem>>, %arg23: memref<1x32xf32, #tpu.memory_space<vmem>>, %arg24: memref<32x32xf32, #tpu.memory_space<vmem>>, %arg25: memref<1x32xf32, #tpu.memory_space<vmem>>, %arg26: memref<32x32xf32, #tpu.memory_space<vmem>>, %arg27: memref<1x32xf32, #tpu.memory_space<vmem>>, %arg28: memref<1x32xf32, #tpu.memory_space<vmem>>, %arg29: memref<1x32xf32, #tpu.memory_space<vmem>>, %arg30: memref<32x128xf32, #tpu.memory_space<vmem>>, %arg31: memref<1x128xf32, #tpu.memory_space<vmem>>, %arg32: memref<128x32xf32, #tpu.memory_space<vmem>>, %arg33: memref<1x32xf32, #tpu.memory_space<vmem>>, %arg34: memref<1x32xf32, #tpu.memory_space<vmem>>, %arg35: memref<1x32xf32, #tpu.memory_space<vmem>>, %arg36: memref<128x32xf32, #tpu.memory_space<vmem>>, %arg37: memref<1x128xf32, #tpu.memory_space<vmem>>, %arg38: memref<16x128xf32, #tpu.memory_space<vmem>>) attributes {dimension_semantics = [], scalar_prefetch = 0 : i64, scratch_operands = 0 : i64, tpu.core_type = #tpu.core_type<tc>} {
    %c0 = arith.constant 0 : index
    %c0_0 = arith.constant 0 : index
    %0 = vector.load %arg0[%c0, %c0_0] : memref<16x32xf32, #tpu.memory_space<vmem>>, vector<16x32xf32>
    %c0_1 = arith.constant 0 : index
    %c0_2 = arith.constant 0 : index
    %1 = vector.load %arg1[%c0_1, %c0_2] : memref<16x16xf32, #tpu.memory_space<vmem>>, vector<16x16xf32>
    %cst = arith.constant 0.000000e+00 : f32
    %2 = vector.broadcast %cst : f32 to vector<16x16xf32>
    %3 = arith.cmpf ogt, %1, %2 : vector<16x16xf32>
    %c0_3 = arith.constant 0 : index
    %c0_4 = arith.constant 0 : index
    %4 = vector.load %arg2[%c0_3, %c0_4] : memref<1x32xf32, #tpu.memory_space<vmem>>, vector<1x32xf32>
    %c0_5 = arith.constant 0 : index
    %c0_6 = arith.constant 0 : index
    %5 = vector.load %arg3[%c0_5, %c0_6] : memref<1x32xf32, #tpu.memory_space<vmem>>, vector<1x32xf32>
    %cst_7 = arith.constant dense<0.000000e+00> : vector<16xf32>
    %6 = vector.multi_reduction <add>, %0, %cst_7 [1] : vector<16x32xf32> to vector<16xf32>
    %7 = vector.shape_cast %6 : vector<16xf32> to vector<16x1xf32>
    %cst_8 = arith.constant 3.200000e+01 : f32
    %8 = vector.broadcast %cst_8 : f32 to vector<16x1xf32>
    %9 = arith.divf %7, %8 : vector<16x1xf32>
    %10 = vector.broadcast %9 : vector<16x1xf32> to vector<16x32xf32>
    %11 = arith.subf %0, %10 : vector<16x32xf32>
    %12 = arith.mulf %11, %11 : vector<16x32xf32>
    %cst_9 = arith.constant dense<0.000000e+00> : vector<16xf32>
    %13 = vector.multi_reduction <add>, %12, %cst_9 [1] : vector<16x32xf32> to vector<16xf32>
    %14 = vector.shape_cast %13 : vector<16xf32> to vector<16x1xf32>
    %cst_10 = arith.constant 3.200000e+01 : f32
    %15 = vector.broadcast %cst_10 : f32 to vector<16x1xf32>
    %16 = arith.divf %14, %15 : vector<16x1xf32>
    %17 = vector.broadcast %9 : vector<16x1xf32> to vector<16x32xf32>
    %18 = arith.subf %0, %17 : vector<16x32xf32>
    %cst_11 = arith.constant 9.99999974E-6 : f32
    %19 = vector.broadcast %cst_11 : f32 to vector<16x1xf32>
    %20 = arith.addf %16, %19 : vector<16x1xf32>
    %21 = math.sqrt %20 : vector<16x1xf32>
    %22 = vector.broadcast %21 : vector<16x1xf32> to vector<16x32xf32>
    %23 = arith.divf %18, %22 : vector<16x32xf32>
    %24 = vector.broadcast %4 : vector<1x32xf32> to vector<16x32xf32>
    %25 = arith.mulf %23, %24 : vector<16x32xf32>
    %26 = vector.broadcast %5 : vector<1x32xf32> to vector<16x32xf32>
    %27 = arith.addf %25, %26 : vector<16x32xf32>
    %c0_12 = arith.constant 0 : index
    %c0_13 = arith.constant 0 : index
    %28 = vector.load %arg4[%c0_12, %c0_13] : memref<32x32xf32, #tpu.memory_space<vmem>>, vector<32x32xf32>
    %cst_14 = arith.constant dense<0.000000e+00> : vector<16x32xf32>
    %29 = tpu.matmul %27, %28, %cst_14 {dimension_numbers = #tpu.dot_dimension_numbers<[1], [0], [0], [1], [0, 0, 1, 1], [], []>} : vector<16x32xf32>, vector<32x32xf32>, vector<16x32xf32> -> vector<16x32xf32>
    %c0_15 = arith.constant 0 : index
    %c0_16 = arith.constant 0 : index
    %30 = vector.load %arg5[%c0_15, %c0_16] : memref<1x32xf32, #tpu.memory_space<vmem>>, vector<1x32xf32>
    %31 = vector.broadcast %30 : vector<1x32xf32> to vector<16x32xf32>
    %32 = arith.addf %29, %31 : vector<16x32xf32>
    %cst_17 = arith.constant 0.353553385 : f32
    %33 = vector.broadcast %cst_17 : f32 to vector<16x32xf32>
    %34 = arith.mulf %32, %33 : vector<16x32xf32>
    %c0_18 = arith.constant 0 : index
    %c0_19 = arith.constant 0 : index
    %35 = vector.load %arg6[%c0_18, %c0_19] : memref<32x32xf32, #tpu.memory_space<vmem>>, vector<32x32xf32>
    %cst_20 = arith.constant dense<0.000000e+00> : vector<16x32xf32>
    %36 = tpu.matmul %27, %35, %cst_20 {dimension_numbers = #tpu.dot_dimension_numbers<[1], [0], [0], [1], [0, 0, 1, 1], [], []>} : vector<16x32xf32>, vector<32x32xf32>, vector<16x32xf32> -> vector<16x32xf32>
    %c0_21 = arith.constant 0 : index
    %c0_22 = arith.constant 0 : index
    %37 = vector.load %arg7[%c0_21, %c0_22] : memref<1x32xf32, #tpu.memory_space<vmem>>, vector<1x32xf32>
    %38 = vector.broadcast %37 : vector<1x32xf32> to vector<16x32xf32>
    %39 = arith.addf %36, %38 : vector<16x32xf32>
    %c0_23 = arith.constant 0 : index
    %c0_24 = arith.constant 0 : index
    %40 = vector.load %arg8[%c0_23, %c0_24] : memref<32x32xf32, #tpu.memory_space<vmem>>, vector<32x32xf32>
    %cst_25 = arith.constant dense<0.000000e+00> : vector<16x32xf32>
    %41 = tpu.matmul %27, %40, %cst_25 {dimension_numbers = #tpu.dot_dimension_numbers<[1], [0], [0], [1], [0, 0, 1, 1], [], []>} : vector<16x32xf32>, vector<32x32xf32>, vector<16x32xf32> -> vector<16x32xf32>
    %c0_26 = arith.constant 0 : index
    %c0_27 = arith.constant 0 : index
    %42 = vector.load %arg9[%c0_26, %c0_27] : memref<1x32xf32, #tpu.memory_space<vmem>>, vector<1x32xf32>
    %43 = vector.broadcast %42 : vector<1x32xf32> to vector<16x32xf32>
    %44 = arith.addf %41, %43 : vector<16x32xf32>
    %45 = vector.extract_strided_slice %34 {offsets = [0, 0], sizes = [16, 8], strides = [1, 1]} : vector<16x32xf32> to vector<16x8xf32>
    %46 = vector.extract_strided_slice %39 {offsets = [0, 0], sizes = [16, 8], strides = [1, 1]} : vector<16x32xf32> to vector<16x8xf32>
    %47 = tpu.transpose %46, [1, 0] : vector<16x8xf32> -> vector<8x16xf32>
    %cst_28 = arith.constant dense<0.000000e+00> : vector<16x16xf32>
    %48 = tpu.matmul %45, %47, %cst_28 {dimension_numbers = #tpu.dot_dimension_numbers<[1], [0], [0], [1], [0, 0, 1, 1], [], []>} : vector<16x8xf32>, vector<8x16xf32>, vector<16x16xf32> -> vector<16x16xf32>
    %cst_29 = arith.constant -1.000000e+04 : f32
    %49 = vector.broadcast %cst_29 : f32 to vector<16x16xf32>
    %50 = arith.select %3, %48, %49 : vector<16x16xi1>, vector<16x16xf32>
    %cst_30 = arith.constant dense<0xFF800000> : vector<16xf32>
    %51 = vector.multi_reduction <maximumf>, %50, %cst_30 [1] : vector<16x16xf32> to vector<16xf32>
    %52 = vector.shape_cast %51 : vector<16xf32> to vector<16x1xf32>
    %53 = vector.broadcast %52 : vector<16x1xf32> to vector<16x16xf32>
    %54 = arith.subf %50, %53 : vector<16x16xf32>
    %55 = math.exp %54 : vector<16x16xf32>
    %cst_31 = arith.constant dense<0.000000e+00> : vector<16xf32>
    %56 = vector.multi_reduction <add>, %55, %cst_31 [1] : vector<16x16xf32> to vector<16xf32>
    %57 = vector.shape_cast %56 : vector<16xf32> to vector<16x1xf32>
    %58 = vector.broadcast %57 : vector<16x1xf32> to vector<16x16xf32>
    %59 = arith.divf %55, %58 : vector<16x16xf32>
    %60 = vector.extract_strided_slice %44 {offsets = [0, 0], sizes = [16, 8], strides = [1, 1]} : vector<16x32xf32> to vector<16x8xf32>
    %cst_32 = arith.constant dense<0.000000e+00> : vector<16x8xf32>
    %61 = tpu.matmul %59, %60, %cst_32 {dimension_numbers = #tpu.dot_dimension_numbers<[1], [0], [0], [1], [0, 0, 1, 1], [], []>} : vector<16x16xf32>, vector<16x8xf32>, vector<16x8xf32> -> vector<16x8xf32>
    %62 = vector.extract_strided_slice %34 {offsets = [0, 8], sizes = [16, 8], strides = [1, 1]} : vector<16x32xf32> to vector<16x8xf32>
    %63 = vector.extract_strided_slice %39 {offsets = [0, 8], sizes = [16, 8], strides = [1, 1]} : vector<16x32xf32> to vector<16x8xf32>
    %64 = tpu.transpose %63, [1, 0] : vector<16x8xf32> -> vector<8x16xf32>
    %cst_33 = arith.constant dense<0.000000e+00> : vector<16x16xf32>
    %65 = tpu.matmul %62, %64, %cst_33 {dimension_numbers = #tpu.dot_dimension_numbers<[1], [0], [0], [1], [0, 0, 1, 1], [], []>} : vector<16x8xf32>, vector<8x16xf32>, vector<16x16xf32> -> vector<16x16xf32>
    %cst_34 = arith.constant -1.000000e+04 : f32
    %66 = vector.broadcast %cst_34 : f32 to vector<16x16xf32>
    %67 = arith.select %3, %65, %66 : vector<16x16xi1>, vector<16x16xf32>
    %cst_35 = arith.constant dense<0xFF800000> : vector<16xf32>
    %68 = vector.multi_reduction <maximumf>, %67, %cst_35 [1] : vector<16x16xf32> to vector<16xf32>
    %69 = vector.shape_cast %68 : vector<16xf32> to vector<16x1xf32>
    %70 = vector.broadcast %69 : vector<16x1xf32> to vector<16x16xf32>
    %71 = arith.subf %67, %70 : vector<16x16xf32>
    %72 = math.exp %71 : vector<16x16xf32>
    %cst_36 = arith.constant dense<0.000000e+00> : vector<16xf32>
    %73 = vector.multi_reduction <add>, %72, %cst_36 [1] : vector<16x16xf32> to vector<16xf32>
    %74 = vector.shape_cast %73 : vector<16xf32> to vector<16x1xf32>
    %75 = vector.broadcast %74 : vector<16x1xf32> to vector<16x16xf32>
    %76 = arith.divf %72, %75 : vector<16x16xf32>
    %77 = vector.extract_strided_slice %44 {offsets = [0, 8], sizes = [16, 8], strides = [1, 1]} : vector<16x32xf32> to vector<16x8xf32>
    %cst_37 = arith.constant dense<0.000000e+00> : vector<16x8xf32>
    %78 = tpu.matmul %76, %77, %cst_37 {dimension_numbers = #tpu.dot_dimension_numbers<[1], [0], [0], [1], [0, 0, 1, 1], [], []>} : vector<16x16xf32>, vector<16x8xf32>, vector<16x8xf32> -> vector<16x8xf32>
    %79 = vector.extract_strided_slice %34 {offsets = [0, 16], sizes = [16, 8], strides = [1, 1]} : vector<16x32xf32> to vector<16x8xf32>
    %80 = vector.extract_strided_slice %39 {offsets = [0, 16], sizes = [16, 8], strides = [1, 1]} : vector<16x32xf32> to vector<16x8xf32>
    %81 = tpu.transpose %80, [1, 0] : vector<16x8xf32> -> vector<8x16xf32>
    %cst_38 = arith.constant dense<0.000000e+00> : vector<16x16xf32>
    %82 = tpu.matmul %79, %81, %cst_38 {dimension_numbers = #tpu.dot_dimension_numbers<[1], [0], [0], [1], [0, 0, 1, 1], [], []>} : vector<16x8xf32>, vector<8x16xf32>, vector<16x16xf32> -> vector<16x16xf32>
    %cst_39 = arith.constant -1.000000e+04 : f32
    %83 = vector.broadcast %cst_39 : f32 to vector<16x16xf32>
    %84 = arith.select %3, %82, %83 : vector<16x16xi1>, vector<16x16xf32>
    %cst_40 = arith.constant dense<0xFF800000> : vector<16xf32>
    %85 = vector.multi_reduction <maximumf>, %84, %cst_40 [1] : vector<16x16xf32> to vector<16xf32>
    %86 = vector.shape_cast %85 : vector<16xf32> to vector<16x1xf32>
    %87 = vector.broadcast %86 : vector<16x1xf32> to vector<16x16xf32>
    %88 = arith.subf %84, %87 : vector<16x16xf32>
    %89 = math.exp %88 : vector<16x16xf32>
    %cst_41 = arith.constant dense<0.000000e+00> : vector<16xf32>
    %90 = vector.multi_reduction <add>, %89, %cst_41 [1] : vector<16x16xf32> to vector<16xf32>
    %91 = vector.shape_cast %90 : vector<16xf32> to vector<16x1xf32>
    %92 = vector.broadcast %91 : vector<16x1xf32> to vector<16x16xf32>
    %93 = arith.divf %89, %92 : vector<16x16xf32>
    %94 = vector.extract_strided_slice %44 {offsets = [0, 16], sizes = [16, 8], strides = [1, 1]} : vector<16x32xf32> to vector<16x8xf32>
    %cst_42 = arith.constant dense<0.000000e+00> : vector<16x8xf32>
    %95 = tpu.matmul %93, %94, %cst_42 {dimension_numbers = #tpu.dot_dimension_numbers<[1], [0], [0], [1], [0, 0, 1, 1], [], []>} : vector<16x16xf32>, vector<16x8xf32>, vector<16x8xf32> -> vector<16x8xf32>
    %96 = vector.extract_strided_slice %34 {offsets = [0, 24], sizes = [16, 8], strides = [1, 1]} : vector<16x32xf32> to vector<16x8xf32>
    %97 = vector.extract_strided_slice %39 {offsets = [0, 24], sizes = [16, 8], strides = [1, 1]} : vector<16x32xf32> to vector<16x8xf32>
    %98 = tpu.transpose %97, [1, 0] : vector<16x8xf32> -> vector<8x16xf32>
    %cst_43 = arith.constant dense<0.000000e+00> : vector<16x16xf32>
    %99 = tpu.matmul %96, %98, %cst_43 {dimension_numbers = #tpu.dot_dimension_numbers<[1], [0], [0], [1], [0, 0, 1, 1], [], []>} : vector<16x8xf32>, vector<8x16xf32>, vector<16x16xf32> -> vector<16x16xf32>
    %cst_44 = arith.constant -1.000000e+04 : f32
    %100 = vector.broadcast %cst_44 : f32 to vector<16x16xf32>
    %101 = arith.select %3, %99, %100 : vector<16x16xi1>, vector<16x16xf32>
    %cst_45 = arith.constant dense<0xFF800000> : vector<16xf32>
    %102 = vector.multi_reduction <maximumf>, %101, %cst_45 [1] : vector<16x16xf32> to vector<16xf32>
    %103 = vector.shape_cast %102 : vector<16xf32> to vector<16x1xf32>
    %104 = vector.broadcast %103 : vector<16x1xf32> to vector<16x16xf32>
    %105 = arith.subf %101, %104 : vector<16x16xf32>
    %106 = math.exp %105 : vector<16x16xf32>
    %cst_46 = arith.constant dense<0.000000e+00> : vector<16xf32>
    %107 = vector.multi_reduction <add>, %106, %cst_46 [1] : vector<16x16xf32> to vector<16xf32>
    %108 = vector.shape_cast %107 : vector<16xf32> to vector<16x1xf32>
    %109 = vector.broadcast %108 : vector<16x1xf32> to vector<16x16xf32>
    %110 = arith.divf %106, %109 : vector<16x16xf32>
    %111 = vector.extract_strided_slice %44 {offsets = [0, 24], sizes = [16, 8], strides = [1, 1]} : vector<16x32xf32> to vector<16x8xf32>
    %cst_47 = arith.constant dense<0.000000e+00> : vector<16x8xf32>
    %112 = tpu.matmul %110, %111, %cst_47 {dimension_numbers = #tpu.dot_dimension_numbers<[1], [0], [0], [1], [0, 0, 1, 1], [], []>} : vector<16x16xf32>, vector<16x8xf32>, vector<16x8xf32> -> vector<16x8xf32>
    %113 = tpu.concatenate %61, %78, %95, %112 in 1 : vector<16x8xf32>, vector<16x8xf32>, vector<16x8xf32>, vector<16x8xf32> -> vector<16x32xf32>
    %c0_48 = arith.constant 0 : index
    %c0_49 = arith.constant 0 : index
    %114 = vector.load %arg10[%c0_48, %c0_49] : memref<32x32xf32, #tpu.memory_space<vmem>>, vector<32x32xf32>
    %cst_50 = arith.constant dense<0.000000e+00> : vector<16x32xf32>
    %115 = tpu.matmul %113, %114, %cst_50 {dimension_numbers = #tpu.dot_dimension_numbers<[1], [0], [0], [1], [0, 0, 1, 1], [], []>} : vector<16x32xf32>, vector<32x32xf32>, vector<16x32xf32> -> vector<16x32xf32>
    %c0_51 = arith.constant 0 : index
    %c0_52 = arith.constant 0 : index
    %116 = vector.load %arg11[%c0_51, %c0_52] : memref<1x32xf32, #tpu.memory_space<vmem>>, vector<1x32xf32>
    %117 = vector.broadcast %116 : vector<1x32xf32> to vector<16x32xf32>
    %118 = arith.addf %115, %117 : vector<16x32xf32>
    %119 = arith.addf %0, %118 : vector<16x32xf32>
    %c0_53 = arith.constant 0 : index
    %c0_54 = arith.constant 0 : index
    %120 = vector.load %arg12[%c0_53, %c0_54] : memref<1x32xf32, #tpu.memory_space<vmem>>, vector<1x32xf32>
    %c0_55 = arith.constant 0 : index
    %c0_56 = arith.constant 0 : index
    %121 = vector.load %arg13[%c0_55, %c0_56] : memref<1x32xf32, #tpu.memory_space<vmem>>, vector<1x32xf32>
    %cst_57 = arith.constant dense<0.000000e+00> : vector<16xf32>
    %122 = vector.multi_reduction <add>, %119, %cst_57 [1] : vector<16x32xf32> to vector<16xf32>
    %123 = vector.shape_cast %122 : vector<16xf32> to vector<16x1xf32>
    %cst_58 = arith.constant 3.200000e+01 : f32
    %124 = vector.broadcast %cst_58 : f32 to vector<16x1xf32>
    %125 = arith.divf %123, %124 : vector<16x1xf32>
    %126 = vector.broadcast %125 : vector<16x1xf32> to vector<16x32xf32>
    %127 = arith.subf %119, %126 : vector<16x32xf32>
    %128 = arith.mulf %127, %127 : vector<16x32xf32>
    %cst_59 = arith.constant dense<0.000000e+00> : vector<16xf32>
    %129 = vector.multi_reduction <add>, %128, %cst_59 [1] : vector<16x32xf32> to vector<16xf32>
    %130 = vector.shape_cast %129 : vector<16xf32> to vector<16x1xf32>
    %cst_60 = arith.constant 3.200000e+01 : f32
    %131 = vector.broadcast %cst_60 : f32 to vector<16x1xf32>
    %132 = arith.divf %130, %131 : vector<16x1xf32>
    %133 = vector.broadcast %125 : vector<16x1xf32> to vector<16x32xf32>
    %134 = arith.subf %119, %133 : vector<16x32xf32>
    %cst_61 = arith.constant 9.99999974E-6 : f32
    %135 = vector.broadcast %cst_61 : f32 to vector<16x1xf32>
    %136 = arith.addf %132, %135 : vector<16x1xf32>
    %137 = math.sqrt %136 : vector<16x1xf32>
    %138 = vector.broadcast %137 : vector<16x1xf32> to vector<16x32xf32>
    %139 = arith.divf %134, %138 : vector<16x32xf32>
    %140 = vector.broadcast %120 : vector<1x32xf32> to vector<16x32xf32>
    %141 = arith.mulf %139, %140 : vector<16x32xf32>
    %142 = vector.broadcast %121 : vector<1x32xf32> to vector<16x32xf32>
    %143 = arith.addf %141, %142 : vector<16x32xf32>
    %c0_62 = arith.constant 0 : index
    %c0_63 = arith.constant 0 : index
    %144 = vector.load %arg14[%c0_62, %c0_63] : memref<32x128xf32, #tpu.memory_space<vmem>>, vector<32x128xf32>
    %cst_64 = arith.constant dense<0.000000e+00> : vector<16x128xf32>
    %145 = tpu.matmul %143, %144, %cst_64 {dimension_numbers = #tpu.dot_dimension_numbers<[1], [0], [0], [1], [0, 0, 1, 1], [], []>} : vector<16x32xf32>, vector<32x128xf32>, vector<16x128xf32> -> vector<16x128xf32>
    %c0_65 = arith.constant 0 : index
    %c0_66 = arith.constant 0 : index
    %146 = vector.load %arg15[%c0_65, %c0_66] : memref<1x128xf32, #tpu.memory_space<vmem>>, vector<1x128xf32>
    %147 = vector.broadcast %146 : vector<1x128xf32> to vector<16x128xf32>
    %148 = arith.addf %145, %147 : vector<16x128xf32>
    %cst_67 = arith.constant 5.000000e-01 : f32
    %149 = vector.broadcast %cst_67 : f32 to vector<16x128xf32>
    %150 = arith.mulf %149, %148 : vector<16x128xf32>
    %cst_68 = arith.constant 0.636619746 : f32
    %151 = math.sqrt %cst_68 : f32
    %cst_69 = arith.constant 4.471500e-02 : f32
    %152 = vector.broadcast %cst_69 : f32 to vector<16x128xf32>
    %153 = arith.mulf %152, %148 : vector<16x128xf32>
    %154 = arith.mulf %153, %148 : vector<16x128xf32>
    %155 = arith.mulf %154, %148 : vector<16x128xf32>
    %156 = arith.addf %148, %155 : vector<16x128xf32>
    %157 = vector.broadcast %151 : f32 to vector<16x128xf32>
    %158 = arith.mulf %157, %156 : vector<16x128xf32>
    %159 = math.tanh %158 : vector<16x128xf32>
    %cst_70 = arith.constant 1.000000e+00 : f32
    %160 = vector.broadcast %cst_70 : f32 to vector<16x128xf32>
    %161 = arith.addf %160, %159 : vector<16x128xf32>
    %162 = arith.mulf %150, %161 : vector<16x128xf32>
    %c0_71 = arith.constant 0 : index
    %c0_72 = arith.constant 0 : index
    %163 = vector.load %arg16[%c0_71, %c0_72] : memref<128x32xf32, #tpu.memory_space<vmem>>, vector<128x32xf32>
    %cst_73 = arith.constant dense<0.000000e+00> : vector<16x32xf32>
    %164 = tpu.matmul %162, %163, %cst_73 {dimension_numbers = #tpu.dot_dimension_numbers<[1], [0], [0], [1], [0, 0, 1, 1], [], []>} : vector<16x128xf32>, vector<128x32xf32>, vector<16x32xf32> -> vector<16x32xf32>
    %c0_74 = arith.constant 0 : index
    %c0_75 = arith.constant 0 : index
    %165 = vector.load %arg17[%c0_74, %c0_75] : memref<1x32xf32, #tpu.memory_space<vmem>>, vector<1x32xf32>
    %166 = vector.broadcast %165 : vector<1x32xf32> to vector<16x32xf32>
    %167 = arith.addf %164, %166 : vector<16x32xf32>
    %168 = arith.addf %119, %167 : vector<16x32xf32>
    %c0_76 = arith.constant 0 : index
    %c0_77 = arith.constant 0 : index
    %169 = vector.load %arg18[%c0_76, %c0_77] : memref<1x32xf32, #tpu.memory_space<vmem>>, vector<1x32xf32>
    %c0_78 = arith.constant 0 : index
    %c0_79 = arith.constant 0 : index
    %170 = vector.load %arg19[%c0_78, %c0_79] : memref<1x32xf32, #tpu.memory_space<vmem>>, vector<1x32xf32>
    %cst_80 = arith.constant dense<0.000000e+00> : vector<16xf32>
    %171 = vector.multi_reduction <add>, %168, %cst_80 [1] : vector<16x32xf32> to vector<16xf32>
    %172 = vector.shape_cast %171 : vector<16xf32> to vector<16x1xf32>
    %cst_81 = arith.constant 3.200000e+01 : f32
    %173 = vector.broadcast %cst_81 : f32 to vector<16x1xf32>
    %174 = arith.divf %172, %173 : vector<16x1xf32>
    %175 = vector.broadcast %174 : vector<16x1xf32> to vector<16x32xf32>
    %176 = arith.subf %168, %175 : vector<16x32xf32>
    %177 = arith.mulf %176, %176 : vector<16x32xf32>
    %cst_82 = arith.constant dense<0.000000e+00> : vector<16xf32>
    %178 = vector.multi_reduction <add>, %177, %cst_82 [1] : vector<16x32xf32> to vector<16xf32>
    %179 = vector.shape_cast %178 : vector<16xf32> to vector<16x1xf32>
    %cst_83 = arith.constant 3.200000e+01 : f32
    %180 = vector.broadcast %cst_83 : f32 to vector<16x1xf32>
    %181 = arith.divf %179, %180 : vector<16x1xf32>
    %182 = vector.broadcast %174 : vector<16x1xf32> to vector<16x32xf32>
    %183 = arith.subf %168, %182 : vector<16x32xf32>
    %cst_84 = arith.constant 9.99999974E-6 : f32
    %184 = vector.broadcast %cst_84 : f32 to vector<16x1xf32>
    %185 = arith.addf %181, %184 : vector<16x1xf32>
    %186 = math.sqrt %185 : vector<16x1xf32>
    %187 = vector.broadcast %186 : vector<16x1xf32> to vector<16x32xf32>
    %188 = arith.divf %183, %187 : vector<16x32xf32>
    %189 = vector.broadcast %169 : vector<1x32xf32> to vector<16x32xf32>
    %190 = arith.mulf %188, %189 : vector<16x32xf32>
    %191 = vector.broadcast %170 : vector<1x32xf32> to vector<16x32xf32>
    %192 = arith.addf %190, %191 : vector<16x32xf32>
    %c0_85 = arith.constant 0 : index
    %c0_86 = arith.constant 0 : index
    %193 = vector.load %arg20[%c0_85, %c0_86] : memref<32x32xf32, #tpu.memory_space<vmem>>, vector<32x32xf32>
    %cst_87 = arith.constant dense<0.000000e+00> : vector<16x32xf32>
    %194 = tpu.matmul %192, %193, %cst_87 {dimension_numbers = #tpu.dot_dimension_numbers<[1], [0], [0], [1], [0, 0, 1, 1], [], []>} : vector<16x32xf32>, vector<32x32xf32>, vector<16x32xf32> -> vector<16x32xf32>
    %c0_88 = arith.constant 0 : index
    %c0_89 = arith.constant 0 : index
    %195 = vector.load %arg21[%c0_88, %c0_89] : memref<1x32xf32, #tpu.memory_space<vmem>>, vector<1x32xf32>
    %196 = vector.broadcast %195 : vector<1x32xf32> to vector<16x32xf32>
    %197 = arith.addf %194, %196 : vector<16x32xf32>
    %cst_90 = arith.constant 0.353553385 : f32
    %198 = vector.broadcast %cst_90 : f32 to vector<16x32xf32>
    %199 = arith.mulf %197, %198 : vector<16x32xf32>
    %c0_91 = arith.constant 0 : index
    %c0_92 = arith.constant 0 : index
    %200 = vector.load %arg22[%c0_91, %c0_92] : memref<32x32xf32, #tpu.memory_space<vmem>>, vector<32x32xf32>
    %cst_93 = arith.constant dense<0.000000e+00> : vector<16x32xf32>
    %201 = tpu.matmul %192, %200, %cst_93 {dimension_numbers = #tpu.dot_dimension_numbers<[1], [0], [0], [1], [0, 0, 1, 1], [], []>} : vector<16x32xf32>, vector<32x32xf32>, vector<16x32xf32> -> vector<16x32xf32>
    %c0_94 = arith.constant 0 : index
    %c0_95 = arith.constant 0 : index
    %202 = vector.load %arg23[%c0_94, %c0_95] : memref<1x32xf32, #tpu.memory_space<vmem>>, vector<1x32xf32>
    %203 = vector.broadcast %202 : vector<1x32xf32> to vector<16x32xf32>
    %204 = arith.addf %201, %203 : vector<16x32xf32>
    %c0_96 = arith.constant 0 : index
    %c0_97 = arith.constant 0 : index
    %205 = vector.load %arg24[%c0_96, %c0_97] : memref<32x32xf32, #tpu.memory_space<vmem>>, vector<32x32xf32>
    %cst_98 = arith.constant dense<0.000000e+00> : vector<16x32xf32>
    %206 = tpu.matmul %192, %205, %cst_98 {dimension_numbers = #tpu.dot_dimension_numbers<[1], [0], [0], [1], [0, 0, 1, 1], [], []>} : vector<16x32xf32>, vector<32x32xf32>, vector<16x32xf32> -> vector<16x32xf32>
    %c0_99 = arith.constant 0 : index
    %c0_100 = arith.constant 0 : index
    %207 = vector.load %arg25[%c0_99, %c0_100] : memref<1x32xf32, #tpu.memory_space<vmem>>, vector<1x32xf32>
    %208 = vector.broadcast %207 : vector<1x32xf32> to vector<16x32xf32>
    %209 = arith.addf %206, %208 : vector<16x32xf32>
    %210 = vector.extract_strided_slice %199 {offsets = [0, 0], sizes = [16, 8], strides = [1, 1]} : vector<16x32xf32> to vector<16x8xf32>
    %211 = vector.extract_strided_slice %204 {offsets = [0, 0], sizes = [16, 8], strides = [1, 1]} : vector<16x32xf32> to vector<16x8xf32>
    %212 = tpu.transpose %211, [1, 0] : vector<16x8xf32> -> vector<8x16xf32>
    %cst_101 = arith.constant dense<0.000000e+00> : vector<16x16xf32>
    %213 = tpu.matmul %210, %212, %cst_101 {dimension_numbers = #tpu.dot_dimension_numbers<[1], [0], [0], [1], [0, 0, 1, 1], [], []>} : vector<16x8xf32>, vector<8x16xf32>, vector<16x16xf32> -> vector<16x16xf32>
    %cst_102 = arith.constant -1.000000e+04 : f32
    %214 = vector.broadcast %cst_102 : f32 to vector<16x16xf32>
    %215 = arith.select %3, %213, %214 : vector<16x16xi1>, vector<16x16xf32>
    %cst_103 = arith.constant dense<0xFF800000> : vector<16xf32>
    %216 = vector.multi_reduction <maximumf>, %215, %cst_103 [1] : vector<16x16xf32> to vector<16xf32>
    %217 = vector.shape_cast %216 : vector<16xf32> to vector<16x1xf32>
    %218 = vector.broadcast %217 : vector<16x1xf32> to vector<16x16xf32>
    %219 = arith.subf %215, %218 : vector<16x16xf32>
    %220 = math.exp %219 : vector<16x16xf32>
    %cst_104 = arith.constant dense<0.000000e+00> : vector<16xf32>
    %221 = vector.multi_reduction <add>, %220, %cst_104 [1] : vector<16x16xf32> to vector<16xf32>
    %222 = vector.shape_cast %221 : vector<16xf32> to vector<16x1xf32>
    %223 = vector.broadcast %222 : vector<16x1xf32> to vector<16x16xf32>
    %224 = arith.divf %220, %223 : vector<16x16xf32>
    %225 = vector.extract_strided_slice %209 {offsets = [0, 0], sizes = [16, 8], strides = [1, 1]} : vector<16x32xf32> to vector<16x8xf32>
    %cst_105 = arith.constant dense<0.000000e+00> : vector<16x8xf32>
    %226 = tpu.matmul %224, %225, %cst_105 {dimension_numbers = #tpu.dot_dimension_numbers<[1], [0], [0], [1], [0, 0, 1, 1], [], []>} : vector<16x16xf32>, vector<16x8xf32>, vector<16x8xf32> -> vector<16x8xf32>
    %227 = vector.extract_strided_slice %199 {offsets = [0, 8], sizes = [16, 8], strides = [1, 1]} : vector<16x32xf32> to vector<16x8xf32>
    %228 = vector.extract_strided_slice %204 {offsets = [0, 8], sizes = [16, 8], strides = [1, 1]} : vector<16x32xf32> to vector<16x8xf32>
    %229 = tpu.transpose %228, [1, 0] : vector<16x8xf32> -> vector<8x16xf32>
    %cst_106 = arith.constant dense<0.000000e+00> : vector<16x16xf32>
    %230 = tpu.matmul %227, %229, %cst_106 {dimension_numbers = #tpu.dot_dimension_numbers<[1], [0], [0], [1], [0, 0, 1, 1], [], []>} : vector<16x8xf32>, vector<8x16xf32>, vector<16x16xf32> -> vector<16x16xf32>
    %cst_107 = arith.constant -1.000000e+04 : f32
    %231 = vector.broadcast %cst_107 : f32 to vector<16x16xf32>
    %232 = arith.select %3, %230, %231 : vector<16x16xi1>, vector<16x16xf32>
    %cst_108 = arith.constant dense<0xFF800000> : vector<16xf32>
    %233 = vector.multi_reduction <maximumf>, %232, %cst_108 [1] : vector<16x16xf32> to vector<16xf32>
    %234 = vector.shape_cast %233 : vector<16xf32> to vector<16x1xf32>
    %235 = vector.broadcast %234 : vector<16x1xf32> to vector<16x16xf32>
    %236 = arith.subf %232, %235 : vector<16x16xf32>
    %237 = math.exp %236 : vector<16x16xf32>
    %cst_109 = arith.constant dense<0.000000e+00> : vector<16xf32>
    %238 = vector.multi_reduction <add>, %237, %cst_109 [1] : vector<16x16xf32> to vector<16xf32>
    %239 = vector.shape_cast %238 : vector<16xf32> to vector<16x1xf32>
    %240 = vector.broadcast %239 : vector<16x1xf32> to vector<16x16xf32>
    %241 = arith.divf %237, %240 : vector<16x16xf32>
    %242 = vector.extract_strided_slice %209 {offsets = [0, 8], sizes = [16, 8], strides = [1, 1]} : vector<16x32xf32> to vector<16x8xf32>
    %cst_110 = arith.constant dense<0.000000e+00> : vector<16x8xf32>
    %243 = tpu.matmul %241, %242, %cst_110 {dimension_numbers = #tpu.dot_dimension_numbers<[1], [0], [0], [1], [0, 0, 1, 1], [], []>} : vector<16x16xf32>, vector<16x8xf32>, vector<16x8xf32> -> vector<16x8xf32>
    %244 = vector.extract_strided_slice %199 {offsets = [0, 16], sizes = [16, 8], strides = [1, 1]} : vector<16x32xf32> to vector<16x8xf32>
    %245 = vector.extract_strided_slice %204 {offsets = [0, 16], sizes = [16, 8], strides = [1, 1]} : vector<16x32xf32> to vector<16x8xf32>
    %246 = tpu.transpose %245, [1, 0] : vector<16x8xf32> -> vector<8x16xf32>
    %cst_111 = arith.constant dense<0.000000e+00> : vector<16x16xf32>
    %247 = tpu.matmul %244, %246, %cst_111 {dimension_numbers = #tpu.dot_dimension_numbers<[1], [0], [0], [1], [0, 0, 1, 1], [], []>} : vector<16x8xf32>, vector<8x16xf32>, vector<16x16xf32> -> vector<16x16xf32>
    %cst_112 = arith.constant -1.000000e+04 : f32
    %248 = vector.broadcast %cst_112 : f32 to vector<16x16xf32>
    %249 = arith.select %3, %247, %248 : vector<16x16xi1>, vector<16x16xf32>
    %cst_113 = arith.constant dense<0xFF800000> : vector<16xf32>
    %250 = vector.multi_reduction <maximumf>, %249, %cst_113 [1] : vector<16x16xf32> to vector<16xf32>
    %251 = vector.shape_cast %250 : vector<16xf32> to vector<16x1xf32>
    %252 = vector.broadcast %251 : vector<16x1xf32> to vector<16x16xf32>
    %253 = arith.subf %249, %252 : vector<16x16xf32>
    %254 = math.exp %253 : vector<16x16xf32>
    %cst_114 = arith.constant dense<0.000000e+00> : vector<16xf32>
    %255 = vector.multi_reduction <add>, %254, %cst_114 [1] : vector<16x16xf32> to vector<16xf32>
    %256 = vector.shape_cast %255 : vector<16xf32> to vector<16x1xf32>
    %257 = vector.broadcast %256 : vector<16x1xf32> to vector<16x16xf32>
    %258 = arith.divf %254, %257 : vector<16x16xf32>
    %259 = vector.extract_strided_slice %209 {offsets = [0, 16], sizes = [16, 8], strides = [1, 1]} : vector<16x32xf32> to vector<16x8xf32>
    %cst_115 = arith.constant dense<0.000000e+00> : vector<16x8xf32>
    %260 = tpu.matmul %258, %259, %cst_115 {dimension_numbers = #tpu.dot_dimension_numbers<[1], [0], [0], [1], [0, 0, 1, 1], [], []>} : vector<16x16xf32>, vector<16x8xf32>, vector<16x8xf32> -> vector<16x8xf32>
    %261 = vector.extract_strided_slice %199 {offsets = [0, 24], sizes = [16, 8], strides = [1, 1]} : vector<16x32xf32> to vector<16x8xf32>
    %262 = vector.extract_strided_slice %204 {offsets = [0, 24], sizes = [16, 8], strides = [1, 1]} : vector<16x32xf32> to vector<16x8xf32>
    %263 = tpu.transpose %262, [1, 0] : vector<16x8xf32> -> vector<8x16xf32>
    %cst_116 = arith.constant dense<0.000000e+00> : vector<16x16xf32>
    %264 = tpu.matmul %261, %263, %cst_116 {dimension_numbers = #tpu.dot_dimension_numbers<[1], [0], [0], [1], [0, 0, 1, 1], [], []>} : vector<16x8xf32>, vector<8x16xf32>, vector<16x16xf32> -> vector<16x16xf32>
    %cst_117 = arith.constant -1.000000e+04 : f32
    %265 = vector.broadcast %cst_117 : f32 to vector<16x16xf32>
    %266 = arith.select %3, %264, %265 : vector<16x16xi1>, vector<16x16xf32>
    %cst_118 = arith.constant dense<0xFF800000> : vector<16xf32>
    %267 = vector.multi_reduction <maximumf>, %266, %cst_118 [1] : vector<16x16xf32> to vector<16xf32>
    %268 = vector.shape_cast %267 : vector<16xf32> to vector<16x1xf32>
    %269 = vector.broadcast %268 : vector<16x1xf32> to vector<16x16xf32>
    %270 = arith.subf %266, %269 : vector<16x16xf32>
    %271 = math.exp %270 : vector<16x16xf32>
    %cst_119 = arith.constant dense<0.000000e+00> : vector<16xf32>
    %272 = vector.multi_reduction <add>, %271, %cst_119 [1] : vector<16x16xf32> to vector<16xf32>
    %273 = vector.shape_cast %272 : vector<16xf32> to vector<16x1xf32>
    %274 = vector.broadcast %273 : vector<16x1xf32> to vector<16x16xf32>
    %275 = arith.divf %271, %274 : vector<16x16xf32>
    %276 = vector.extract_strided_slice %209 {offsets = [0, 24], sizes = [16, 8], strides = [1, 1]} : vector<16x32xf32> to vector<16x8xf32>
    %cst_120 = arith.constant dense<0.000000e+00> : vector<16x8xf32>
    %277 = tpu.matmul %275, %276, %cst_120 {dimension_numbers = #tpu.dot_dimension_numbers<[1], [0], [0], [1], [0, 0, 1, 1], [], []>} : vector<16x16xf32>, vector<16x8xf32>, vector<16x8xf32> -> vector<16x8xf32>
    %278 = tpu.concatenate %226, %243, %260, %277 in 1 : vector<16x8xf32>, vector<16x8xf32>, vector<16x8xf32>, vector<16x8xf32> -> vector<16x32xf32>
    %c0_121 = arith.constant 0 : index
    %c0_122 = arith.constant 0 : index
    %279 = vector.load %arg26[%c0_121, %c0_122] : memref<32x32xf32, #tpu.memory_space<vmem>>, vector<32x32xf32>
    %cst_123 = arith.constant dense<0.000000e+00> : vector<16x32xf32>
    %280 = tpu.matmul %278, %279, %cst_123 {dimension_numbers = #tpu.dot_dimension_numbers<[1], [0], [0], [1], [0, 0, 1, 1], [], []>} : vector<16x32xf32>, vector<32x32xf32>, vector<16x32xf32> -> vector<16x32xf32>
    %c0_124 = arith.constant 0 : index
    %c0_125 = arith.constant 0 : index
    %281 = vector.load %arg27[%c0_124, %c0_125] : memref<1x32xf32, #tpu.memory_space<vmem>>, vector<1x32xf32>
    %282 = vector.broadcast %281 : vector<1x32xf32> to vector<16x32xf32>
    %283 = arith.addf %280, %282 : vector<16x32xf32>
    %284 = arith.addf %168, %283 : vector<16x32xf32>
    %c0_126 = arith.constant 0 : index
    %c0_127 = arith.constant 0 : index
    %285 = vector.load %arg28[%c0_126, %c0_127] : memref<1x32xf32, #tpu.memory_space<vmem>>, vector<1x32xf32>
    %c0_128 = arith.constant 0 : index
    %c0_129 = arith.constant 0 : index
    %286 = vector.load %arg29[%c0_128, %c0_129] : memref<1x32xf32, #tpu.memory_space<vmem>>, vector<1x32xf32>
    %cst_130 = arith.constant dense<0.000000e+00> : vector<16xf32>
    %287 = vector.multi_reduction <add>, %284, %cst_130 [1] : vector<16x32xf32> to vector<16xf32>
    %288 = vector.shape_cast %287 : vector<16xf32> to vector<16x1xf32>
    %cst_131 = arith.constant 3.200000e+01 : f32
    %289 = vector.broadcast %cst_131 : f32 to vector<16x1xf32>
    %290 = arith.divf %288, %289 : vector<16x1xf32>
    %291 = vector.broadcast %290 : vector<16x1xf32> to vector<16x32xf32>
    %292 = arith.subf %284, %291 : vector<16x32xf32>
    %293 = arith.mulf %292, %292 : vector<16x32xf32>
    %cst_132 = arith.constant dense<0.000000e+00> : vector<16xf32>
    %294 = vector.multi_reduction <add>, %293, %cst_132 [1] : vector<16x32xf32> to vector<16xf32>
    %295 = vector.shape_cast %294 : vector<16xf32> to vector<16x1xf32>
    %cst_133 = arith.constant 3.200000e+01 : f32
    %296 = vector.broadcast %cst_133 : f32 to vector<16x1xf32>
    %297 = arith.divf %295, %296 : vector<16x1xf32>
    %298 = vector.broadcast %290 : vector<16x1xf32> to vector<16x32xf32>
    %299 = arith.subf %284, %298 : vector<16x32xf32>
    %cst_134 = arith.constant 9.99999974E-6 : f32
    %300 = vector.broadcast %cst_134 : f32 to vector<16x1xf32>
    %301 = arith.addf %297, %300 : vector<16x1xf32>
    %302 = math.sqrt %301 : vector<16x1xf32>
    %303 = vector.broadcast %302 : vector<16x1xf32> to vector<16x32xf32>
    %304 = arith.divf %299, %303 : vector<16x32xf32>
    %305 = vector.broadcast %285 : vector<1x32xf32> to vector<16x32xf32>
    %306 = arith.mulf %304, %305 : vector<16x32xf32>
    %307 = vector.broadcast %286 : vector<1x32xf32> to vector<16x32xf32>
    %308 = arith.addf %306, %307 : vector<16x32xf32>
    %c0_135 = arith.constant 0 : index
    %c0_136 = arith.constant 0 : index
    %309 = vector.load %arg30[%c0_135, %c0_136] : memref<32x128xf32, #tpu.memory_space<vmem>>, vector<32x128xf32>
    %cst_137 = arith.constant dense<0.000000e+00> : vector<16x128xf32>
    %310 = tpu.matmul %308, %309, %cst_137 {dimension_numbers = #tpu.dot_dimension_numbers<[1], [0], [0], [1], [0, 0, 1, 1], [], []>} : vector<16x32xf32>, vector<32x128xf32>, vector<16x128xf32> -> vector<16x128xf32>
    %c0_138 = arith.constant 0 : index
    %c0_139 = arith.constant 0 : index
    %311 = vector.load %arg31[%c0_138, %c0_139] : memref<1x128xf32, #tpu.memory_space<vmem>>, vector<1x128xf32>
    %312 = vector.broadcast %311 : vector<1x128xf32> to vector<16x128xf32>
    %313 = arith.addf %310, %312 : vector<16x128xf32>
    %cst_140 = arith.constant 5.000000e-01 : f32
    %314 = vector.broadcast %cst_140 : f32 to vector<16x128xf32>
    %315 = arith.mulf %314, %313 : vector<16x128xf32>
    %cst_141 = arith.constant 0.636619746 : f32
    %316 = math.sqrt %cst_141 : f32
    %cst_142 = arith.constant 4.471500e-02 : f32
    %317 = vector.broadcast %cst_142 : f32 to vector<16x128xf32>
    %318 = arith.mulf %317, %313 : vector<16x128xf32>
    %319 = arith.mulf %318, %313 : vector<16x128xf32>
    %320 = arith.mulf %319, %313 : vector<16x128xf32>
    %321 = arith.addf %313, %320 : vector<16x128xf32>
    %322 = vector.broadcast %316 : f32 to vector<16x128xf32>
    %323 = arith.mulf %322, %321 : vector<16x128xf32>
    %324 = math.tanh %323 : vector<16x128xf32>
    %cst_143 = arith.constant 1.000000e+00 : f32
    %325 = vector.broadcast %cst_143 : f32 to vector<16x128xf32>
    %326 = arith.addf %325, %324 : vector<16x128xf32>
    %327 = arith.mulf %315, %326 : vector<16x128xf32>
    %c0_144 = arith.constant 0 : index
    %c0_145 = arith.constant 0 : index
    %328 = vector.load %arg32[%c0_144, %c0_145] : memref<128x32xf32, #tpu.memory_space<vmem>>, vector<128x32xf32>
    %cst_146 = arith.constant dense<0.000000e+00> : vector<16x32xf32>
    %329 = tpu.matmul %327, %328, %cst_146 {dimension_numbers = #tpu.dot_dimension_numbers<[1], [0], [0], [1], [0, 0, 1, 1], [], []>} : vector<16x128xf32>, vector<128x32xf32>, vector<16x32xf32> -> vector<16x32xf32>
    %c0_147 = arith.constant 0 : index
    %c0_148 = arith.constant 0 : index
    %330 = vector.load %arg33[%c0_147, %c0_148] : memref<1x32xf32, #tpu.memory_space<vmem>>, vector<1x32xf32>
    %331 = vector.broadcast %330 : vector<1x32xf32> to vector<16x32xf32>
    %332 = arith.addf %329, %331 : vector<16x32xf32>
    %333 = arith.addf %284, %332 : vector<16x32xf32>
    %c0_149 = arith.constant 0 : index
    %c0_150 = arith.constant 0 : index
    %334 = vector.load %arg34[%c0_149, %c0_150] : memref<1x32xf32, #tpu.memory_space<vmem>>, vector<1x32xf32>
    %c0_151 = arith.constant 0 : index
    %c0_152 = arith.constant 0 : index
    %335 = vector.load %arg35[%c0_151, %c0_152] : memref<1x32xf32, #tpu.memory_space<vmem>>, vector<1x32xf32>
    %cst_153 = arith.constant dense<0.000000e+00> : vector<16xf32>
    %336 = vector.multi_reduction <add>, %333, %cst_153 [1] : vector<16x32xf32> to vector<16xf32>
    %337 = vector.shape_cast %336 : vector<16xf32> to vector<16x1xf32>
    %cst_154 = arith.constant 3.200000e+01 : f32
    %338 = vector.broadcast %cst_154 : f32 to vector<16x1xf32>
    %339 = arith.divf %337, %338 : vector<16x1xf32>
    %340 = vector.broadcast %339 : vector<16x1xf32> to vector<16x32xf32>
    %341 = arith.subf %333, %340 : vector<16x32xf32>
    %342 = arith.mulf %341, %341 : vector<16x32xf32>
    %cst_155 = arith.constant dense<0.000000e+00> : vector<16xf32>
    %343 = vector.multi_reduction <add>, %342, %cst_155 [1] : vector<16x32xf32> to vector<16xf32>
    %344 = vector.shape_cast %343 : vector<16xf32> to vector<16x1xf32>
    %cst_156 = arith.constant 3.200000e+01 : f32
    %345 = vector.broadcast %cst_156 : f32 to vector<16x1xf32>
    %346 = arith.divf %344, %345 : vector<16x1xf32>
    %347 = vector.broadcast %339 : vector<16x1xf32> to vector<16x32xf32>
    %348 = arith.subf %333, %347 : vector<16x32xf32>
    %cst_157 = arith.constant 9.99999974E-6 : f32
    %349 = vector.broadcast %cst_157 : f32 to vector<16x1xf32>
    %350 = arith.addf %346, %349 : vector<16x1xf32>
    %351 = math.sqrt %350 : vector<16x1xf32>
    %352 = vector.broadcast %351 : vector<16x1xf32> to vector<16x32xf32>
    %353 = arith.divf %348, %352 : vector<16x32xf32>
    %354 = vector.broadcast %334 : vector<1x32xf32> to vector<16x32xf32>
    %355 = arith.mulf %353, %354 : vector<16x32xf32>
    %356 = vector.broadcast %335 : vector<1x32xf32> to vector<16x32xf32>
    %357 = arith.addf %355, %356 : vector<16x32xf32>
    %c0_158 = arith.constant 0 : index
    %c0_159 = arith.constant 0 : index
    %358 = vector.load %arg36[%c0_158, %c0_159] : memref<128x32xf32, #tpu.memory_space<vmem>>, vector<128x32xf32>
    %cst_160 = arith.constant dense<0.000000e+00> : vector<16x128xf32>
    %359 = tpu.matmul %357, %358, %cst_160 {dimension_numbers = #tpu.dot_dimension_numbers<[1], [1], [0], [0], [0, 0, 1, 0], [], []>} : vector<16x32xf32>, vector<128x32xf32>, vector<16x128xf32> -> vector<16x128xf32>
    %c0_161 = arith.constant 0 : index
    %c0_162 = arith.constant 0 : index
    %360 = vector.load %arg37[%c0_161, %c0_162] : memref<1x128xf32, #tpu.memory_space<vmem>>, vector<1x128xf32>
    %361 = vector.broadcast %360 : vector<1x128xf32> to vector<16x128xf32>
    %362 = arith.addf %359, %361 : vector<16x128xf32>
    %c0_163 = arith.constant 0 : index
    %c0_164 = arith.constant 0 : index
    %363 = vector.load %arg38[%c0_163, %c0_164] : memref<16x128xf32, #tpu.memory_space<vmem>>, vector<16x128xf32>
    tpu.vector_store %arg38[%c0_163, %c0_164], %362 {strides = array<i32>} : memref<16x128xf32, #tpu.memory_space<vmem>>, vector<16x128xf32>,
    return
  }
}

</mosaic_0001>

<llo_original>
// kernel: gpt2_lm_head_forward.1
$region0: #{gpt2_lm_head_forward.1}
  #allocation0 [shape = 'u32[]', space=smem, size = 0x4, offset = 0x4, fixed_abs, tag = 'smem constant byte address 0x4 - core index']
  #allocation1 [shape = 'u32[144,128]{1,0:T(1,128)}', space=vmem, size = 0x12000, scoped, tag = 'internal scratch']
  %s0 = inlined_call_operand.smem [shape: u32[39], index: -1, kind: input, shape index: {}]
  %s1 = sld [smem:[%s0]]
  %s2 = scalar_lea.smem %s0, 1
  %s3 = sld [smem:[%s2]]
  %s4 = scalar_lea.smem %s0, 2
  %s5 = sld [smem:[%s4]]
  %s6 = scalar_lea.smem %s0, 3
  %s7 = sld [smem:[%s6]]
  %s8 = scalar_lea.smem %s0, 4
  %s9 = sld [smem:[%s8]]
  %s10 = scalar_lea.smem %s0, 5
  %s11 = sld [smem:[%s10]]
  %s12 = scalar_lea.smem %s0, 6
  %s13 = sld [smem:[%s12]]
  %s14 = scalar_lea.smem %s0, 7
  %s15 = sld [smem:[%s14]]
  %s16 = scalar_lea.smem %s0, 8
  %s17 = sld [smem:[%s16]]
  %s18 = scalar_lea.smem %s0, 9
  %s19 = sld [smem:[%s18]]
  %s20 = scalar_lea.smem %s0, 10
  %s21 = sld [smem:[%s20]]
  %s22 = scalar_lea.smem %s0, 11
  %s23 = sld [smem:[%s22]]
  %s24 = scalar_lea.smem %s0, 12
  %s25 = sld [smem:[%s24]]
  %s26 = scalar_lea.smem %s0, 13
  %s27 = sld [smem:[%s26]]
  %s28 = scalar_lea.smem %s0, 14
  %s29 = sld [smem:[%s28]]
  %s30 = scalar_lea.smem %s0, 15
  %s31 = sld [smem:[%s30]]
  %s32 = scalar_lea.smem %s0, 16
  %s33 = sld [smem:[%s32]]
  %s34 = scalar_lea.smem %s0, 17
  %s35 = sld [smem:[%s34]]
  %s36 = scalar_lea.smem %s0, 18
  %s37 = sld [smem:[%s36]]
  %s38 = scalar_lea.smem %s0, 19
  %s39 = sld [smem:[%s38]]
  %s40 = scalar_lea.smem %s0, 20
  %s41 = sld [smem:[%s40]]
  %s42 = scalar_lea.smem %s0, 21
  %s43 = sld [smem:[%s42]]
  %s44 = scalar_lea.smem %s0, 22
  %s45 = sld [smem:[%s44]]
  %s46 = scalar_lea.smem %s0, 23
  %s47 = sld [smem:[%s46]]
  %s48 = scalar_lea.smem %s0, 24
  %s49 = sld [smem:[%s48]]
  %s50 = scalar_lea.smem %s0, 25
  %s51 = sld [smem:[%s50]]
  %s52 = scalar_lea.smem %s0, 26
  %s53 = sld [smem:[%s52]]
  %s54 = scalar_lea.smem %s0, 27
  %s55 = sld [smem:[%s54]]
  %s56 = scalar_lea.smem %s0, 28
  %s57 = sld [smem:[%s56]]
  %s58 = scalar_lea.smem %s0, 29
  %s59 = sld [smem:[%s58]]
  %s60 = scalar_lea.smem %s0, 30
  %s61 = sld [smem:[%s60]]
  %s62 = scalar_lea.smem %s0, 31
  %s63 = sld [smem:[%s62]]
  %s64 = scalar_lea.smem %s0, 32
  %s65 = sld [smem:[%s64]]
  %s66 = scalar_lea.smem %s0, 33
  %s67 = sld [smem:[%s66]]
  %s68 = scalar_lea.smem %s0, 34
  %s69 = sld [smem:[%s68]]
  %s70 = scalar_lea.smem %s0, 35
  %s71 = sld [smem:[%s70]]
  %s72 = scalar_lea.smem %s0, 36
  %s73 = sld [smem:[%s72]]
  %s74 = scalar_lea.smem %s0, 37
  %s75 = sld [smem:[%s74]]
  %s76 = scalar_lea.smem %s0, 38
  %s77 = sld [smem:[%s76]]
  %s78 = sld [smem:[#allocation0]]
  $region162: #{gpt2_lm_head_forward.1} parent=0
    _
  %s80 = ssub.s32 1, %s78
  %s81 = scalar_select 0, %s80, %s78
  $region1: #{gpt2_lm_head_forward.1} parent=0
    #allocation2 [shape = 'u8[8192]{0}', space=vmem, size = 0x2000, scoped, tag = 'output window, operand 0, single buffered']
    #allocation3 [shape = 's32[1]{0}', space=sflag, size = 0x4, scoped, tag = 'scoped memory for gpt2_lm_head_forward.1']
    %82 = vsyncpa [#allocation3], 0
    // Predicated region
    $region2: #{gpt2_lm_head_forward.1} parent=1 // pred_check
      _
    $region3: #{gpt2_lm_head_forward.1} parent=1 // pred_check_branch
      %84 = sbr.rel (0) target = $region5
    $region4: #{gpt2_lm_head_forward.1} parent=1 // pred_region
      _
    $region5: #{gpt2_lm_head_forward.1} parent=1 // pred_fallthru
      _
    // Predicated region
    $region6: #{gpt2_lm_head_forward.1} parent=1 // pred_check
      _
    $region7: #{gpt2_lm_head_forward.1} parent=1 // pred_check_branch
      %86 = sbr.rel (0) target = $region9
    $region8: #{gpt2_lm_head_forward.1} parent=1 // pred_region
      _
    $region9: #{gpt2_lm_head_forward.1} parent=1 // pred_fallthru
      _
    // Predicated region
    $region10: #{gpt2_lm_head_forward.1} parent=1 // pred_check
      _
    $region11: #{gpt2_lm_head_forward.1} parent=1 // pred_check_branch
      %88 = sbr.rel (0) target = $region13
    $region12: #{gpt2_lm_head_forward.1} parent=1 // pred_region
      _
    $region13: #{gpt2_lm_head_forward.1} parent=1 // pred_fallthru
      _
    // Predicated region
    $region14: #{gpt2_lm_head_forward.1} parent=1 // pred_check
      _
    $region15: #{gpt2_lm_head_forward.1} parent=1 // pred_check_branch
      %90 = sbr.rel (0) target = $region17
    $region16: #{gpt2_lm_head_forward.1} parent=1 // pred_region
      _
    $region17: #{gpt2_lm_head_forward.1} parent=1 // pred_fallthru
      _
    // Predicated region
    $region18: #{gpt2_lm_head_forward.1} parent=1 // pred_check
      _
    $region19: #{gpt2_lm_head_forward.1} parent=1 // pred_check_branch
      %92 = sbr.rel (0) target = $region21
    $region20: #{gpt2_lm_head_forward.1} parent=1 // pred_region
      _
    $region21: #{gpt2_lm_head_forward.1} parent=1 // pred_fallthru
      _
    // Predicated region
    $region22: #{gpt2_lm_head_forward.1} parent=1 // pred_check
      _
    $region23: #{gpt2_lm_head_forward.1} parent=1 // pred_check_branch
      %94 = sbr.rel (0) target = $region25
    $region24: #{gpt2_lm_head_forward.1} parent=1 // pred_region
      _
    $region25: #{gpt2_lm_head_forward.1} parent=1 // pred_fallthru
      _
    // Predicated region
    $region26: #{gpt2_lm_head_forward.1} parent=1 // pred_check
      _
    $region27: #{gpt2_lm_head_forward.1} parent=1 // pred_check_branch
      %96 = sbr.rel (0) target = $region29
    $region28: #{gpt2_lm_head_forward.1} parent=1 // pred_region
      _
    $region29: #{gpt2_lm_head_forward.1} parent=1 // pred_fallthru
      _
    // Predicated region
    $region30: #{gpt2_lm_head_forward.1} parent=1 // pred_check
      _
    $region31: #{gpt2_lm_head_forward.1} parent=1 // pred_check_branch
      %98 = sbr.rel (0) target = $region33
    $region32: #{gpt2_lm_head_forward.1} parent=1 // pred_region
      _
    $region33: #{gpt2_lm_head_forward.1} parent=1 // pred_fallthru
      _
    // Predicated region
    $region34: #{gpt2_lm_head_forward.1} parent=1 // pred_check
      _
    $region35: #{gpt2_lm_head_forward.1} parent=1 // pred_check_branch
      %100 = sbr.rel (0) target = $region37
    $region36: #{gpt2_lm_head_forward.1} parent=1 // pred_region
      _
    $region37: #{gpt2_lm_head_forward.1} parent=1 // pred_fallthru
      _
    // Predicated region
    $region38: #{gpt2_lm_head_forward.1} parent=1 // pred_check
      _
    $region39: #{gpt2_lm_head_forward.1} parent=1 // pred_check_branch
      %102 = sbr.rel (0) target = $region41
    $region40: #{gpt2_lm_head_forward.1} parent=1 // pred_region
      _
    $region41: #{gpt2_lm_head_forward.1} parent=1 // pred_fallthru
      _
    // Predicated region
    $region42: #{gpt2_lm_head_forward.1} parent=1 // pred_check
      _
    $region43: #{gpt2_lm_head_forward.1} parent=1 // pred_check_branch
      %104 = sbr.rel (0) target = $region45
    $region44: #{gpt2_lm_head_forward.1} parent=1 // pred_region
      _
    $region45: #{gpt2_lm_head_forward.1} parent=1 // pred_fallthru
      _
    // Predicated region
    $region46: #{gpt2_lm_head_forward.1} parent=1 // pred_check
      _
    $region47: #{gpt2_lm_head_forward.1} parent=1 // pred_check_branch
      %106 = sbr.rel (0) target = $region49
    $region48: #{gpt2_lm_head_forward.1} parent=1 // pred_region
      _
    $region49: #{gpt2_lm_head_forward.1} parent=1 // pred_fallthru
      _
    // Predicated region
    $region50: #{gpt2_lm_head_forward.1} parent=1 // pred_check
      _
    $region51: #{gpt2_lm_head_forward.1} parent=1 // pred_check_branch
      %108 = sbr.rel (0) target = $region53
    $region52: #{gpt2_lm_head_forward.1} parent=1 // pred_region
      _
    $region53: #{gpt2_lm_head_forward.1} parent=1 // pred_fallthru
      _
    // Predicated region
    $region54: #{gpt2_lm_head_forward.1} parent=1 // pred_check
      _
    $region55: #{gpt2_lm_head_forward.1} parent=1 // pred_check_branch
      %110 = sbr.rel (0) target = $region57
    $region56: #{gpt2_lm_head_forward.1} parent=1 // pred_region
      _
    $region57: #{gpt2_lm_head_forward.1} parent=1 // pred_fallthru
      _
    // Predicated region
    $region58: #{gpt2_lm_head_forward.1} parent=1 // pred_check
      _
    $region59: #{gpt2_lm_head_forward.1} parent=1 // pred_check_branch
      %112 = sbr.rel (0) target = $region61
    $region60: #{gpt2_lm_head_forward.1} parent=1 // pred_region
      _
    $region61: #{gpt2_lm_head_forward.1} parent=1 // pred_fallthru
      _
    // Predicated region
    $region62: #{gpt2_lm_head_forward.1} parent=1 // pred_check
      _
    $region63: #{gpt2_lm_head_forward.1} parent=1 // pred_check_branch
      %114 = sbr.rel (0) target = $region65
    $region64: #{gpt2_lm_head_forward.1} parent=1 // pred_region
      _
    $region65: #{gpt2_lm_head_forward.1} parent=1 // pred_fallthru
      _
    // Predicated region
    $region66: #{gpt2_lm_head_forward.1} parent=1 // pred_check
      _
    $region67: #{gpt2_lm_head_forward.1} parent=1 // pred_check_branch
      %116 = sbr.rel (0) target = $region69
    $region68: #{gpt2_lm_head_forward.1} parent=1 // pred_region
      _
    $region69: #{gpt2_lm_head_forward.1} parent=1 // pred_fallthru
      _
    // Predicated region
    $region70: #{gpt2_lm_head_forward.1} parent=1 // pred_check
      _
    $region71: #{gpt2_lm_head_forward.1} parent=1 // pred_check_branch
      %118 = sbr.rel (0) target = $region73
    $region72: #{gpt2_lm_head_forward.1} parent=1 // pred_region
      _
    $region73: #{gpt2_lm_head_forward.1} parent=1 // pred_fallthru
      _
    // Predicated region
    $region74: #{gpt2_lm_head_forward.1} parent=1 // pred_check
      _
    $region75: #{gpt2_lm_head_forward.1} parent=1 // pred_check_branch
      %120 = sbr.rel (0) target = $region77
    $region76: #{gpt2_lm_head_forward.1} parent=1 // pred_region
      _
    $region77: #{gpt2_lm_head_forward.1} parent=1 // pred_fallthru
      _
    // Predicated region
    $region78: #{gpt2_lm_head_forward.1} parent=1 // pred_check
      _
    $region79: #{gpt2_lm_head_forward.1} parent=1 // pred_check_branch
      %122 = sbr.rel (0) target = $region81
    $region80: #{gpt2_lm_head_forward.1} parent=1 // pred_region
      _
    $region81: #{gpt2_lm_head_forward.1} parent=1 // pred_fallthru
      _
    // Predicated region
    $region82: #{gpt2_lm_head_forward.1} parent=1 // pred_check
      _
    $region83: #{gpt2_lm_head_forward.1} parent=1 // pred_check_branch
      %124 = sbr.rel (0) target = $region85
    $region84: #{gpt2_lm_head_forward.1} parent=1 // pred_region
      _
    $region85: #{gpt2_lm_head_forward.1} parent=1 // pred_fallthru
      _
    // Predicated region
    $region86: #{gpt2_lm_head_forward.1} parent=1 // pred_check
      _
    $region87: #{gpt2_lm_head_forward.1} parent=1 // pred_check_branch
      %126 = sbr.rel (0) target = $region89
    $region88: #{gpt2_lm_head_forward.1} parent=1 // pred_region
      _
    $region89: #{gpt2_lm_head_forward.1} parent=1 // pred_fallthru
      _
    // Predicated region
    $region90: #{gpt2_lm_head_forward.1} parent=1 // pred_check
      _
    $region91: #{gpt2_lm_head_forward.1} parent=1 // pred_check_branch
      %128 = sbr.rel (0) target = $region93
    $region92: #{gpt2_lm_head_forward.1} parent=1 // pred_region
      _
    $region93: #{gpt2_lm_head_forward.1} parent=1 // pred_fallthru
      _
    // Predicated region
    $region94: #{gpt2_lm_head_forward.1} parent=1 // pred_check
      _
    $region95: #{gpt2_lm_head_forward.1} parent=1 // pred_check_branch
      %130 = sbr.rel (0) target = $region97
    $region96: #{gpt2_lm_head_forward.1} parent=1 // pred_region
      _
    $region97: #{gpt2_lm_head_forward.1} parent=1 // pred_fallthru
      _
    // Predicated region
    $region98: #{gpt2_lm_head_forward.1} parent=1 // pred_check
      _
    $region99: #{gpt2_lm_head_forward.1} parent=1 // pred_check_branch
      %132 = sbr.rel (0) target = $region101
    $region100: #{gpt2_lm_head_forward.1} parent=1 // pred_region
      _
    $region101: #{gpt2_lm_head_forward.1} parent=1 // pred_fallthru
      _
    // Predicated region
    $region102: #{gpt2_lm_head_forward.1} parent=1 // pred_check
      _
    $region103: #{gpt2_lm_head_forward.1} parent=1 // pred_check_branch
      %134 = sbr.rel (0) target = $region105
    $region104: #{gpt2_lm_head_forward.1} parent=1 // pred_region
      _
    $region105: #{gpt2_lm_head_forward.1} parent=1 // pred_fallthru
      _
    // Predicated region
    $region106: #{gpt2_lm_head_forward.1} parent=1 // pred_check
      _
    $region107: #{gpt2_lm_head_forward.1} parent=1 // pred_check_branch
      %136 = sbr.rel (0) target = $region109
    $region108: #{gpt2_lm_head_forward.1} parent=1 // pred_region
      _
    $region109: #{gpt2_lm_head_forward.1} parent=1 // pred_fallthru
      _
    // Predicated region
    $region110: #{gpt2_lm_head_forward.1} parent=1 // pred_check
      _
    $region111: #{gpt2_lm_head_forward.1} parent=1 // pred_check_branch
      %138 = sbr.rel (0) target = $region113
    $region112: #{gpt2_lm_head_forward.1} parent=1 // pred_region
      _
    $region113: #{gpt2_lm_head_forward.1} parent=1 // pred_fallthru
      _
    // Predicated region
    $region114: #{gpt2_lm_head_forward.1} parent=1 // pred_check
      _
    $region115: #{gpt2_lm_head_forward.1} parent=1 // pred_check_branch
      %140 = sbr.rel (0) target = $region117
    $region116: #{gpt2_lm_head_forward.1} parent=1 // pred_region
      _
    $region117: #{gpt2_lm_head_forward.1} parent=1 // pred_fallthru
      _
    // Predicated region
    $region118: #{gpt2_lm_head_forward.1} parent=1 // pred_check
      _
    $region119: #{gpt2_lm_head_forward.1} parent=1 // pred_check_branch
      %142 = sbr.rel (0) target = $region121
    $region120: #{gpt2_lm_head_forward.1} parent=1 // pred_region
      _
    $region121: #{gpt2_lm_head_forward.1} parent=1 // pred_fallthru
      _
    // Predicated region
    $region122: #{gpt2_lm_head_forward.1} parent=1 // pred_check
      _
    $region123: #{gpt2_lm_head_forward.1} parent=1 // pred_check_branch
      %144 = sbr.rel (0) target = $region125
    $region124: #{gpt2_lm_head_forward.1} parent=1 // pred_region
      _
    $region125: #{gpt2_lm_head_forward.1} parent=1 // pred_fallthru
      _
    // Predicated region
    $region126: #{gpt2_lm_head_forward.1} parent=1 // pred_check
      _
    $region127: #{gpt2_lm_head_forward.1} parent=1 // pred_check_branch
      %146 = sbr.rel (0) target = $region129
    $region128: #{gpt2_lm_head_forward.1} parent=1 // pred_region
      _
    $region129: #{gpt2_lm_head_forward.1} parent=1 // pred_fallthru
      _
    // Predicated region
    $region130: #{gpt2_lm_head_forward.1} parent=1 // pred_check
      _
    $region131: #{gpt2_lm_head_forward.1} parent=1 // pred_check_branch
      %148 = sbr.rel (0) target = $region133
    $region132: #{gpt2_lm_head_forward.1} parent=1 // pred_region
      _
    $region133: #{gpt2_lm_head_forward.1} parent=1 // pred_fallthru
      _
    // Predicated region
    $region134: #{gpt2_lm_head_forward.1} parent=1 // pred_check
      _
    $region135: #{gpt2_lm_head_forward.1} parent=1 // pred_check_branch
      %150 = sbr.rel (0) target = $region137
    $region136: #{gpt2_lm_head_forward.1} parent=1 // pred_region
      _
    $region137: #{gpt2_lm_head_forward.1} parent=1 // pred_fallthru
      _
    // Predicated region
    $region138: #{gpt2_lm_head_forward.1} parent=1 // pred_check
      _
    $region139: #{gpt2_lm_head_forward.1} parent=1 // pred_check_branch
      %152 = sbr.rel (0) target = $region141
    $region140: #{gpt2_lm_head_forward.1} parent=1 // pred_region
      _
    $region141: #{gpt2_lm_head_forward.1} parent=1 // pred_fallthru
      _
    // Predicated region
    $region142: #{gpt2_lm_head_forward.1} parent=1 // pred_check
      _
    $region143: #{gpt2_lm_head_forward.1} parent=1 // pred_check_branch
      %154 = sbr.rel (0) target = $region145
    $region144: #{gpt2_lm_head_forward.1} parent=1 // pred_region
      _
    $region145: #{gpt2_lm_head_forward.1} parent=1 // pred_fallthru
      _
    // Predicated region
    $region146: #{gpt2_lm_head_forward.1} parent=1 // pred_check
      _
    $region147: #{gpt2_lm_head_forward.1} parent=1 // pred_check_branch
      %156 = sbr.rel (0) target = $region149
    $region148: #{gpt2_lm_head_forward.1} parent=1 // pred_region
      _
    $region149: #{gpt2_lm_head_forward.1} parent=1 // pred_fallthru
      _
    // Predicated region
    $region150: #{gpt2_lm_head_forward.1} parent=1 // pred_check
      _
    $region151: #{gpt2_lm_head_forward.1} parent=1 // pred_check_branch
      %158 = sbr.rel (0) target = $region153
    $region152: #{gpt2_lm_head_forward.1} parent=1 // pred_region
      _
    $region153: #{gpt2_lm_head_forward.1} parent=1 // pred_fallthru
      _
    %v159 = vld [vmem:[%s1] sm:$0xff]
    %v160 = vld [vmem:[%s1 + $0x8] sm:$0xff]
    %v161 = vld [vmem:[%s3] sm:$0xff]
    %v162 = vld [vmem:[%s3 + $0x8] sm:$0xff]
    %vm163 = vcmp.gt.f32.partialorder %v161, 0.0
    %vm164 = vcmp.gt.f32.partialorder %v162, 0.0
    %v165 = vld [vmem:[%s5] sm:$0x1]
    %v166 = vld [vmem:[%s7] sm:$0x1]
    %vm167 = vcmask 261120
    %v168 = vsel %vm167, %v159, 0.0
    %169 = vadd.xlane.f32.xlu0 %v168
    %v170 = vpop.xlane.xlu0 %169
    %v171 = vsel %vm167, %v160, 0.0
    %172 = vadd.xlane.f32.xlu0 %v171
    %v173 = vpop.xlane.xlu0 %172
    %v174 = vrcp.pop 32.0
    %v175 = vmul.f32 %v170, %v174
    %v176 = vmul.f32 %v173, %v174
    %v177 = vsub.f32 %v159, %v175
    %v178 = vsub.f32 %v160, %v176
    %v179 = vmul.f32 %v177, %v177
    %v180 = vmul.f32 %v178, %v178
    %v181 = vsel %vm167, %v179, 0.0
    %182 = vadd.xlane.f32.xlu0 %v181
    %v183 = vpop.xlane.xlu0 %182
    %v184 = vsel %vm167, %v180, 0.0
    %185 = vadd.xlane.f32.xlu0 %v184
    %v186 = vpop.xlane.xlu0 %185
    %v187 = vmul.f32 %v183, %v174
    %v188 = vmul.f32 %v186, %v174
    %v189 = vadd.f32 %v187, 1e-05
    %v190 = vadd.f32 %v188, 1e-05
    %v191 = vrsqrt.pop %v189
    %v192 = vmul.f32 %v189, %v191
    %vm193 = vcmp.eq.f32.partialorder %v189, inf
    %v194 = vsel %vm193, %v189, %v192
    %vm195 = vcmp.eq.f32.partialorder %v189, 0.0
    %v196 = vand.u32 %v189, 2147483648
    %v197 = vsel %vm195, %v196, %v194
    %v198 = vrsqrt.pop %v190
    %v199 = vmul.f32 %v190, %v198
    %vm200 = vcmp.eq.f32.partialorder %v190, inf
    %v201 = vsel %vm200, %v190, %v199
    %vm202 = vcmp.eq.f32.partialorder %v190, 0.0
    %v203 = vand.u32 %v190, 2147483648
    %v204 = vsel %vm202, %v203, %v201
    %v205 = vrcp.pop %v197
    %v206 = vmul.f32 %v177, %v205
    %v207 = vrcp.pop %v204
    %v208 = vmul.f32 %v178, %v207
    %v210 = vlaneseq
    %v211 = vshrl.u32 %v210, 7
    %v212 = vsub.s32 0, %v211
    %v213 = vrot.slane %v165, %v212
    %v215 = vmul.f32 %v206, %v213
    %v216 = vmul.f32 %v208, %v213
    %v218 = vlaneseq
    %v219 = vshrl.u32 %v218, 7
    %v220 = vsub.s32 0, %v219
    %v221 = vrot.slane %v166, %v220
    %v223 = vadd.f32 %v215, %v221
    %v224 = vadd.f32 %v216, %v221
    %v225 = vld [vmem:[%s9] sm:$0xff]
    %v226 = vld [vmem:[%s9 + $0x8] sm:$0xff]
    %v227 = vld [vmem:[%s9 + $0x10] sm:$0xff]
    %v228 = vld [vmem:[%s9 + $0x18] sm:$0xff]
    %v229 = vld [vmem:[%s11] sm:$0x1]
    %v231 = vlaneseq
    %v232 = vshrl.u32 %v231, 7
    %v233 = vsub.s32 0, %v232
    %v234 = vrot.slane %v229, %v233
    %v237 = vsel %vm167, %v223, 0
    %v240 = vsel %vm167, %v224, 0
    %242 = vmatprep.subr.mxu0 0.0
    %243 = vmatpush1.msra.mxu0 0.0
    %244 = vmatprep.subr.mxu0 0.0
    %245 = vmatpush1.msra.mxu0 0.0
    %246 = vmatprep.subr.mxu0 0.0
    %247 = vmatpush1.msra.mxu0 0.0
    %248 = vmatprep.subr.mxu0 0.0
    %249 = vmatpush1.msra.mxu0 0.0
    %250 = vmatprep.subr.mxu0 0.0
    %251 = vmatpush1.msra.mxu0 0.0
    %252 = vmatprep.subr.mxu0 0.0
    %253 = vmatpush1.msra.mxu0 0.0
    %254 = vmatprep.subr.mxu0 0.0
    %255 = vmatpush1.msra.mxu0 0.0
    %256 = vmatprep.subr.mxu0 0.0
    %257 = vmatpush1.msra.mxu0 0.0
    %258 = vmatprep.subr.mxu0 0.0
    %259 = vmatpush1.msra.mxu0 0.0
    %260 = vmatprep.subr.mxu0 0.0
    %261 = vmatpush1.msra.mxu0 0.0
    %262 = vmatprep.subr.mxu0 0.0
    %263 = vmatpush1.msra.mxu0 0.0
    %264 = vmatprep.subr.mxu0 0.0
    %265 = vmatpush1.msra.mxu0 0.0
    %266 = vmatprep.subr.mxu0 0.0
    %267 = vmatpush1.msra.mxu0 %v228
    %268 = vmatprep.subr.mxu0 0.0
    %269 = vmatpush1.msra.mxu0 %v227
    %270 = vmatprep.subr.mxu0 0.0
    %271 = vmatpush1.msra.mxu0 %v226
    %272 = vmatprep.subr.mxu0 0.0
    %273 = vmatpush1.msra.mxu0 %v225
    %274 = vmatprep.subr.mxu0 0.0
    %275 = vmatpush2.msra.mxu0 0.0
    %276 = vmatprep.subr.mxu0 0.0
    %277 = vmatpush2.msra.mxu0 0.0
    %278 = vmatprep.subr.mxu0 0.0
    %279 = vmatpush2.msra.mxu0 0.0
    %280 = vmatprep.subr.mxu0 0.0
    %281 = vmatpush2.msra.mxu0 0.0
    %282 = vmatprep.subr.mxu0 0.0
    %283 = vmatpush2.msra.mxu0 0.0
    %284 = vmatprep.subr.mxu0 0.0
    %285 = vmatpush2.msra.mxu0 0.0
    %286 = vmatprep.subr.mxu0 0.0
    %287 = vmatpush2.msra.mxu0 0.0
    %288 = vmatprep.subr.mxu0 0.0
    %289 = vmatpush2.msra.mxu0 0.0
    %290 = vmatprep.subr.mxu0 0.0
    %291 = vmatpush2.msra.mxu0 0.0
    %292 = vmatprep.subr.mxu0 0.0
    %293 = vmatpush2.msra.mxu0 0.0
    %294 = vmatprep.subr.mxu0 0.0
    %295 = vmatpush2.msra.mxu0 0.0
    %296 = vmatprep.subr.mxu0 0.0
    %297 = vmatpush2.msra.mxu0 0.0
    %298 = vmatprep.subr.mxu0 0.0
    %299 = vmatpush2.msra.mxu0 0.0
    %300 = vmatprep.subr.mxu0 0.0
    %301 = vmatpush2.msra.mxu0 0.0
    %302 = vmatprep.subr.mxu0 0.0
    %303 = vmatpush2.msra.mxu0 0.0
    %304 = vmatprep.subr.mxu0 0.0
    %305 = vmatpush2.msra.mxu0 0.0
    %306 = vmatprep.mubr.f32.mxu0 0.0
    %307 = vmatmul.mubr.f32.gmra.mxu0 %v237
    %v308 = vpop.f32.mrf.mxu0
    %v309 = vadd.f32 %v234, %v308
    %v310 = vpop.f32.mrf.mxu0
    %311 = vmatprep.mubr.f32.mxu0 0.0
    %312 = vmatmul.mubr.f32.gmra.mxu0 %v240
    %v313 = vpop.f32.mrf.mxu0
    %v314 = vadd.f32 %v234, %v313
    %v315 = vpop.f32.mrf.mxu0
    %316 = vdwg.mxu0
    %v317 = vmul.f32 %v309, 0.35355338
    %v318 = vmul.f32 %v314, 0.35355338
    %v319 = vld [vmem:[%s13] sm:$0xff]
    %v320 = vld [vmem:[%s13 + $0x8] sm:$0xff]
    %v321 = vld [vmem:[%s13 + $0x10] sm:$0xff]
    %v322 = vld [vmem:[%s13 + $0x18] sm:$0xff]
    %v323 = vld [vmem:[%s15] sm:$0x1]
    %v325 = vlaneseq
    %v326 = vshrl.u32 %v325, 7
    %v327 = vsub.s32 0, %v326
    %v328 = vrot.slane %v323, %v327
    %330 = vmatprep.subr.mxu0 0.0
    %331 = vmatpush1.msra.mxu0 0.0
    %332 = vmatprep.subr.mxu0 0.0
    %333 = vmatpush1.msra.mxu0 0.0
    %334 = vmatprep.subr.mxu0 0.0
    %335 = vmatpush1.msra.mxu0 0.0
    %336 = vmatprep.subr.mxu0 0.0
    %337 = vmatpush1.msra.mxu0 0.0
    %338 = vmatprep.subr.mxu0 0.0
    %339 = vmatpush1.msra.mxu0 0.0
    %340 = vmatprep.subr.mxu0 0.0
    %341 = vmatpush1.msra.mxu0 0.0
    %342 = vmatprep.subr.mxu0 0.0
    %343 = vmatpush1.msra.mxu0 0.0
    %344 = vmatprep.subr.mxu0 0.0
    %345 = vmatpush1.msra.mxu0 0.0
    %346 = vmatprep.subr.mxu0 0.0
    %347 = vmatpush1.msra.mxu0 0.0
    %348 = vmatprep.subr.mxu0 0.0
    %349 = vmatpush1.msra.mxu0 0.0
    %350 = vmatprep.subr.mxu0 0.0
    %351 = vmatpush1.msra.mxu0 0.0
    %352 = vmatprep.subr.mxu0 0.0
    %353 = vmatpush1.msra.mxu0 0.0
    %354 = vmatprep.subr.mxu0 0.0
    %355 = vmatpush1.msra.mxu0 %v322
    %356 = vmatprep.subr.mxu0 0.0
    %357 = vmatpush1.msra.mxu0 %v321
    %358 = vmatprep.subr.mxu0 0.0
    %359 = vmatpush1.msra.mxu0 %v320
    %360 = vmatprep.subr.mxu0 0.0
    %361 = vmatpush1.msra.mxu0 %v319
    %362 = vmatprep.subr.mxu0 0.0
    %363 = vmatpush2.msra.mxu0 0.0
    %364 = vmatprep.subr.mxu0 0.0
    %365 = vmatpush2.msra.mxu0 0.0
    %366 = vmatprep.subr.mxu0 0.0
    %367 = vmatpush2.msra.mxu0 0.0
    %368 = vmatprep.subr.mxu0 0.0
    %369 = vmatpush2.msra.mxu0 0.0
    %370 = vmatprep.subr.mxu0 0.0
    %371 = vmatpush2.msra.mxu0 0.0
    %372 = vmatprep.subr.mxu0 0.0
    %373 = vmatpush2.msra.mxu0 0.0
    %374 = vmatprep.subr.mxu0 0.0
    %375 = vmatpush2.msra.mxu0 0.0
    %376 = vmatprep.subr.mxu0 0.0
    %377 = vmatpush2.msra.mxu0 0.0
    %378 = vmatprep.subr.mxu0 0.0
    %379 = vmatpush2.msra.mxu0 0.0
    %380 = vmatprep.subr.mxu0 0.0
    %381 = vmatpush2.msra.mxu0 0.0
    %382 = vmatprep.subr.mxu0 0.0
    %383 = vmatpush2.msra.mxu0 0.0
    %384 = vmatprep.subr.mxu0 0.0
    %385 = vmatpush2.msra.mxu0 0.0
    %386 = vmatprep.subr.mxu0 0.0
    %387 = vmatpush2.msra.mxu0 0.0
    %388 = vmatprep.subr.mxu0 0.0
    %389 = vmatpush2.msra.mxu0 0.0
    %390 = vmatprep.subr.mxu0 0.0
    %391 = vmatpush2.msra.mxu0 0.0
    %392 = vmatprep.subr.mxu0 0.0
    %393 = vmatpush2.msra.mxu0 0.0
    %394 = vmatprep.mubr.f32.mxu0 0.0
    %395 = vmatmul.mubr.f32.gmra.mxu0 %v237
    %v396 = vpop.f32.mrf.mxu0
    %v397 = vadd.f32 %v328, %v396
    %v398 = vpop.f32.mrf.mxu0
    %399 = vmatprep.mubr.f32.mxu0 0.0
    %400 = vmatmul.mubr.f32.gmra.mxu0 %v240
    %v401 = vpop.f32.mrf.mxu0
    %v402 = vadd.f32 %v328, %v401
    %v403 = vpop.f32.mrf.mxu0
    %404 = vdwg.mxu0
    %v405 = vld [vmem:[%s17] sm:$0xff]
    %v406 = vld [vmem:[%s17 + $0x8] sm:$0xff]
    %v407 = vld [vmem:[%s17 + $0x10] sm:$0xff]
    %v408 = vld [vmem:[%s17 + $0x18] sm:$0xff]
    %v409 = vld [vmem:[%s19] sm:$0x1]
    %v411 = vlaneseq
    %v412 = vshrl.u32 %v411, 7
    %v413 = vsub.s32 0, %v412
    %v414 = vrot.slane %v409, %v413
    %416 = vmatprep.subr.mxu0 0.0
    %417 = vmatpush1.msra.mxu0 0.0
    %418 = vmatprep.subr.mxu0 0.0
    %419 = vmatpush1.msra.mxu0 0.0
    %420 = vmatprep.subr.mxu0 0.0
    %421 = vmatpush1.msra.mxu0 0.0
    %422 = vmatprep.subr.mxu0 0.0
    %423 = vmatpush1.msra.mxu0 0.0
    %424 = vmatprep.subr.mxu0 0.0
    %425 = vmatpush1.msra.mxu0 0.0
    %426 = vmatprep.subr.mxu0 0.0
    %427 = vmatpush1.msra.mxu0 0.0
    %428 = vmatprep.subr.mxu0 0.0
    %429 = vmatpush1.msra.mxu0 0.0
    %430 = vmatprep.subr.mxu0 0.0
    %431 = vmatpush1.msra.mxu0 0.0
    %432 = vmatprep.subr.mxu0 0.0
    %433 = vmatpush1.msra.mxu0 0.0
    %434 = vmatprep.subr.mxu0 0.0
    %435 = vmatpush1.msra.mxu0 0.0
    %436 = vmatprep.subr.mxu0 0.0
    %437 = vmatpush1.msra.mxu0 0.0
    %438 = vmatprep.subr.mxu0 0.0
    %439 = vmatpush1.msra.mxu0 0.0
    %440 = vmatprep.subr.mxu0 0.0
    %441 = vmatpush1.msra.mxu0 %v408
    %442 = vmatprep.subr.mxu0 0.0
    %443 = vmatpush1.msra.mxu0 %v407
    %444 = vmatprep.subr.mxu0 0.0
    %445 = vmatpush1.msra.mxu0 %v406
    %446 = vmatprep.subr.mxu0 0.0
    %447 = vmatpush1.msra.mxu0 %v405
    %448 = vmatprep.subr.mxu0 0.0
    %449 = vmatpush2.msra.mxu0 0.0
    %450 = vmatprep.subr.mxu0 0.0
    %451 = vmatpush2.msra.mxu0 0.0
    %452 = vmatprep.subr.mxu0 0.0
    %453 = vmatpush2.msra.mxu0 0.0
    %454 = vmatprep.subr.mxu0 0.0
    %455 = vmatpush2.msra.mxu0 0.0
    %456 = vmatprep.subr.mxu0 0.0
    %457 = vmatpush2.msra.mxu0 0.0
    %458 = vmatprep.subr.mxu0 0.0
    %459 = vmatpush2.msra.mxu0 0.0
    %460 = vmatprep.subr.mxu0 0.0
    %461 = vmatpush2.msra.mxu0 0.0
    %462 = vmatprep.subr.mxu0 0.0
    %463 = vmatpush2.msra.mxu0 0.0
    %464 = vmatprep.subr.mxu0 0.0
    %465 = vmatpush2.msra.mxu0 0.0
    %466 = vmatprep.subr.mxu0 0.0
    %467 = vmatpush2.msra.mxu0 0.0
    %468 = vmatprep.subr.mxu0 0.0
    %469 = vmatpush2.msra.mxu0 0.0
    %470 = vmatprep.subr.mxu0 0.0
    %471 = vmatpush2.msra.mxu0 0.0
    %472 = vmatprep.subr.mxu0 0.0
    %473 = vmatpush2.msra.mxu0 0.0
    %474 = vmatprep.subr.mxu0 0.0
    %475 = vmatpush2.msra.mxu0 0.0
    %476 = vmatprep.subr.mxu0 0.0
    %477 = vmatpush2.msra.mxu0 0.0
    %478 = vmatprep.subr.mxu0 0.0
    %479 = vmatpush2.msra.mxu0 0.0
    %480 = vmatprep.mubr.f32.mxu0 0.0
    %481 = vmatmul.mubr.f32.gmra.mxu0 %v237
    %v482 = vpop.f32.mrf.mxu0
    %v483 = vadd.f32 %v414, %v482
    %v484 = vpop.f32.mrf.mxu0
    %485 = vmatprep.mubr.f32.mxu0 0.0
    %486 = vmatmul.mubr.f32.gmra.mxu0 %v240
    %v487 = vpop.f32.mrf.mxu0
    %v488 = vadd.f32 %v414, %v487
    %v489 = vpop.f32.mrf.mxu0
    %490 = vdwg.mxu0
    %vm491 = vcmask 64512
    %v493 = vsel %vm491, %v317, 0
    %v496 = vsel %vm491, %v318, 0
    %v499 = vsel %vm491, %v397, 0
    %v502 = vsel %vm491, %v402, 0
    %504 = vmatprep.subr.mxu0 0.0
    %505 = vmatpush1.xpose.msra.mxu0 0.0
    %506 = vmatprep.subr.mxu0 0.0
    %507 = vmatpush1.xpose.msra.mxu0 0.0
    %508 = vmatprep.subr.mxu0 0.0
    %509 = vmatpush1.xpose.msra.mxu0 0.0
    %510 = vmatprep.subr.mxu0 0.0
    %511 = vmatpush1.xpose.msra.mxu0 0.0
    %512 = vmatprep.subr.mxu0 0.0
    %513 = vmatpush1.xpose.msra.mxu0 0.0
    %514 = vmatprep.subr.mxu0 0.0
    %515 = vmatpush1.xpose.msra.mxu0 0.0
    %516 = vmatprep.subr.mxu0 0.0
    %517 = vmatpush1.xpose.msra.mxu0 0.0
    %518 = vmatprep.subr.mxu0 0.0
    %519 = vmatpush1.xpose.msra.mxu0 0.0
    %520 = vmatprep.subr.mxu0 0.0
    %521 = vmatpush1.xpose.msra.mxu0 0.0
    %522 = vmatprep.subr.mxu0 0.0
    %523 = vmatpush1.xpose.msra.mxu0 0.0
    %524 = vmatprep.subr.mxu0 0.0
    %525 = vmatpush1.xpose.msra.mxu0 0.0
    %526 = vmatprep.subr.mxu0 0.0
    %527 = vmatpush1.xpose.msra.mxu0 0.0
    %528 = vmatprep.subr.mxu0 0.0
    %529 = vmatpush1.xpose.msra.mxu0 0.0
    %530 = vmatprep.subr.mxu0 0.0
    %531 = vmatpush1.xpose.msra.mxu0 0.0
    %532 = vmatprep.subr.mxu0 0.0
    %533 = vmatpush1.xpose.msra.mxu0 %v502
    %534 = vmatprep.subr.mxu0 0.0
    %535 = vmatpush1.xpose.msra.mxu0 %v499
    %536 = vmatprep.subr.mxu0 0.0
    %537 = vmatpush2.xpose.msra.mxu0 0.0
    %538 = vmatprep.subr.mxu0 0.0
    %539 = vmatpush2.xpose.msra.mxu0 0.0
    %540 = vmatprep.subr.mxu0 0.0
    %541 = vmatpush2.xpose.msra.mxu0 0.0
    %542 = vmatprep.subr.mxu0 0.0
    %543 = vmatpush2.xpose.msra.mxu0 0.0
    %544 = vmatprep.subr.mxu0 0.0
    %545 = vmatpush2.xpose.msra.mxu0 0.0
    %546 = vmatprep.subr.mxu0 0.0
    %547 = vmatpush2.xpose.msra.mxu0 0.0
    %548 = vmatprep.subr.mxu0 0.0
    %549 = vmatpush2.xpose.msra.mxu0 0.0
    %550 = vmatprep.subr.mxu0 0.0
    %551 = vmatpush2.xpose.msra.mxu0 0.0
    %552 = vmatprep.subr.mxu0 0.0
    %553 = vmatpush2.xpose.msra.mxu0 0.0
    %554 = vmatprep.subr.mxu0 0.0
    %555 = vmatpush2.xpose.msra.mxu0 0.0
    %556 = vmatprep.subr.mxu0 0.0
    %557 = vmatpush2.xpose.msra.mxu0 0.0
    %558 = vmatprep.subr.mxu0 0.0
    %559 = vmatpush2.xpose.msra.mxu0 0.0
    %560 = vmatprep.subr.mxu0 0.0
    %561 = vmatpush2.xpose.msra.mxu0 0.0
    %562 = vmatprep.subr.mxu0 0.0
    %563 = vmatpush2.xpose.msra.mxu0 0.0
    %564 = vmatprep.subr.mxu0 0.0
    %565 = vmatpush2.xpose.msra.mxu0 0.0
    %566 = vmatprep.subr.mxu0 0.0
    %567 = vmatpush2.xpose.msra.mxu0 0.0
    %568 = vmatprep.mubr.f32.mxu0 0.0
    %569 = vmatmul.mubr.f32.gmra.mxu0 %v493
    %v570 = vpop.f32.mrf.mxu0
    %v571 = vadd.f32 0.0, %v570
    %v572 = vpop.f32.mrf.mxu0
    %573 = vmatprep.mubr.f32.mxu0 0.0
    %574 = vmatmul.mubr.f32.gmra.mxu0 %v496
    %v575 = vpop.f32.mrf.mxu0
    %v576 = vadd.f32 0.0, %v575
    %v577 = vpop.f32.mrf.mxu0
    %578 = vdwg.mxu0
    %v579 = vsel %vm163, %v571, -10000.0
    %v580 = vsel %vm164, %v576, -10000.0
    %vm581 = vcmask 130048
    %v582 = vsel %vm581, %v579, -inf
    %583 = vmax.xlane.f32.xlu0 %v582
    %v584 = vpop.xlane.xlu0 %583
    %v585 = vsel %vm581, %v580, -inf
    %586 = vmax.xlane.f32.xlu0 %v585
    %v587 = vpop.xlane.xlu0 %586
    %v588 = vsub.f32 %v579, %v584
    %v589 = vsub.f32 %v580, %v587
    %v590 = vmul.f32 %v588, 1.442695
    %v591 = vpow.pop %v590
    %v592 = vmul.f32 %v589, 1.442695
    %v593 = vpow.pop %v592
    %v594 = vsel %vm581, %v591, 0.0
    %595 = vadd.xlane.f32.xlu0 %v594
    %v596 = vpop.xlane.xlu0 %595
    %v597 = vsel %vm581, %v593, 0.0
    %598 = vadd.xlane.f32.xlu0 %v597
    %v599 = vpop.xlane.xlu0 %598
    %v600 = vrcp.pop %v596
    %v601 = vmul.f32 %v591, %v600
    %v602 = vrcp.pop %v599
    %v603 = vmul.f32 %v593, %v602
    %v605 = vsel %vm581, %v601, 0
    %v608 = vsel %vm581, %v603, 0
    %610 = vmatprep.subr.mxu0 0.0
    %611 = vmatpush1.msra.mxu0 0.0
    %612 = vmatprep.subr.mxu0 0.0
    %613 = vmatpush1.msra.mxu0 0.0
    %614 = vmatprep.subr.mxu0 0.0
    %615 = vmatpush1.msra.mxu0 0.0
    %616 = vmatprep.subr.mxu0 0.0
    %617 = vmatpush1.msra.mxu0 0.0
    %618 = vmatprep.subr.mxu0 0.0
    %619 = vmatpush1.msra.mxu0 0.0
    %620 = vmatprep.subr.mxu0 0.0
    %621 = vmatpush1.msra.mxu0 0.0
    %622 = vmatprep.subr.mxu0 0.0
    %623 = vmatpush1.msra.mxu0 0.0
    %624 = vmatprep.subr.mxu0 0.0
    %625 = vmatpush1.msra.mxu0 0.0
    %626 = vmatprep.subr.mxu0 0.0
    %627 = vmatpush1.msra.mxu0 0.0
    %628 = vmatprep.subr.mxu0 0.0
    %629 = vmatpush1.msra.mxu0 0.0
    %630 = vmatprep.subr.mxu0 0.0
    %631 = vmatpush1.msra.mxu0 0.0
    %632 = vmatprep.subr.mxu0 0.0
    %633 = vmatpush1.msra.mxu0 0.0
    %634 = vmatprep.subr.mxu0 0.0
    %635 = vmatpush1.msra.mxu0 0.0
    %636 = vmatprep.subr.mxu0 0.0
    %637 = vmatpush1.msra.mxu0 0.0
    %638 = vmatprep.subr.mxu0 0.0
    %639 = vmatpush1.msra.mxu0 %v488
    %640 = vmatprep.subr.mxu0 0.0
    %641 = vmatpush1.msra.mxu0 %v483
    %642 = vmatprep.subr.mxu0 0.0
    %643 = vmatpush2.msra.mxu0 0.0
    %644 = vmatprep.subr.mxu0 0.0
    %645 = vmatpush2.msra.mxu0 0.0
    %646 = vmatprep.subr.mxu0 0.0
    %647 = vmatpush2.msra.mxu0 0.0
    %648 = vmatprep.subr.mxu0 0.0
    %649 = vmatpush2.msra.mxu0 0.0
    %650 = vmatprep.subr.mxu0 0.0
    %651 = vmatpush2.msra.mxu0 0.0
    %652 = vmatprep.subr.mxu0 0.0
    %653 = vmatpush2.msra.mxu0 0.0
    %654 = vmatprep.subr.mxu0 0.0
    %655 = vmatpush2.msra.mxu0 0.0
    %656 = vmatprep.subr.mxu0 0.0
    %657 = vmatpush2.msra.mxu0 0.0
    %658 = vmatprep.subr.mxu0 0.0
    %659 = vmatpush2.msra.mxu0 0.0
    %660 = vmatprep.subr.mxu0 0.0
    %661 = vmatpush2.msra.mxu0 0.0
    %662 = vmatprep.subr.mxu0 0.0
    %663 = vmatpush2.msra.mxu0 0.0
    %664 = vmatprep.subr.mxu0 0.0
    %665 = vmatpush2.msra.mxu0 0.0
    %666 = vmatprep.subr.mxu0 0.0
    %667 = vmatpush2.msra.mxu0 0.0
    %668 = vmatprep.subr.mxu0 0.0
    %669 = vmatpush2.msra.mxu0 0.0
    %670 = vmatprep.subr.mxu0 0.0
    %671 = vmatpush2.msra.mxu0 0.0
    %672 = vmatprep.subr.mxu0 0.0
    %673 = vmatpush2.msra.mxu0 0.0
    %674 = vmatprep.mubr.f32.mxu0 0.0
    %675 = vmatmul.mubr.f32.gmra.mxu0 %v605
    %v676 = vpop.f32.mrf.mxu0
    %v677 = vadd.f32 0.0, %v676
    %v678 = vpop.f32.mrf.mxu0
    %679 = vmatprep.mubr.f32.mxu0 0.0
    %680 = vmatmul.mubr.f32.gmra.mxu0 %v608
    %v681 = vpop.f32.mrf.mxu0
    %v682 = vadd.f32 0.0, %v681
    %v683 = vpop.f32.mrf.mxu0
    %684 = vdwg.mxu0
    %685 = vrot.lane.b32.xlu0 %v317, 120
    %v686 = vpop.permute.xlu0 %685
    %687 = vrot.lane.b32.xlu0 %v318, 120
    %v688 = vpop.permute.xlu0 %687
    %689 = vrot.lane.b32.xlu0 %v397, 120
    %v690 = vpop.permute.xlu0 %689
    %691 = vrot.lane.b32.xlu0 %v402, 120
    %v692 = vpop.permute.xlu0 %691
    %v693 = vsel %vm491, %v686, 0
    %v695 = vsel %vm491, %v688, 0
    %v697 = vsel %vm491, %v690, 0
    %v699 = vsel %vm491, %v692, 0
    %701 = vmatprep.subr.mxu0 0.0
    %702 = vmatpush1.xpose.msra.mxu0 0.0
    %703 = vmatprep.subr.mxu0 0.0
    %704 = vmatpush1.xpose.msra.mxu0 0.0
    %705 = vmatprep.subr.mxu0 0.0
    %706 = vmatpush1.xpose.msra.mxu0 0.0
    %707 = vmatprep.subr.mxu0 0.0
    %708 = vmatpush1.xpose.msra.mxu0 0.0
    %709 = vmatprep.subr.mxu0 0.0
    %710 = vmatpush1.xpose.msra.mxu0 0.0
    %711 = vmatprep.subr.mxu0 0.0
    %712 = vmatpush1.xpose.msra.mxu0 0.0
    %713 = vmatprep.subr.mxu0 0.0
    %714 = vmatpush1.xpose.msra.mxu0 0.0
    %715 = vmatprep.subr.mxu0 0.0
    %716 = vmatpush1.xpose.msra.mxu0 0.0
    %717 = vmatprep.subr.mxu0 0.0
    %718 = vmatpush1.xpose.msra.mxu0 0.0
    %719 = vmatprep.subr.mxu0 0.0
    %720 = vmatpush1.xpose.msra.mxu0 0.0
    %721 = vmatprep.subr.mxu0 0.0
    %722 = vmatpush1.xpose.msra.mxu0 0.0
    %723 = vmatprep.subr.mxu0 0.0
    %724 = vmatpush1.xpose.msra.mxu0 0.0
    %725 = vmatprep.subr.mxu0 0.0
    %726 = vmatpush1.xpose.msra.mxu0 0.0
    %727 = vmatprep.subr.mxu0 0.0
    %728 = vmatpush1.xpose.msra.mxu0 0.0
    %729 = vmatprep.subr.mxu0 0.0
    %730 = vmatpush1.xpose.msra.mxu0 %v699
    %731 = vmatprep.subr.mxu0 0.0
    %732 = vmatpush1.xpose.msra.mxu0 %v697
    %733 = vmatprep.subr.mxu0 0.0
    %734 = vmatpush2.xpose.msra.mxu0 0.0
    %735 = vmatprep.subr.mxu0 0.0
    %736 = vmatpush2.xpose.msra.mxu0 0.0
    %737 = vmatprep.subr.mxu0 0.0
    %738 = vmatpush2.xpose.msra.mxu0 0.0
    %739 = vmatprep.subr.mxu0 0.0
    %740 = vmatpush2.xpose.msra.mxu0 0.0
    %741 = vmatprep.subr.mxu0 0.0
    %742 = vmatpush2.xpose.msra.mxu0 0.0
    %743 = vmatprep.subr.mxu0 0.0
    %744 = vmatpush2.xpose.msra.mxu0 0.0
    %745 = vmatprep.subr.mxu0 0.0
    %746 = vmatpush2.xpose.msra.mxu0 0.0
    %747 = vmatprep.subr.mxu0 0.0
    %748 = vmatpush2.xpose.msra.mxu0 0.0
    %749 = vmatprep.subr.mxu0 0.0
    %750 = vmatpush2.xpose.msra.mxu0 0.0
    %751 = vmatprep.subr.mxu0 0.0
    %752 = vmatpush2.xpose.msra.mxu0 0.0
    %753 = vmatprep.subr.mxu0 0.0
    %754 = vmatpush2.xpose.msra.mxu0 0.0
    %755 = vmatprep.subr.mxu0 0.0
    %756 = vmatpush2.xpose.msra.mxu0 0.0
    %757 = vmatprep.subr.mxu0 0.0
    %758 = vmatpush2.xpose.msra.mxu0 0.0
    %759 = vmatprep.subr.mxu0 0.0
    %760 = vmatpush2.xpose.msra.mxu0 0.0
    %761 = vmatprep.subr.mxu0 0.0
    %762 = vmatpush2.xpose.msra.mxu0 0.0
    %763 = vmatprep.subr.mxu0 0.0
    %764 = vmatpush2.xpose.msra.mxu0 0.0
    %765 = vmatprep.mubr.f32.mxu0 0.0
    %766 = vmatmul.mubr.f32.gmra.mxu0 %v693
    %v767 = vpop.f32.mrf.mxu0
    %v768 = vadd.f32 0.0, %v767
    %v769 = vpop.f32.mrf.mxu0
    %770 = vmatprep.mubr.f32.mxu0 0.0
    %771 = vmatmul.mubr.f32.gmra.mxu0 %v695
    %v772 = vpop.f32.mrf.mxu0
    %v773 = vadd.f32 0.0, %v772
    %v774 = vpop.f32.mrf.mxu0
    %775 = vdwg.mxu0
    %v776 = vsel %vm163, %v768, -10000.0
    %v777 = vsel %vm164, %v773, -10000.0
    %v778 = vsel %vm581, %v776, -inf
    %779 = vmax.xlane.f32.xlu0 %v778
    %v780 = vpop.xlane.xlu0 %779
    %v781 = vsel %vm581, %v777, -inf
    %782 = vmax.xlane.f32.xlu0 %v781
    %v783 = vpop.xlane.xlu0 %782
    %v784 = vsub.f32 %v776, %v780
    %v785 = vsub.f32 %v777, %v783
    %v786 = vmul.f32 %v784, 1.442695
    %v787 = vpow.pop %v786
    %v788 = vmul.f32 %v785, 1.442695
    %v789 = vpow.pop %v788
    %v790 = vsel %vm581, %v787, 0.0
    %791 = vadd.xlane.f32.xlu0 %v790
    %v792 = vpop.xlane.xlu0 %791
    %v793 = vsel %vm581, %v789, 0.0
    %794 = vadd.xlane.f32.xlu0 %v793
    %v795 = vpop.xlane.xlu0 %794
    %v796 = vrcp.pop %v792
    %v797 = vmul.f32 %v787, %v796
    %v798 = vrcp.pop %v795
    %v799 = vmul.f32 %v789, %v798
    %802 = vrot.lane.b32.xlu0 %v483, 120
    %v803 = vpop.permute.xlu0 %802
    %804 = vrot.lane.b32.xlu0 %v488, 120
    %v805 = vpop.permute.xlu0 %804
    %v809 = vsel %vm581, %v797, 0
    %v812 = vsel %vm581, %v799, 0
    %814 = vmatprep.subr.mxu0 0.0
    %815 = vmatpush1.msra.mxu0 0.0
    %816 = vmatprep.subr.mxu0 0.0
    %817 = vmatpush1.msra.mxu0 0.0
    %818 = vmatprep.subr.mxu0 0.0
    %819 = vmatpush1.msra.mxu0 0.0
    %820 = vmatprep.subr.mxu0 0.0
    %821 = vmatpush1.msra.mxu0 0.0
    %822 = vmatprep.subr.mxu0 0.0
    %823 = vmatpush1.msra.mxu0 0.0
    %824 = vmatprep.subr.mxu0 0.0
    %825 = vmatpush1.msra.mxu0 0.0
    %826 = vmatprep.subr.mxu0 0.0
    %827 = vmatpush1.msra.mxu0 0.0
    %828 = vmatprep.subr.mxu0 0.0
    %829 = vmatpush1.msra.mxu0 0.0
    %830 = vmatprep.subr.mxu0 0.0
    %831 = vmatpush1.msra.mxu0 0.0
    %832 = vmatprep.subr.mxu0 0.0
    %833 = vmatpush1.msra.mxu0 0.0
    %834 = vmatprep.subr.mxu0 0.0
    %835 = vmatpush1.msra.mxu0 0.0
    %836 = vmatprep.subr.mxu0 0.0
    %837 = vmatpush1.msra.mxu0 0.0
    %838 = vmatprep.subr.mxu0 0.0
    %839 = vmatpush1.msra.mxu0 0.0
    %840 = vmatprep.subr.mxu0 0.0
    %841 = vmatpush1.msra.mxu0 0.0
    %842 = vmatprep.subr.mxu0 0.0
    %843 = vmatpush1.msra.mxu0 %v805
    %844 = vmatprep.subr.mxu0 0.0
    %845 = vmatpush1.msra.mxu0 %v803
    %846 = vmatprep.subr.mxu0 0.0
    %847 = vmatpush2.msra.mxu0 0.0
    %848 = vmatprep.subr.mxu0 0.0
    %849 = vmatpush2.msra.mxu0 0.0
    %850 = vmatprep.subr.mxu0 0.0
    %851 = vmatpush2.msra.mxu0 0.0
    %852 = vmatprep.subr.mxu0 0.0
    %853 = vmatpush2.msra.mxu0 0.0
    %854 = vmatprep.subr.mxu0 0.0
    %855 = vmatpush2.msra.mxu0 0.0
    %856 = vmatprep.subr.mxu0 0.0
    %857 = vmatpush2.msra.mxu0 0.0
    %858 = vmatprep.subr.mxu0 0.0
    %859 = vmatpush2.msra.mxu0 0.0
    %860 = vmatprep.subr.mxu0 0.0
    %861 = vmatpush2.msra.mxu0 0.0
    %862 = vmatprep.subr.mxu0 0.0
    %863 = vmatpush2.msra.mxu0 0.0
    %864 = vmatprep.subr.mxu0 0.0
    %865 = vmatpush2.msra.mxu0 0.0
    %866 = vmatprep.subr.mxu0 0.0
    %867 = vmatpush2.msra.mxu0 0.0
    %868 = vmatprep.subr.mxu0 0.0
    %869 = vmatpush2.msra.mxu0 0.0
    %870 = vmatprep.subr.mxu0 0.0
    %871 = vmatpush2.msra.mxu0 0.0
    %872 = vmatprep.subr.mxu0 0.0
    %873 = vmatpush2.msra.mxu0 0.0
    %874 = vmatprep.subr.mxu0 0.0
    %875 = vmatpush2.msra.mxu0 0.0
    %876 = vmatprep.subr.mxu0 0.0
    %877 = vmatpush2.msra.mxu0 0.0
    %878 = vmatprep.mubr.f32.mxu0 0.0
    %879 = vmatmul.mubr.f32.gmra.mxu0 %v809
    %v880 = vpop.f32.mrf.mxu0
    %v881 = vadd.f32 0.0, %v880
    %v882 = vpop.f32.mrf.mxu0
    %883 = vmatprep.mubr.f32.mxu0 0.0
    %884 = vmatmul.mubr.f32.gmra.mxu0 %v812
    %v885 = vpop.f32.mrf.mxu0
    %v886 = vadd.f32 0.0, %v885
    %v887 = vpop.f32.mrf.mxu0
    %888 = vdwg.mxu0
    %889 = vrot.lane.b32.xlu0 %v317, 112
    %v890 = vpop.permute.xlu0 %889
    %891 = vrot.lane.b32.xlu0 %v318, 112
    %v892 = vpop.permute.xlu0 %891
    %893 = vrot.lane.b32.xlu0 %v397, 112
    %v894 = vpop.permute.xlu0 %893
    %895 = vrot.lane.b32.xlu0 %v402, 112
    %v896 = vpop.permute.xlu0 %895
    %v897 = vsel %vm491, %v890, 0
    %v899 = vsel %vm491, %v892, 0
    %v901 = vsel %vm491, %v894, 0
    %v903 = vsel %vm491, %v896, 0
    %905 = vmatprep.subr.mxu0 0.0
    %906 = vmatpush1.xpose.msra.mxu0 0.0
    %907 = vmatprep.subr.mxu0 0.0
    %908 = vmatpush1.xpose.msra.mxu0 0.0
    %909 = vmatprep.subr.mxu0 0.0
    %910 = vmatpush1.xpose.msra.mxu0 0.0
    %911 = vmatprep.subr.mxu0 0.0
    %912 = vmatpush1.xpose.msra.mxu0 0.0
    %913 = vmatprep.subr.mxu0 0.0
    %914 = vmatpush1.xpose.msra.mxu0 0.0
    %915 = vmatprep.subr.mxu0 0.0
    %916 = vmatpush1.xpose.msra.mxu0 0.0
    %917 = vmatprep.subr.mxu0 0.0
    %918 = vmatpush1.xpose.msra.mxu0 0.0
    %919 = vmatprep.subr.mxu0 0.0
    %920 = vmatpush1.xpose.msra.mxu0 0.0
    %921 = vmatprep.subr.mxu0 0.0
    %922 = vmatpush1.xpose.msra.mxu0 0.0
    %923 = vmatprep.subr.mxu0 0.0
    %924 = vmatpush1.xpose.msra.mxu0 0.0
    %925 = vmatprep.subr.mxu0 0.0
    %926 = vmatpush1.xpose.msra.mxu0 0.0
    %927 = vmatprep.subr.mxu0 0.0
    %928 = vmatpush1.xpose.msra.mxu0 0.0
    %929 = vmatprep.subr.mxu0 0.0
    %930 = vmatpush1.xpose.msra.mxu0 0.0
    %931 = vmatprep.subr.mxu0 0.0
    %932 = vmatpush1.xpose.msra.mxu0 0.0
    %933 = vmatprep.subr.mxu0 0.0
    %934 = vmatpush1.xpose.msra.mxu0 %v903
    %935 = vmatprep.subr.mxu0 0.0
    %936 = vmatpush1.xpose.msra.mxu0 %v901
    %937 = vmatprep.subr.mxu0 0.0
    %938 = vmatpush2.xpose.msra.mxu0 0.0
    %939 = vmatprep.subr.mxu0 0.0
    %940 = vmatpush2.xpose.msra.mxu0 0.0
    %941 = vmatprep.subr.mxu0 0.0
    %942 = vmatpush2.xpose.msra.mxu0 0.0
    %943 = vmatprep.subr.mxu0 0.0
    %944 = vmatpush2.xpose.msra.mxu0 0.0
    %945 = vmatprep.subr.mxu0 0.0
    %946 = vmatpush2.xpose.msra.mxu0 0.0
    %947 = vmatprep.subr.mxu0 0.0
    %948 = vmatpush2.xpose.msra.mxu0 0.0
    %949 = vmatprep.subr.mxu0 0.0
    %950 = vmatpush2.xpose.msra.mxu0 0.0
    %951 = vmatprep.subr.mxu0 0.0
    %952 = vmatpush2.xpose.msra.mxu0 0.0
    %953 = vmatprep.subr.mxu0 0.0
    %954 = vmatpush2.xpose.msra.mxu0 0.0
    %955 = vmatprep.subr.mxu0 0.0
    %956 = vmatpush2.xpose.msra.mxu0 0.0
    %957 = vmatprep.subr.mxu0 0.0
    %958 = vmatpush2.xpose.msra.mxu0 0.0
    %959 = vmatprep.subr.mxu0 0.0
    %960 = vmatpush2.xpose.msra.mxu0 0.0
    %961 = vmatprep.subr.mxu0 0.0
    %962 = vmatpush2.xpose.msra.mxu0 0.0
    %963 = vmatprep.subr.mxu0 0.0
    %964 = vmatpush2.xpose.msra.mxu0 0.0
    %965 = vmatprep.subr.mxu0 0.0
    %966 = vmatpush2.xpose.msra.mxu0 0.0
    %967 = vmatprep.subr.mxu0 0.0
    %968 = vmatpush2.xpose.msra.mxu0 0.0
    %969 = vmatprep.mubr.f32.mxu0 0.0
    %970 = vmatmul.mubr.f32.gmra.mxu0 %v897
    %v971 = vpop.f32.mrf.mxu0
    %v972 = vadd.f32 0.0, %v971
    %v973 = vpop.f32.mrf.mxu0
    %974 = vmatprep.mubr.f32.mxu0 0.0
    %975 = vmatmul.mubr.f32.gmra.mxu0 %v899
    %v976 = vpop.f32.mrf.mxu0
    %v977 = vadd.f32 0.0, %v976
    %v978 = vpop.f32.mrf.mxu0
    %979 = vdwg.mxu0
    %v980 = vsel %vm163, %v972, -10000.0
    %v981 = vsel %vm164, %v977, -10000.0
    %v982 = vsel %vm581, %v980, -inf
    %983 = vmax.xlane.f32.xlu0 %v982
    %v984 = vpop.xlane.xlu0 %983
    %v985 = vsel %vm581, %v981, -inf
    %986 = vmax.xlane.f32.xlu0 %v985
    %v987 = vpop.xlane.xlu0 %986
    %v988 = vsub.f32 %v980, %v984
    %v989 = vsub.f32 %v981, %v987
    %v990 = vmul.f32 %v988, 1.442695
    %v991 = vpow.pop %v990
    %v992 = vmul.f32 %v989, 1.442695
    %v993 = vpow.pop %v992
    %v994 = vsel %vm581, %v991, 0.0
    %995 = vadd.xlane.f32.xlu0 %v994
    %v996 = vpop.xlane.xlu0 %995
    %v997 = vsel %vm581, %v993, 0.0
    %998 = vadd.xlane.f32.xlu0 %v997
    %v999 = vpop.xlane.xlu0 %998
    %v1000 = vrcp.pop %v996
    %v1001 = vmul.f32 %v991, %v1000
    %v1002 = vrcp.pop %v999
    %v1003 = vmul.f32 %v993, %v1002
    %1004 = vrot.lane.b32.xlu0 %v483, 112
    %v1005 = vpop.permute.xlu0 %1004
    %1006 = vrot.lane.b32.xlu0 %v488, 112
    %v1007 = vpop.permute.xlu0 %1006
    %v1011 = vsel %vm581, %v1001, 0
    %v1014 = vsel %vm581, %v1003, 0
    %1016 = vmatprep.subr.mxu0 0.0
    %1017 = vmatpush1.msra.mxu0 0.0
    %1018 = vmatprep.subr.mxu0 0.0
    %1019 = vmatpush1.msra.mxu0 0.0
    %1020 = vmatprep.subr.mxu0 0.0
    %1021 = vmatpush1.msra.mxu0 0.0
    %1022 = vmatprep.subr.mxu0 0.0
    %1023 = vmatpush1.msra.mxu0 0.0
    %1024 = vmatprep.subr.mxu0 0.0
    %1025 = vmatpush1.msra.mxu0 0.0
    %1026 = vmatprep.subr.mxu0 0.0
    %1027 = vmatpush1.msra.mxu0 0.0
    %1028 = vmatprep.subr.mxu0 0.0
    %1029 = vmatpush1.msra.mxu0 0.0
    %1030 = vmatprep.subr.mxu0 0.0
    %1031 = vmatpush1.msra.mxu0 0.0
    %1032 = vmatprep.subr.mxu0 0.0
    %1033 = vmatpush1.msra.mxu0 0.0
    %1034 = vmatprep.subr.mxu0 0.0
    %1035 = vmatpush1.msra.mxu0 0.0
    %1036 = vmatprep.subr.mxu0 0.0
    %1037 = vmatpush1.msra.mxu0 0.0
    %1038 = vmatprep.subr.mxu0 0.0
    %1039 = vmatpush1.msra.mxu0 0.0
    %1040 = vmatprep.subr.mxu0 0.0
    %1041 = vmatpush1.msra.mxu0 0.0
    %1042 = vmatprep.subr.mxu0 0.0
    %1043 = vmatpush1.msra.mxu0 0.0
    %1044 = vmatprep.subr.mxu0 0.0
    %1045 = vmatpush1.msra.mxu0 %v1007
    %1046 = vmatprep.subr.mxu0 0.0
    %1047 = vmatpush1.msra.mxu0 %v1005
    %1048 = vmatprep.subr.mxu0 0.0
    %1049 = vmatpush2.msra.mxu0 0.0
    %1050 = vmatprep.subr.mxu0 0.0
    %1051 = vmatpush2.msra.mxu0 0.0
    %1052 = vmatprep.subr.mxu0 0.0
    %1053 = vmatpush2.msra.mxu0 0.0
    %1054 = vmatprep.subr.mxu0 0.0
    %1055 = vmatpush2.msra.mxu0 0.0
    %1056 = vmatprep.subr.mxu0 0.0
    %1057 = vmatpush2.msra.mxu0 0.0
    %1058 = vmatprep.subr.mxu0 0.0
    %1059 = vmatpush2.msra.mxu0 0.0
    %1060 = vmatprep.subr.mxu0 0.0
    %1061 = vmatpush2.msra.mxu0 0.0
    %1062 = vmatprep.subr.mxu0 0.0
    %1063 = vmatpush2.msra.mxu0 0.0
    %1064 = vmatprep.subr.mxu0 0.0
    %1065 = vmatpush2.msra.mxu0 0.0
    %1066 = vmatprep.subr.mxu0 0.0
    %1067 = vmatpush2.msra.mxu0 0.0
    %1068 = vmatprep.subr.mxu0 0.0
    %1069 = vmatpush2.msra.mxu0 0.0
    %1070 = vmatprep.subr.mxu0 0.0
    %1071 = vmatpush2.msra.mxu0 0.0
    %1072 = vmatprep.subr.mxu0 0.0
    %1073 = vmatpush2.msra.mxu0 0.0
    %1074 = vmatprep.subr.mxu0 0.0
    %1075 = vmatpush2.msra.mxu0 0.0
    %1076 = vmatprep.subr.mxu0 0.0
    %1077 = vmatpush2.msra.mxu0 0.0
    %1078 = vmatprep.subr.mxu0 0.0
    %1079 = vmatpush2.msra.mxu0 0.0
    %1080 = vmatprep.mubr.f32.mxu0 0.0
    %1081 = vmatmul.mubr.f32.gmra.mxu0 %v1011
    %v1082 = vpop.f32.mrf.mxu0
    %v1083 = vadd.f32 0.0, %v1082
    %v1084 = vpop.f32.mrf.mxu0
    %1085 = vmatprep.mubr.f32.mxu0 0.0
    %1086 = vmatmul.mubr.f32.gmra.mxu0 %v1014
    %v1087 = vpop.f32.mrf.mxu0
    %v1088 = vadd.f32 0.0, %v1087
    %v1089 = vpop.f32.mrf.mxu0
    %1090 = vdwg.mxu0
    %1091 = vrot.lane.b32.xlu0 %v317, 104
    %v1092 = vpop.permute.xlu0 %1091
    %1093 = vrot.lane.b32.xlu0 %v318, 104
    %v1094 = vpop.permute.xlu0 %1093
    %1095 = vrot.lane.b32.xlu0 %v397, 104
    %v1096 = vpop.permute.xlu0 %1095
    %1097 = vrot.lane.b32.xlu0 %v402, 104
    %v1098 = vpop.permute.xlu0 %1097
    %v1099 = vsel %vm491, %v1092, 0
    %v1101 = vsel %vm491, %v1094, 0
    %v1103 = vsel %vm491, %v1096, 0
    %v1105 = vsel %vm491, %v1098, 0
    %1107 = vmatprep.subr.mxu0 0.0
    %1108 = vmatpush1.xpose.msra.mxu0 0.0
    %1109 = vmatprep.subr.mxu0 0.0
    %1110 = vmatpush1.xpose.msra.mxu0 0.0
    %1111 = vmatprep.subr.mxu0 0.0
    %1112 = vmatpush1.xpose.msra.mxu0 0.0
    %1113 = vmatprep.subr.mxu0 0.0
    %1114 = vmatpush1.xpose.msra.mxu0 0.0
    %1115 = vmatprep.subr.mxu0 0.0
    %1116 = vmatpush1.xpose.msra.mxu0 0.0
    %1117 = vmatprep.subr.mxu0 0.0
    %1118 = vmatpush1.xpose.msra.mxu0 0.0
    %1119 = vmatprep.subr.mxu0 0.0
    %1120 = vmatpush1.xpose.msra.mxu0 0.0
    %1121 = vmatprep.subr.mxu0 0.0
    %1122 = vmatpush1.xpose.msra.mxu0 0.0
    %1123 = vmatprep.subr.mxu0 0.0
    %1124 = vmatpush1.xpose.msra.mxu0 0.0
    %1125 = vmatprep.subr.mxu0 0.0
    %1126 = vmatpush1.xpose.msra.mxu0 0.0
    %1127 = vmatprep.subr.mxu0 0.0
    %1128 = vmatpush1.xpose.msra.mxu0 0.0
    %1129 = vmatprep.subr.mxu0 0.0
    %1130 = vmatpush1.xpose.msra.mxu0 0.0
    %1131 = vmatprep.subr.mxu0 0.0
    %1132 = vmatpush1.xpose.msra.mxu0 0.0
    %1133 = vmatprep.subr.mxu0 0.0
    %1134 = vmatpush1.xpose.msra.mxu0 0.0
    %1135 = vmatprep.subr.mxu0 0.0
    %1136 = vmatpush1.xpose.msra.mxu0 %v1105
    %1137 = vmatprep.subr.mxu0 0.0
    %1138 = vmatpush1.xpose.msra.mxu0 %v1103
    %1139 = vmatprep.subr.mxu0 0.0
    %1140 = vmatpush2.xpose.msra.mxu0 0.0
    %1141 = vmatprep.subr.mxu0 0.0
    %1142 = vmatpush2.xpose.msra.mxu0 0.0
    %1143 = vmatprep.subr.mxu0 0.0
    %1144 = vmatpush2.xpose.msra.mxu0 0.0
    %1145 = vmatprep.subr.mxu0 0.0
    %1146 = vmatpush2.xpose.msra.mxu0 0.0
    %1147 = vmatprep.subr.mxu0 0.0
    %1148 = vmatpush2.xpose.msra.mxu0 0.0
    %1149 = vmatprep.subr.mxu0 0.0
    %1150 = vmatpush2.xpose.msra.mxu0 0.0
    %1151 = vmatprep.subr.mxu0 0.0
    %1152 = vmatpush2.xpose.msra.mxu0 0.0
    %1153 = vmatprep.subr.mxu0 0.0
    %1154 = vmatpush2.xpose.msra.mxu0 0.0
    %1155 = vmatprep.subr.mxu0 0.0
    %1156 = vmatpush2.xpose.msra.mxu0 0.0
    %1157 = vmatprep.subr.mxu0 0.0
    %1158 = vmatpush2.xpose.msra.mxu0 0.0
    %1159 = vmatprep.subr.mxu0 0.0
    %1160 = vmatpush2.xpose.msra.mxu0 0.0
    %1161 = vmatprep.subr.mxu0 0.0
    %1162 = vmatpush2.xpose.msra.mxu0 0.0
    %1163 = vmatprep.subr.mxu0 0.0
    %1164 = vmatpush2.xpose.msra.mxu0 0.0
    %1165 = vmatprep.subr.mxu0 0.0
    %1166 = vmatpush2.xpose.msra.mxu0 0.0
    %1167 = vmatprep.subr.mxu0 0.0
    %1168 = vmatpush2.xpose.msra.mxu0 0.0
    %1169 = vmatprep.subr.mxu0 0.0
    %1170 = vmatpush2.xpose.msra.mxu0 0.0
    %1171 = vmatprep.mubr.f32.mxu0 0.0
    %1172 = vmatmul.mubr.f32.gmra.mxu0 %v1099
    %v1173 = vpop.f32.mrf.mxu0
    %v1174 = vadd.f32 0.0, %v1173
    %v1175 = vpop.f32.mrf.mxu0
    %1176 = vmatprep.mubr.f32.mxu0 0.0
    %1177 = vmatmul.mubr.f32.gmra.mxu0 %v1101
    %v1178 = vpop.f32.mrf.mxu0
    %v1179 = vadd.f32 0.0, %v1178
    %v1180 = vpop.f32.mrf.mxu0
    %1181 = vdwg.mxu0
    %v1182 = vsel %vm163, %v1174, -10000.0
    %v1183 = vsel %vm164, %v1179, -10000.0
    %v1184 = vsel %vm581, %v1182, -inf
    %1185 = vmax.xlane.f32.xlu0 %v1184
    %v1186 = vpop.xlane.xlu0 %1185
    %v1187 = vsel %vm581, %v1183, -inf
    %1188 = vmax.xlane.f32.xlu0 %v1187
    %v1189 = vpop.xlane.xlu0 %1188
    %v1190 = vsub.f32 %v1182, %v1186
    %v1191 = vsub.f32 %v1183, %v1189
    %v1192 = vmul.f32 %v1190, 1.442695
    %v1193 = vpow.pop %v1192
    %v1194 = vmul.f32 %v1191, 1.442695
    %v1195 = vpow.pop %v1194
    %v1196 = vsel %vm581, %v1193, 0.0
    %1197 = vadd.xlane.f32.xlu0 %v1196
    %v1198 = vpop.xlane.xlu0 %1197
    %v1199 = vsel %vm581, %v1195, 0.0
    %1200 = vadd.xlane.f32.xlu0 %v1199
    %v1201 = vpop.xlane.xlu0 %1200
    %v1202 = vrcp.pop %v1198
    %v1203 = vmul.f32 %v1193, %v1202
    %v1204 = vrcp.pop %v1201
    %v1205 = vmul.f32 %v1195, %v1204
    %1206 = vrot.lane.b32.xlu0 %v483, 104
    %v1207 = vpop.permute.xlu0 %1206
    %1208 = vrot.lane.b32.xlu0 %v488, 104
    %v1209 = vpop.permute.xlu0 %1208
    %v1213 = vsel %vm581, %v1203, 0
    %v1216 = vsel %vm581, %v1205, 0
    %1218 = vmatprep.subr.mxu0 0.0
    %1219 = vmatpush1.msra.mxu0 0.0
    %1220 = vmatprep.subr.mxu0 0.0
    %1221 = vmatpush1.msra.mxu0 0.0
    %1222 = vmatprep.subr.mxu0 0.0
    %1223 = vmatpush1.msra.mxu0 0.0
    %1224 = vmatprep.subr.mxu0 0.0
    %1225 = vmatpush1.msra.mxu0 0.0
    %1226 = vmatprep.subr.mxu0 0.0
    %1227 = vmatpush1.msra.mxu0 0.0
    %1228 = vmatprep.subr.mxu0 0.0
    %1229 = vmatpush1.msra.mxu0 0.0
    %1230 = vmatprep.subr.mxu0 0.0
    %1231 = vmatpush1.msra.mxu0 0.0
    %1232 = vmatprep.subr.mxu0 0.0
    %1233 = vmatpush1.msra.mxu0 0.0
    %1234 = vmatprep.subr.mxu0 0.0
    %1235 = vmatpush1.msra.mxu0 0.0
    %1236 = vmatprep.subr.mxu0 0.0
    %1237 = vmatpush1.msra.mxu0 0.0
    %1238 = vmatprep.subr.mxu0 0.0
    %1239 = vmatpush1.msra.mxu0 0.0
    %1240 = vmatprep.subr.mxu0 0.0
    %1241 = vmatpush1.msra.mxu0 0.0
    %1242 = vmatprep.subr.mxu0 0.0
    %1243 = vmatpush1.msra.mxu0 0.0
    %1244 = vmatprep.subr.mxu0 0.0
    %1245 = vmatpush1.msra.mxu0 0.0
    %1246 = vmatprep.subr.mxu0 0.0
    %1247 = vmatpush1.msra.mxu0 %v1209
    %1248 = vmatprep.subr.mxu0 0.0
    %1249 = vmatpush1.msra.mxu0 %v1207
    %1250 = vmatprep.subr.mxu0 0.0
    %1251 = vmatpush2.msra.mxu0 0.0
    %1252 = vmatprep.subr.mxu0 0.0
    %1253 = vmatpush2.msra.mxu0 0.0
    %1254 = vmatprep.subr.mxu0 0.0
    %1255 = vmatpush2.msra.mxu0 0.0
    %1256 = vmatprep.subr.mxu0 0.0
    %1257 = vmatpush2.msra.mxu0 0.0
    %1258 = vmatprep.subr.mxu0 0.0
    %1259 = vmatpush2.msra.mxu0 0.0
    %1260 = vmatprep.subr.mxu0 0.0
    %1261 = vmatpush2.msra.mxu0 0.0
    %1262 = vmatprep.subr.mxu0 0.0
    %1263 = vmatpush2.msra.mxu0 0.0
    %1264 = vmatprep.subr.mxu0 0.0
    %1265 = vmatpush2.msra.mxu0 0.0
    %1266 = vmatprep.subr.mxu0 0.0
    %1267 = vmatpush2.msra.mxu0 0.0
    %1268 = vmatprep.subr.mxu0 0.0
    %1269 = vmatpush2.msra.mxu0 0.0
    %1270 = vmatprep.subr.mxu0 0.0
    %1271 = vmatpush2.msra.mxu0 0.0
    %1272 = vmatprep.subr.mxu0 0.0
    %1273 = vmatpush2.msra.mxu0 0.0
    %1274 = vmatprep.subr.mxu0 0.0
    %1275 = vmatpush2.msra.mxu0 0.0
    %1276 = vmatprep.subr.mxu0 0.0
    %1277 = vmatpush2.msra.mxu0 0.0
    %1278 = vmatprep.subr.mxu0 0.0
    %1279 = vmatpush2.msra.mxu0 0.0
    %1280 = vmatprep.subr.mxu0 0.0
    %1281 = vmatpush2.msra.mxu0 0.0
    %1282 = vmatprep.mubr.f32.mxu0 0.0
    %1283 = vmatmul.mubr.f32.gmra.mxu0 %v1213
    %v1284 = vpop.f32.mrf.mxu0
    %v1285 = vadd.f32 0.0, %v1284
    %v1286 = vpop.f32.mrf.mxu0
    %1287 = vmatprep.mubr.f32.mxu0 0.0
    %1288 = vmatmul.mubr.f32.gmra.mxu0 %v1216
    %v1289 = vpop.f32.mrf.mxu0
    %v1290 = vadd.f32 0.0, %v1289
    %v1291 = vpop.f32.mrf.mxu0
    %1292 = vdwg.mxu0
    %1295 = vrot.lane.b32.xlu0 %v881, 8
    %v1296 = vpop.permute.xlu0 %1295
    %1297 = vrot.lane.b32.xlu0 %v886, 8
    %v1298 = vpop.permute.xlu0 %1297
    %1303 = vrot.lane.b32.xlu0 %v1083, 16
    %v1304 = vpop.permute.xlu0 %1303
    %1305 = vrot.lane.b32.xlu0 %v1088, 16
    %v1306 = vpop.permute.xlu0 %1305
    %1311 = vrot.lane.b32.xlu0 %v1285, 24
    %v1312 = vpop.permute.xlu0 %1311
    %1313 = vrot.lane.b32.xlu0 %v1290, 24
    %v1314 = vpop.permute.xlu0 %1313
    %v1317 = vsel %vm491, %v677, %v1296
    %v1318 = vsel %vm491, %v682, %v1298
    %v1319 = vsel %vm581, %v1317, %v1304
    %v1320 = vsel %vm581, %v1318, %v1306
    %vm1321 = vcmask 195584
    %v1322 = vsel %vm1321, %v1319, %v1312
    %v1323 = vsel %vm1321, %v1320, %v1314
    %v1324 = vld [vmem:[%s21] sm:$0xff]
    %v1325 = vld [vmem:[%s21 + $0x8] sm:$0xff]
    %v1326 = vld [vmem:[%s21 + $0x10] sm:$0xff]
    %v1327 = vld [vmem:[%s21 + $0x18] sm:$0xff]
    %v1328 = vld [vmem:[%s23] sm:$0x1]
    %v1330 = vlaneseq
    %v1331 = vshrl.u32 %v1330, 7
    %v1332 = vsub.s32 0, %v1331
    %v1333 = vrot.slane %v1328, %v1332
    %v1336 = vsel %vm167, %v1322, 0
    %v1339 = vsel %vm167, %v1323, 0
    %1341 = vmatprep.subr.mxu0 0.0
    %1342 = vmatpush1.msra.mxu0 0.0
    %1343 = vmatprep.subr.mxu0 0.0
    %1344 = vmatpush1.msra.mxu0 0.0
    %1345 = vmatprep.subr.mxu0 0.0
    %1346 = vmatpush1.msra.mxu0 0.0
    %1347 = vmatprep.subr.mxu0 0.0
    %1348 = vmatpush1.msra.mxu0 0.0
    %1349 = vmatprep.subr.mxu0 0.0
    %1350 = vmatpush1.msra.mxu0 0.0
    %1351 = vmatprep.subr.mxu0 0.0
    %1352 = vmatpush1.msra.mxu0 0.0
    %1353 = vmatprep.subr.mxu0 0.0
    %1354 = vmatpush1.msra.mxu0 0.0
    %1355 = vmatprep.subr.mxu0 0.0
    %1356 = vmatpush1.msra.mxu0 0.0
    %1357 = vmatprep.subr.mxu0 0.0
    %1358 = vmatpush1.msra.mxu0 0.0
    %1359 = vmatprep.subr.mxu0 0.0
    %1360 = vmatpush1.msra.mxu0 0.0
    %1361 = vmatprep.subr.mxu0 0.0
    %1362 = vmatpush1.msra.mxu0 0.0
    %1363 = vmatprep.subr.mxu0 0.0
    %1364 = vmatpush1.msra.mxu0 0.0
    %1365 = vmatprep.subr.mxu0 0.0
    %1366 = vmatpush1.msra.mxu0 %v1327
    %1367 = vmatprep.subr.mxu0 0.0
    %1368 = vmatpush1.msra.mxu0 %v1326
    %1369 = vmatprep.subr.mxu0 0.0
    %1370 = vmatpush1.msra.mxu0 %v1325
    %1371 = vmatprep.subr.mxu0 0.0
    %1372 = vmatpush1.msra.mxu0 %v1324
    %1373 = vmatprep.subr.mxu0 0.0
    %1374 = vmatpush2.msra.mxu0 0.0
    %1375 = vmatprep.subr.mxu0 0.0
    %1376 = vmatpush2.msra.mxu0 0.0
    %1377 = vmatprep.subr.mxu0 0.0
    %1378 = vmatpush2.msra.mxu0 0.0
    %1379 = vmatprep.subr.mxu0 0.0
    %1380 = vmatpush2.msra.mxu0 0.0
    %1381 = vmatprep.subr.mxu0 0.0
    %1382 = vmatpush2.msra.mxu0 0.0
    %1383 = vmatprep.subr.mxu0 0.0
    %1384 = vmatpush2.msra.mxu0 0.0
    %1385 = vmatprep.subr.mxu0 0.0
    %1386 = vmatpush2.msra.mxu0 0.0
    %1387 = vmatprep.subr.mxu0 0.0
    %1388 = vmatpush2.msra.mxu0 0.0
    %1389 = vmatprep.subr.mxu0 0.0
    %1390 = vmatpush2.msra.mxu0 0.0
    %1391 = vmatprep.subr.mxu0 0.0
    %1392 = vmatpush2.msra.mxu0 0.0
    %1393 = vmatprep.subr.mxu0 0.0
    %1394 = vmatpush2.msra.mxu0 0.0
    %1395 = vmatprep.subr.mxu0 0.0
    %1396 = vmatpush2.msra.mxu0 0.0
    %1397 = vmatprep.subr.mxu0 0.0
    %1398 = vmatpush2.msra.mxu0 0.0
    %1399 = vmatprep.subr.mxu0 0.0
    %1400 = vmatpush2.msra.mxu0 0.0
    %1401 = vmatprep.subr.mxu0 0.0
    %1402 = vmatpush2.msra.mxu0 0.0
    %1403 = vmatprep.subr.mxu0 0.0
    %1404 = vmatpush2.msra.mxu0 0.0
    %1405 = vmatprep.mubr.f32.mxu0 0.0
    %1406 = vmatmul.mubr.f32.gmra.mxu0 %v1336
    %v1407 = vpop.f32.mrf.mxu0
    %v1408 = vadd.f32 %v1333, %v1407
    %v1409 = vpop.f32.mrf.mxu0
    %1410 = vmatprep.mubr.f32.mxu0 0.0
    %1411 = vmatmul.mubr.f32.gmra.mxu0 %v1339
    %v1412 = vpop.f32.mrf.mxu0
    %v1413 = vadd.f32 %v1333, %v1412
    %v1414 = vpop.f32.mrf.mxu0
    %1415 = vdwg.mxu0
    %v1416 = vadd.f32 %v159, %v1408
    %v1417 = vadd.f32 %v160, %v1413
    %v1418 = vld [vmem:[%s25] sm:$0x1]
    %v1419 = vld [vmem:[%s27] sm:$0x1]
    %v1420 = vsel %vm167, %v1416, 0.0
    %1421 = vadd.xlane.f32.xlu0 %v1420
    %v1422 = vpop.xlane.xlu0 %1421
    %v1423 = vsel %vm167, %v1417, 0.0
    %1424 = vadd.xlane.f32.xlu0 %v1423
    %v1425 = vpop.xlane.xlu0 %1424
    %v1426 = vmul.f32 %v1422, %v174
    %v1427 = vmul.f32 %v1425, %v174
    %v1428 = vsub.f32 %v1416, %v1426
    %v1429 = vsub.f32 %v1417, %v1427
    %v1430 = vmul.f32 %v1428, %v1428
    %v1431 = vmul.f32 %v1429, %v1429
    %v1432 = vsel %vm167, %v1430, 0.0
    %1433 = vadd.xlane.f32.xlu0 %v1432
    %v1434 = vpop.xlane.xlu0 %1433
    %v1435 = vsel %vm167, %v1431, 0.0
    %1436 = vadd.xlane.f32.xlu0 %v1435
    %v1437 = vpop.xlane.xlu0 %1436
    %v1438 = vmul.f32 %v1434, %v174
    %v1439 = vmul.f32 %v1437, %v174
    %v1440 = vadd.f32 %v1438, 1e-05
    %v1441 = vadd.f32 %v1439, 1e-05
    %v1442 = vrsqrt.pop %v1440
    %v1443 = vmul.f32 %v1440, %v1442
    %vm1444 = vcmp.eq.f32.partialorder %v1440, inf
    %v1445 = vsel %vm1444, %v1440, %v1443
    %vm1446 = vcmp.eq.f32.partialorder %v1440, 0.0
    %v1447 = vand.u32 %v1440, 2147483648
    %v1448 = vsel %vm1446, %v1447, %v1445
    %v1449 = vrsqrt.pop %v1441
    %v1450 = vmul.f32 %v1441, %v1449
    %vm1451 = vcmp.eq.f32.partialorder %v1441, inf
    %v1452 = vsel %vm1451, %v1441, %v1450
    %vm1453 = vcmp.eq.f32.partialorder %v1441, 0.0
    %v1454 = vand.u32 %v1441, 2147483648
    %v1455 = vsel %vm1453, %v1454, %v1452
    %v1456 = vrcp.pop %v1448
    %v1457 = vmul.f32 %v1428, %v1456
    %v1458 = vrcp.pop %v1455
    %v1459 = vmul.f32 %v1429, %v1458
    %v1461 = vlaneseq
    %v1462 = vshrl.u32 %v1461, 7
    %v1463 = vsub.s32 0, %v1462
    %v1464 = vrot.slane %v1418, %v1463
    %v1466 = vmul.f32 %v1457, %v1464
    %v1467 = vmul.f32 %v1459, %v1464
    %v1469 = vlaneseq
    %v1470 = vshrl.u32 %v1469, 7
    %v1471 = vsub.s32 0, %v1470
    %v1472 = vrot.slane %v1419, %v1471
    %v1474 = vadd.f32 %v1466, %v1472
    %v1475 = vadd.f32 %v1467, %v1472
    %v1476 = vld [vmem:[%s29] sm:$0xff]
    %v1477 = vld [vmem:[%s29 + $0x8] sm:$0xff]
    %v1478 = vld [vmem:[%s29 + $0x10] sm:$0xff]
    %v1479 = vld [vmem:[%s29 + $0x18] sm:$0xff]
    %v1480 = vld [vmem:[%s31] sm:$0x1]
    %v1482 = vlaneseq
    %v1483 = vshrl.u32 %v1482, 7
    %v1484 = vsub.s32 0, %v1483
    %v1485 = vrot.slane %v1480, %v1484
    %v1488 = vsel %vm167, %v1474, 0
    %v1491 = vsel %vm167, %v1475, 0
    %1493 = vmatprep.subr.mxu0 0.0
    %1494 = vmatpush1.msra.mxu0 0.0
    %1495 = vmatprep.subr.mxu0 0.0
    %1496 = vmatpush1.msra.mxu0 0.0
    %1497 = vmatprep.subr.mxu0 0.0
    %1498 = vmatpush1.msra.mxu0 0.0
    %1499 = vmatprep.subr.mxu0 0.0
    %1500 = vmatpush1.msra.mxu0 0.0
    %1501 = vmatprep.subr.mxu0 0.0
    %1502 = vmatpush1.msra.mxu0 0.0
    %1503 = vmatprep.subr.mxu0 0.0
    %1504 = vmatpush1.msra.mxu0 0.0
    %1505 = vmatprep.subr.mxu0 0.0
    %1506 = vmatpush1.msra.mxu0 0.0
    %1507 = vmatprep.subr.mxu0 0.0
    %1508 = vmatpush1.msra.mxu0 0.0
    %1509 = vmatprep.subr.mxu0 0.0
    %1510 = vmatpush1.msra.mxu0 0.0
    %1511 = vmatprep.subr.mxu0 0.0
    %1512 = vmatpush1.msra.mxu0 0.0
    %1513 = vmatprep.subr.mxu0 0.0
    %1514 = vmatpush1.msra.mxu0 0.0
    %1515 = vmatprep.subr.mxu0 0.0
    %1516 = vmatpush1.msra.mxu0 0.0
    %1517 = vmatprep.subr.mxu0 0.0
    %1518 = vmatpush1.msra.mxu0 %v1479
    %1519 = vmatprep.subr.mxu0 0.0
    %1520 = vmatpush1.msra.mxu0 %v1478
    %1521 = vmatprep.subr.mxu0 0.0
    %1522 = vmatpush1.msra.mxu0 %v1477
    %1523 = vmatprep.subr.mxu0 0.0
    %1524 = vmatpush1.msra.mxu0 %v1476
    %1525 = vmatprep.subr.mxu0 0.0
    %1526 = vmatpush2.msra.mxu0 0.0
    %1527 = vmatprep.subr.mxu0 0.0
    %1528 = vmatpush2.msra.mxu0 0.0
    %1529 = vmatprep.subr.mxu0 0.0
    %1530 = vmatpush2.msra.mxu0 0.0
    %1531 = vmatprep.subr.mxu0 0.0
    %1532 = vmatpush2.msra.mxu0 0.0
    %1533 = vmatprep.subr.mxu0 0.0
    %1534 = vmatpush2.msra.mxu0 0.0
    %1535 = vmatprep.subr.mxu0 0.0
    %1536 = vmatpush2.msra.mxu0 0.0
    %1537 = vmatprep.subr.mxu0 0.0
    %1538 = vmatpush2.msra.mxu0 0.0
    %1539 = vmatprep.subr.mxu0 0.0
    %1540 = vmatpush2.msra.mxu0 0.0
    %1541 = vmatprep.subr.mxu0 0.0
    %1542 = vmatpush2.msra.mxu0 0.0
    %1543 = vmatprep.subr.mxu0 0.0
    %1544 = vmatpush2.msra.mxu0 0.0
    %1545 = vmatprep.subr.mxu0 0.0
    %1546 = vmatpush2.msra.mxu0 0.0
    %1547 = vmatprep.subr.mxu0 0.0
    %1548 = vmatpush2.msra.mxu0 0.0
    %1549 = vmatprep.subr.mxu0 0.0
    %1550 = vmatpush2.msra.mxu0 0.0
    %1551 = vmatprep.subr.mxu0 0.0
    %1552 = vmatpush2.msra.mxu0 0.0
    %1553 = vmatprep.subr.mxu0 0.0
    %1554 = vmatpush2.msra.mxu0 0.0
    %1555 = vmatprep.subr.mxu0 0.0
    %1556 = vmatpush2.msra.mxu0 0.0
    %1557 = vmatprep.mubr.f32.mxu0 0.0
    %1558 = vmatmul.mubr.f32.gmra.mxu0 %v1488
    %v1559 = vpop.f32.mrf.mxu0
    %v1560 = vadd.f32 %v1485, %v1559
    %v1561 = vpop.f32.mrf.mxu0
    %1562 = vmatprep.mubr.f32.mxu0 0.0
    %1563 = vmatmul.mubr.f32.gmra.mxu0 %v1491
    %v1564 = vpop.f32.mrf.mxu0
    %v1565 = vadd.f32 %v1485, %v1564
    %v1566 = vpop.f32.mrf.mxu0
    %1567 = vdwg.mxu0
    %v1568 = vmul.f32 %v1560, 0.5
    %v1569 = vmul.f32 %v1565, 0.5
    %v1570 = vmul.f32 %v1560, 0.044715
    %v1571 = vmul.f32 %v1565, 0.044715
    %v1572 = vmul.f32 %v1570, %v1560
    %v1573 = vmul.f32 %v1571, %v1565
    %v1574 = vmul.f32 %v1572, %v1560
    %v1575 = vmul.f32 %v1573, %v1565
    %v1576 = vadd.f32 %v1560, %v1574
    %v1577 = vadd.f32 %v1565, %v1575
    %v1578 = vmul.f32 %v1576, 0.7978845
    %v1579 = vmul.f32 %v1577, 0.7978845
    %v1580 = vtanh.pop %v1578
    %v1581 = vtanh.pop %v1579
    %v1582 = vadd.f32 %v1580, 1.0
    %v1583 = vadd.f32 %v1581, 1.0
    %v1584 = vmul.f32 %v1568, %v1582
    %v1585 = vmul.f32 %v1569, %v1583
    %v1586 = vld [vmem:[%s33] sm:$0xff]
    %v1587 = vld [vmem:[%s33 + $0x8] sm:$0xff]
    %v1588 = vld [vmem:[%s33 + $0x10] sm:$0xff]
    %v1589 = vld [vmem:[%s33 + $0x18] sm:$0xff]
    %v1590 = vld [vmem:[%s33 + $0x20] sm:$0xff]
    %v1591 = vld [vmem:[%s33 + $0x28] sm:$0xff]
    %v1592 = vld [vmem:[%s33 + $0x30] sm:$0xff]
    %v1593 = vld [vmem:[%s33 + $0x38] sm:$0xff]
    %v1594 = vld [vmem:[%s33 + $0x40] sm:$0xff]
    %v1595 = vld [vmem:[%s33 + $0x48] sm:$0xff]
    %v1596 = vld [vmem:[%s33 + $0x50] sm:$0xff]
    %v1597 = vld [vmem:[%s33 + $0x58] sm:$0xff]
    %v1598 = vld [vmem:[%s33 + $0x60] sm:$0xff]
    %v1599 = vld [vmem:[%s33 + $0x68] sm:$0xff]
    %v1600 = vld [vmem:[%s33 + $0x70] sm:$0xff]
    %v1601 = vld [vmem:[%s33 + $0x78] sm:$0xff]
    %v1602 = vld [vmem:[%s35] sm:$0x1]
    %v1604 = vlaneseq
    %v1605 = vshrl.u32 %v1604, 7
    %v1606 = vsub.s32 0, %v1605
    %v1607 = vrot.slane %v1602, %v1606
    %1609 = vmatprep.subr.mxu0 0.0
    %1610 = vmatpush1.msra.mxu0 %v1601
    %1611 = vmatprep.subr.mxu0 0.0
    %1612 = vmatpush1.msra.mxu0 %v1600
    %1613 = vmatprep.subr.mxu0 0.0
    %1614 = vmatpush1.msra.mxu0 %v1599
    %1615 = vmatprep.subr.mxu0 0.0
    %1616 = vmatpush1.msra.mxu0 %v1598
    %1617 = vmatprep.subr.mxu0 0.0
    %1618 = vmatpush1.msra.mxu0 %v1597
    %1619 = vmatprep.subr.mxu0 0.0
    %1620 = vmatpush1.msra.mxu0 %v1596
    %1621 = vmatprep.subr.mxu0 0.0
    %1622 = vmatpush1.msra.mxu0 %v1595
    %1623 = vmatprep.subr.mxu0 0.0
    %1624 = vmatpush1.msra.mxu0 %v1594
    %1625 = vmatprep.subr.mxu0 0.0
    %1626 = vmatpush1.msra.mxu0 %v1593
    %1627 = vmatprep.subr.mxu0 0.0
    %1628 = vmatpush1.msra.mxu0 %v1592
    %1629 = vmatprep.subr.mxu0 0.0
    %1630 = vmatpush1.msra.mxu0 %v1591
    %1631 = vmatprep.subr.mxu0 0.0
    %1632 = vmatpush1.msra.mxu0 %v1590
    %1633 = vmatprep.subr.mxu0 0.0
    %1634 = vmatpush1.msra.mxu0 %v1589
    %1635 = vmatprep.subr.mxu0 0.0
    %1636 = vmatpush1.msra.mxu0 %v1588
    %1637 = vmatprep.subr.mxu0 0.0
    %1638 = vmatpush1.msra.mxu0 %v1587
    %1639 = vmatprep.subr.mxu0 0.0
    %1640 = vmatpush1.msra.mxu0 %v1586
    %1641 = vmatprep.subr.mxu0 0.0
    %1642 = vmatpush2.msra.mxu0 0.0
    %1643 = vmatprep.subr.mxu0 0.0
    %1644 = vmatpush2.msra.mxu0 0.0
    %1645 = vmatprep.subr.mxu0 0.0
    %1646 = vmatpush2.msra.mxu0 0.0
    %1647 = vmatprep.subr.mxu0 0.0
    %1648 = vmatpush2.msra.mxu0 0.0
    %1649 = vmatprep.subr.mxu0 0.0
    %1650 = vmatpush2.msra.mxu0 0.0
    %1651 = vmatprep.subr.mxu0 0.0
    %1652 = vmatpush2.msra.mxu0 0.0
    %1653 = vmatprep.subr.mxu0 0.0
    %1654 = vmatpush2.msra.mxu0 0.0
    %1655 = vmatprep.subr.mxu0 0.0
    %1656 = vmatpush2.msra.mxu0 0.0
    %1657 = vmatprep.subr.mxu0 0.0
    %1658 = vmatpush2.msra.mxu0 0.0
    %1659 = vmatprep.subr.mxu0 0.0
    %1660 = vmatpush2.msra.mxu0 0.0
    %1661 = vmatprep.subr.mxu0 0.0
    %1662 = vmatpush2.msra.mxu0 0.0
    %1663 = vmatprep.subr.mxu0 0.0
    %1664 = vmatpush2.msra.mxu0 0.0
    %1665 = vmatprep.subr.mxu0 0.0
    %1666 = vmatpush2.msra.mxu0 0.0
    %1667 = vmatprep.subr.mxu0 0.0
    %1668 = vmatpush2.msra.mxu0 0.0
    %1669 = vmatprep.subr.mxu0 0.0
    %1670 = vmatpush2.msra.mxu0 0.0
    %1671 = vmatprep.subr.mxu0 0.0
    %1672 = vmatpush2.msra.mxu0 0.0
    %1673 = vmatprep.mubr.f32.mxu0 0.0
    %1674 = vmatmul.mubr.f32.gmra.mxu0 %v1584
    %v1675 = vpop.f32.mrf.mxu0
    %v1676 = vadd.f32 %v1607, %v1675
    %v1677 = vpop.f32.mrf.mxu0
    %1678 = vmatprep.mubr.f32.mxu0 0.0
    %1679 = vmatmul.mubr.f32.gmra.mxu0 %v1585
    %v1680 = vpop.f32.mrf.mxu0
    %v1681 = vadd.f32 %v1607, %v1680
    %v1682 = vpop.f32.mrf.mxu0
    %1683 = vdwg.mxu0
    %v1684 = vadd.f32 %v1416, %v1676
    %v1685 = vadd.f32 %v1417, %v1681
    %v1686 = vld [vmem:[%s37] sm:$0x1]
    %v1687 = vld [vmem:[%s39] sm:$0x1]
    %v1688 = vsel %vm167, %v1684, 0.0
    %1689 = vadd.xlane.f32.xlu0 %v1688
    %v1690 = vpop.xlane.xlu0 %1689
    %v1691 = vsel %vm167, %v1685, 0.0
    %1692 = vadd.xlane.f32.xlu0 %v1691
    %v1693 = vpop.xlane.xlu0 %1692
    %v1694 = vmul.f32 %v1690, %v174
    %v1695 = vmul.f32 %v1693, %v174
    %v1696 = vsub.f32 %v1684, %v1694
    %v1697 = vsub.f32 %v1685, %v1695
    %v1698 = vmul.f32 %v1696, %v1696
    %v1699 = vmul.f32 %v1697, %v1697
    %v1700 = vsel %vm167, %v1698, 0.0
    %1701 = vadd.xlane.f32.xlu0 %v1700
    %v1702 = vpop.xlane.xlu0 %1701
    %v1703 = vsel %vm167, %v1699, 0.0
    %1704 = vadd.xlane.f32.xlu0 %v1703
    %v1705 = vpop.xlane.xlu0 %1704
    %v1706 = vmul.f32 %v1702, %v174
    %v1707 = vmul.f32 %v1705, %v174
    %v1708 = vadd.f32 %v1706, 1e-05
    %v1709 = vadd.f32 %v1707, 1e-05
    %v1710 = vrsqrt.pop %v1708
    %v1711 = vmul.f32 %v1708, %v1710
    %vm1712 = vcmp.eq.f32.partialorder %v1708, inf
    %v1713 = vsel %vm1712, %v1708, %v1711
    %vm1714 = vcmp.eq.f32.partialorder %v1708, 0.0
    %v1715 = vand.u32 %v1708, 2147483648
    %v1716 = vsel %vm1714, %v1715, %v1713
    %v1717 = vrsqrt.pop %v1709
    %v1718 = vmul.f32 %v1709, %v1717
    %vm1719 = vcmp.eq.f32.partialorder %v1709, inf
    %v1720 = vsel %vm1719, %v1709, %v1718
    %vm1721 = vcmp.eq.f32.partialorder %v1709, 0.0
    %v1722 = vand.u32 %v1709, 2147483648
    %v1723 = vsel %vm1721, %v1722, %v1720
    %v1724 = vrcp.pop %v1716
    %v1725 = vmul.f32 %v1696, %v1724
    %v1726 = vrcp.pop %v1723
    %v1727 = vmul.f32 %v1697, %v1726
    %v1729 = vlaneseq
    %v1730 = vshrl.u32 %v1729, 7
    %v1731 = vsub.s32 0, %v1730
    %v1732 = vrot.slane %v1686, %v1731
    %v1734 = vmul.f32 %v1725, %v1732
    %v1735 = vmul.f32 %v1727, %v1732
    %v1737 = vlaneseq
    %v1738 = vshrl.u32 %v1737, 7
    %v1739 = vsub.s32 0, %v1738
    %v1740 = vrot.slane %v1687, %v1739
    %v1742 = vadd.f32 %v1734, %v1740
    %v1743 = vadd.f32 %v1735, %v1740
    %v1744 = vld [vmem:[%s41] sm:$0xff]
    %v1745 = vld [vmem:[%s41 + $0x8] sm:$0xff]
    %v1746 = vld [vmem:[%s41 + $0x10] sm:$0xff]
    %v1747 = vld [vmem:[%s41 + $0x18] sm:$0xff]
    %v1748 = vld [vmem:[%s43] sm:$0x1]
    %v1750 = vlaneseq
    %v1751 = vshrl.u32 %v1750, 7
    %v1752 = vsub.s32 0, %v1751
    %v1753 = vrot.slane %v1748, %v1752
    %v1756 = vsel %vm167, %v1742, 0
    %v1759 = vsel %vm167, %v1743, 0
    %1761 = vmatprep.subr.mxu0 0.0
    %1762 = vmatpush1.msra.mxu0 0.0
    %1763 = vmatprep.subr.mxu0 0.0
    %1764 = vmatpush1.msra.mxu0 0.0
    %1765 = vmatprep.subr.mxu0 0.0
    %1766 = vmatpush1.msra.mxu0 0.0
    %1767 = vmatprep.subr.mxu0 0.0
    %1768 = vmatpush1.msra.mxu0 0.0
    %1769 = vmatprep.subr.mxu0 0.0
    %1770 = vmatpush1.msra.mxu0 0.0
    %1771 = vmatprep.subr.mxu0 0.0
    %1772 = vmatpush1.msra.mxu0 0.0
    %1773 = vmatprep.subr.mxu0 0.0
    %1774 = vmatpush1.msra.mxu0 0.0
    %1775 = vmatprep.subr.mxu0 0.0
    %1776 = vmatpush1.msra.mxu0 0.0
    %1777 = vmatprep.subr.mxu0 0.0
    %1778 = vmatpush1.msra.mxu0 0.0
    %1779 = vmatprep.subr.mxu0 0.0
    %1780 = vmatpush1.msra.mxu0 0.0
    %1781 = vmatprep.subr.mxu0 0.0
    %1782 = vmatpush1.msra.mxu0 0.0
    %1783 = vmatprep.subr.mxu0 0.0
    %1784 = vmatpush1.msra.mxu0 0.0
    %1785 = vmatprep.subr.mxu0 0.0
    %1786 = vmatpush1.msra.mxu0 %v1747
    %1787 = vmatprep.subr.mxu0 0.0
    %1788 = vmatpush1.msra.mxu0 %v1746
    %1789 = vmatprep.subr.mxu0 0.0
    %1790 = vmatpush1.msra.mxu0 %v1745
    %1791 = vmatprep.subr.mxu0 0.0
    %1792 = vmatpush1.msra.mxu0 %v1744
    %1793 = vmatprep.subr.mxu0 0.0
    %1794 = vmatpush2.msra.mxu0 0.0
    %1795 = vmatprep.subr.mxu0 0.0
    %1796 = vmatpush2.msra.mxu0 0.0
    %1797 = vmatprep.subr.mxu0 0.0
    %1798 = vmatpush2.msra.mxu0 0.0
    %1799 = vmatprep.subr.mxu0 0.0
    %1800 = vmatpush2.msra.mxu0 0.0
    %1801 = vmatprep.subr.mxu0 0.0
    %1802 = vmatpush2.msra.mxu0 0.0
    %1803 = vmatprep.subr.mxu0 0.0
    %1804 = vmatpush2.msra.mxu0 0.0
    %1805 = vmatprep.subr.mxu0 0.0
    %1806 = vmatpush2.msra.mxu0 0.0
    %1807 = vmatprep.subr.mxu0 0.0
    %1808 = vmatpush2.msra.mxu0 0.0
    %1809 = vmatprep.subr.mxu0 0.0
    %1810 = vmatpush2.msra.mxu0 0.0
    %1811 = vmatprep.subr.mxu0 0.0
    %1812 = vmatpush2.msra.mxu0 0.0
    %1813 = vmatprep.subr.mxu0 0.0
    %1814 = vmatpush2.msra.mxu0 0.0
    %1815 = vmatprep.subr.mxu0 0.0
    %1816 = vmatpush2.msra.mxu0 0.0
    %1817 = vmatprep.subr.mxu0 0.0
    %1818 = vmatpush2.msra.mxu0 0.0
    %1819 = vmatprep.subr.mxu0 0.0
    %1820 = vmatpush2.msra.mxu0 0.0
    %1821 = vmatprep.subr.mxu0 0.0
    %1822 = vmatpush2.msra.mxu0 0.0
    %1823 = vmatprep.subr.mxu0 0.0
    %1824 = vmatpush2.msra.mxu0 0.0
    %1825 = vmatprep.mubr.f32.mxu0 0.0
    %1826 = vmatmul.mubr.f32.gmra.mxu0 %v1756
    %v1827 = vpop.f32.mrf.mxu0
    %v1828 = vadd.f32 %v1753, %v1827
    %v1829 = vpop.f32.mrf.mxu0
    %1830 = vmatprep.mubr.f32.mxu0 0.0
    %1831 = vmatmul.mubr.f32.gmra.mxu0 %v1759
    %v1832 = vpop.f32.mrf.mxu0
    %v1833 = vadd.f32 %v1753, %v1832
    %v1834 = vpop.f32.mrf.mxu0
    %1835 = vdwg.mxu0
    %v1836 = vmul.f32 %v1828, 0.35355338
    %v1837 = vmul.f32 %v1833, 0.35355338
    %v1838 = vld [vmem:[%s45] sm:$0xff]
    %v1839 = vld [vmem:[%s45 + $0x8] sm:$0xff]
    %v1840 = vld [vmem:[%s45 + $0x10] sm:$0xff]
    %v1841 = vld [vmem:[%s45 + $0x18] sm:$0xff]
    %v1842 = vld [vmem:[%s47] sm:$0x1]
    %v1844 = vlaneseq
    %v1845 = vshrl.u32 %v1844, 7
    %v1846 = vsub.s32 0, %v1845
    %v1847 = vrot.slane %v1842, %v1846
    %1849 = vmatprep.subr.mxu0 0.0
    %1850 = vmatpush1.msra.mxu0 0.0
    %1851 = vmatprep.subr.mxu0 0.0
    %1852 = vmatpush1.msra.mxu0 0.0
    %1853 = vmatprep.subr.mxu0 0.0
    %1854 = vmatpush1.msra.mxu0 0.0
    %1855 = vmatprep.subr.mxu0 0.0
    %1856 = vmatpush1.msra.mxu0 0.0
    %1857 = vmatprep.subr.mxu0 0.0
    %1858 = vmatpush1.msra.mxu0 0.0
    %1859 = vmatprep.subr.mxu0 0.0
    %1860 = vmatpush1.msra.mxu0 0.0
    %1861 = vmatprep.subr.mxu0 0.0
    %1862 = vmatpush1.msra.mxu0 0.0
    %1863 = vmatprep.subr.mxu0 0.0
    %1864 = vmatpush1.msra.mxu0 0.0
    %1865 = vmatprep.subr.mxu0 0.0
    %1866 = vmatpush1.msra.mxu0 0.0
    %1867 = vmatprep.subr.mxu0 0.0
    %1868 = vmatpush1.msra.mxu0 0.0
    %1869 = vmatprep.subr.mxu0 0.0
    %1870 = vmatpush1.msra.mxu0 0.0
    %1871 = vmatprep.subr.mxu0 0.0
    %1872 = vmatpush1.msra.mxu0 0.0
    %1873 = vmatprep.subr.mxu0 0.0
    %1874 = vmatpush1.msra.mxu0 %v1841
    %1875 = vmatprep.subr.mxu0 0.0
    %1876 = vmatpush1.msra.mxu0 %v1840
    %1877 = vmatprep.subr.mxu0 0.0
    %1878 = vmatpush1.msra.mxu0 %v1839
    %1879 = vmatprep.subr.mxu0 0.0
    %1880 = vmatpush1.msra.mxu0 %v1838
    %1881 = vmatprep.subr.mxu0 0.0
    %1882 = vmatpush2.msra.mxu0 0.0
    %1883 = vmatprep.subr.mxu0 0.0
    %1884 = vmatpush2.msra.mxu0 0.0
    %1885 = vmatprep.subr.mxu0 0.0
    %1886 = vmatpush2.msra.mxu0 0.0
    %1887 = vmatprep.subr.mxu0 0.0
    %1888 = vmatpush2.msra.mxu0 0.0
    %1889 = vmatprep.subr.mxu0 0.0
    %1890 = vmatpush2.msra.mxu0 0.0
    %1891 = vmatprep.subr.mxu0 0.0
    %1892 = vmatpush2.msra.mxu0 0.0
    %1893 = vmatprep.subr.mxu0 0.0
    %1894 = vmatpush2.msra.mxu0 0.0
    %1895 = vmatprep.subr.mxu0 0.0
    %1896 = vmatpush2.msra.mxu0 0.0
    %1897 = vmatprep.subr.mxu0 0.0
    %1898 = vmatpush2.msra.mxu0 0.0
    %1899 = vmatprep.subr.mxu0 0.0
    %1900 = vmatpush2.msra.mxu0 0.0
    %1901 = vmatprep.subr.mxu0 0.0
    %1902 = vmatpush2.msra.mxu0 0.0
    %1903 = vmatprep.subr.mxu0 0.0
    %1904 = vmatpush2.msra.mxu0 0.0
    %1905 = vmatprep.subr.mxu0 0.0
    %1906 = vmatpush2.msra.mxu0 0.0
    %1907 = vmatprep.subr.mxu0 0.0
    %1908 = vmatpush2.msra.mxu0 0.0
    %1909 = vmatprep.subr.mxu0 0.0
    %1910 = vmatpush2.msra.mxu0 0.0
    %1911 = vmatprep.subr.mxu0 0.0
    %1912 = vmatpush2.msra.mxu0 0.0
    %1913 = vmatprep.mubr.f32.mxu0 0.0
    %1914 = vmatmul.mubr.f32.gmra.mxu0 %v1756
    %v1915 = vpop.f32.mrf.mxu0
    %v1916 = vadd.f32 %v1847, %v1915
    %v1917 = vpop.f32.mrf.mxu0
    %1918 = vmatprep.mubr.f32.mxu0 0.0
    %1919 = vmatmul.mubr.f32.gmra.mxu0 %v1759
    %v1920 = vpop.f32.mrf.mxu0
    %v1921 = vadd.f32 %v1847, %v1920
    %v1922 = vpop.f32.mrf.mxu0
    %1923 = vdwg.mxu0
    %v1924 = vld [vmem:[%s49] sm:$0xff]
    %v1925 = vld [vmem:[%s49 + $0x8] sm:$0xff]
    %v1926 = vld [vmem:[%s49 + $0x10] sm:$0xff]
    %v1927 = vld [vmem:[%s49 + $0x18] sm:$0xff]
    %v1928 = vld [vmem:[%s51] sm:$0x1]
    %v1930 = vlaneseq
    %v1931 = vshrl.u32 %v1930, 7
    %v1932 = vsub.s32 0, %v1931
    %v1933 = vrot.slane %v1928, %v1932
    %1935 = vmatprep.subr.mxu0 0.0
    %1936 = vmatpush1.msra.mxu0 0.0
    %1937 = vmatprep.subr.mxu0 0.0
    %1938 = vmatpush1.msra.mxu0 0.0
    %1939 = vmatprep.subr.mxu0 0.0
    %1940 = vmatpush1.msra.mxu0 0.0
    %1941 = vmatprep.subr.mxu0 0.0
    %1942 = vmatpush1.msra.mxu0 0.0
    %1943 = vmatprep.subr.mxu0 0.0
    %1944 = vmatpush1.msra.mxu0 0.0
    %1945 = vmatprep.subr.mxu0 0.0
    %1946 = vmatpush1.msra.mxu0 0.0
    %1947 = vmatprep.subr.mxu0 0.0
    %1948 = vmatpush1.msra.mxu0 0.0
    %1949 = vmatprep.subr.mxu0 0.0
    %1950 = vmatpush1.msra.mxu0 0.0
    %1951 = vmatprep.subr.mxu0 0.0
    %1952 = vmatpush1.msra.mxu0 0.0
    %1953 = vmatprep.subr.mxu0 0.0
    %1954 = vmatpush1.msra.mxu0 0.0
    %1955 = vmatprep.subr.mxu0 0.0
    %1956 = vmatpush1.msra.mxu0 0.0
    %1957 = vmatprep.subr.mxu0 0.0
    %1958 = vmatpush1.msra.mxu0 0.0
    %1959 = vmatprep.subr.mxu0 0.0
    %1960 = vmatpush1.msra.mxu0 %v1927
    %1961 = vmatprep.subr.mxu0 0.0
    %1962 = vmatpush1.msra.mxu0 %v1926
    %1963 = vmatprep.subr.mxu0 0.0
    %1964 = vmatpush1.msra.mxu0 %v1925
    %1965 = vmatprep.subr.mxu0 0.0
    %1966 = vmatpush1.msra.mxu0 %v1924
    %1967 = vmatprep.subr.mxu0 0.0
    %1968 = vmatpush2.msra.mxu0 0.0
    %1969 = vmatprep.subr.mxu0 0.0
    %1970 = vmatpush2.msra.mxu0 0.0
    %1971 = vmatprep.subr.mxu0 0.0
    %1972 = vmatpush2.msra.mxu0 0.0
    %1973 = vmatprep.subr.mxu0 0.0
    %1974 = vmatpush2.msra.mxu0 0.0
    %1975 = vmatprep.subr.mxu0 0.0
    %1976 = vmatpush2.msra.mxu0 0.0
    %1977 = vmatprep.subr.mxu0 0.0
    %1978 = vmatpush2.msra.mxu0 0.0
    %1979 = vmatprep.subr.mxu0 0.0
    %1980 = vmatpush2.msra.mxu0 0.0
    %1981 = vmatprep.subr.mxu0 0.0
    %1982 = vmatpush2.msra.mxu0 0.0
    %1983 = vmatprep.subr.mxu0 0.0
    %1984 = vmatpush2.msra.mxu0 0.0
    %1985 = vmatprep.subr.mxu0 0.0
    %1986 = vmatpush2.msra.mxu0 0.0
    %1987 = vmatprep.subr.mxu0 0.0
    %1988 = vmatpush2.msra.mxu0 0.0
    %1989 = vmatprep.subr.mxu0 0.0
    %1990 = vmatpush2.msra.mxu0 0.0
    %1991 = vmatprep.subr.mxu0 0.0
    %1992 = vmatpush2.msra.mxu0 0.0
    %1993 = vmatprep.subr.mxu0 0.0
    %1994 = vmatpush2.msra.mxu0 0.0
    %1995 = vmatprep.subr.mxu0 0.0
    %1996 = vmatpush2.msra.mxu0 0.0
    %1997 = vmatprep.subr.mxu0 0.0
    %1998 = vmatpush2.msra.mxu0 0.0
    %1999 = vmatprep.mubr.f32.mxu0 0.0
    %2000 = vmatmul.mubr.f32.gmra.mxu0 %v1756
    %v2001 = vpop.f32.mrf.mxu0
    %v2002 = vadd.f32 %v1933, %v2001
    %v2003 = vpop.f32.mrf.mxu0
    %2004 = vmatprep.mubr.f32.mxu0 0.0
    %2005 = vmatmul.mubr.f32.gmra.mxu0 %v1759
    %v2006 = vpop.f32.mrf.mxu0
    %v2007 = vadd.f32 %v1933, %v2006
    %v2008 = vpop.f32.mrf.mxu0
    %2009 = vdwg.mxu0
    %v2011 = vsel %vm491, %v1836, 0
    %v2014 = vsel %vm491, %v1837, 0
    %v2017 = vsel %vm491, %v1916, 0
    %v2020 = vsel %vm491, %v1921, 0
    %2022 = vmatprep.subr.mxu0 0.0
    %2023 = vmatpush1.xpose.msra.mxu0 0.0
    %2024 = vmatprep.subr.mxu0 0.0
    %2025 = vmatpush1.xpose.msra.mxu0 0.0
    %2026 = vmatprep.subr.mxu0 0.0
    %2027 = vmatpush1.xpose.msra.mxu0 0.0
    %2028 = vmatprep.subr.mxu0 0.0
    %2029 = vmatpush1.xpose.msra.mxu0 0.0
    %2030 = vmatprep.subr.mxu0 0.0
    %2031 = vmatpush1.xpose.msra.mxu0 0.0
    %2032 = vmatprep.subr.mxu0 0.0
    %2033 = vmatpush1.xpose.msra.mxu0 0.0
    %2034 = vmatprep.subr.mxu0 0.0
    %2035 = vmatpush1.xpose.msra.mxu0 0.0
    %2036 = vmatprep.subr.mxu0 0.0
    %2037 = vmatpush1.xpose.msra.mxu0 0.0
    %2038 = vmatprep.subr.mxu0 0.0
    %2039 = vmatpush1.xpose.msra.mxu0 0.0
    %2040 = vmatprep.subr.mxu0 0.0
    %2041 = vmatpush1.xpose.msra.mxu0 0.0
    %2042 = vmatprep.subr.mxu0 0.0
    %2043 = vmatpush1.xpose.msra.mxu0 0.0
    %2044 = vmatprep.subr.mxu0 0.0
    %2045 = vmatpush1.xpose.msra.mxu0 0.0
    %2046 = vmatprep.subr.mxu0 0.0
    %2047 = vmatpush1.xpose.msra.mxu0 0.0
    %2048 = vmatprep.subr.mxu0 0.0
    %2049 = vmatpush1.xpose.msra.mxu0 0.0
    %2050 = vmatprep.subr.mxu0 0.0
    %2051 = vmatpush1.xpose.msra.mxu0 %v2020
    %2052 = vmatprep.subr.mxu0 0.0
    %2053 = vmatpush1.xpose.msra.mxu0 %v2017
    %2054 = vmatprep.subr.mxu0 0.0
    %2055 = vmatpush2.xpose.msra.mxu0 0.0
    %2056 = vmatprep.subr.mxu0 0.0
    %2057 = vmatpush2.xpose.msra.mxu0 0.0
    %2058 = vmatprep.subr.mxu0 0.0
    %2059 = vmatpush2.xpose.msra.mxu0 0.0
    %2060 = vmatprep.subr.mxu0 0.0
    %2061 = vmatpush2.xpose.msra.mxu0 0.0
    %2062 = vmatprep.subr.mxu0 0.0
    %2063 = vmatpush2.xpose.msra.mxu0 0.0
    %2064 = vmatprep.subr.mxu0 0.0
    %2065 = vmatpush2.xpose.msra.mxu0 0.0
    %2066 = vmatprep.subr.mxu0 0.0
    %2067 = vmatpush2.xpose.msra.mxu0 0.0
    %2068 = vmatprep.subr.mxu0 0.0
    %2069 = vmatpush2.xpose.msra.mxu0 0.0
    %2070 = vmatprep.subr.mxu0 0.0
    %2071 = vmatpush2.xpose.msra.mxu0 0.0
    %2072 = vmatprep.subr.mxu0 0.0
    %2073 = vmatpush2.xpose.msra.mxu0 0.0
    %2074 = vmatprep.subr.mxu0 0.0
    %2075 = vmatpush2.xpose.msra.mxu0 0.0
    %2076 = vmatprep.subr.mxu0 0.0
    %2077 = vmatpush2.xpose.msra.mxu0 0.0
    %2078 = vmatprep.subr.mxu0 0.0
    %2079 = vmatpush2.xpose.msra.mxu0 0.0
    %2080 = vmatprep.subr.mxu0 0.0
    %2081 = vmatpush2.xpose.msra.mxu0 0.0
    %2082 = vmatprep.subr.mxu0 0.0
    %2083 = vmatpush2.xpose.msra.mxu0 0.0
    %2084 = vmatprep.subr.mxu0 0.0
    %2085 = vmatpush2.xpose.msra.mxu0 0.0
    %2086 = vmatprep.mubr.f32.mxu0 0.0
    %2087 = vmatmul.mubr.f32.gmra.mxu0 %v2011
    %v2088 = vpop.f32.mrf.mxu0
    %v2089 = vadd.f32 0.0, %v2088
    %v2090 = vpop.f32.mrf.mxu0
    %2091 = vmatprep.mubr.f32.mxu0 0.0
    %2092 = vmatmul.mubr.f32.gmra.mxu0 %v2014
    %v2093 = vpop.f32.mrf.mxu0
    %v2094 = vadd.f32 0.0, %v2093
    %v2095 = vpop.f32.mrf.mxu0
    %2096 = vdwg.mxu0
    %v2097 = vsel %vm163, %v2089, -10000.0
    %v2098 = vsel %vm164, %v2094, -10000.0
    %v2099 = vsel %vm581, %v2097, -inf
    %2100 = vmax.xlane.f32.xlu0 %v2099
    %v2101 = vpop.xlane.xlu0 %2100
    %v2102 = vsel %vm581, %v2098, -inf
    %2103 = vmax.xlane.f32.xlu0 %v2102
    %v2104 = vpop.xlane.xlu0 %2103
    %v2105 = vsub.f32 %v2097, %v2101
    %v2106 = vsub.f32 %v2098, %v2104
    %v2107 = vmul.f32 %v2105, 1.442695
    %v2108 = vpow.pop %v2107
    %v2109 = vmul.f32 %v2106, 1.442695
    %v2110 = vpow.pop %v2109
    %v2111 = vsel %vm581, %v2108, 0.0
    %2112 = vadd.xlane.f32.xlu0 %v2111
    %v2113 = vpop.xlane.xlu0 %2112
    %v2114 = vsel %vm581, %v2110, 0.0
    %2115 = vadd.xlane.f32.xlu0 %v2114
    %v2116 = vpop.xlane.xlu0 %2115
    %v2117 = vrcp.pop %v2113
    %v2118 = vmul.f32 %v2108, %v2117
    %v2119 = vrcp.pop %v2116
    %v2120 = vmul.f32 %v2110, %v2119
    %v2122 = vsel %vm581, %v2118, 0
    %v2125 = vsel %vm581, %v2120, 0
    %2127 = vmatprep.subr.mxu0 0.0
    %2128 = vmatpush1.msra.mxu0 0.0
    %2129 = vmatprep.subr.mxu0 0.0
    %2130 = vmatpush1.msra.mxu0 0.0
    %2131 = vmatprep.subr.mxu0 0.0
    %2132 = vmatpush1.msra.mxu0 0.0
    %2133 = vmatprep.subr.mxu0 0.0
    %2134 = vmatpush1.msra.mxu0 0.0
    %2135 = vmatprep.subr.mxu0 0.0
    %2136 = vmatpush1.msra.mxu0 0.0
    %2137 = vmatprep.subr.mxu0 0.0
    %2138 = vmatpush1.msra.mxu0 0.0
    %2139 = vmatprep.subr.mxu0 0.0
    %2140 = vmatpush1.msra.mxu0 0.0
    %2141 = vmatprep.subr.mxu0 0.0
    %2142 = vmatpush1.msra.mxu0 0.0
    %2143 = vmatprep.subr.mxu0 0.0
    %2144 = vmatpush1.msra.mxu0 0.0
    %2145 = vmatprep.subr.mxu0 0.0
    %2146 = vmatpush1.msra.mxu0 0.0
    %2147 = vmatprep.subr.mxu0 0.0
    %2148 = vmatpush1.msra.mxu0 0.0
    %2149 = vmatprep.subr.mxu0 0.0
    %2150 = vmatpush1.msra.mxu0 0.0
    %2151 = vmatprep.subr.mxu0 0.0
    %2152 = vmatpush1.msra.mxu0 0.0
    %2153 = vmatprep.subr.mxu0 0.0
    %2154 = vmatpush1.msra.mxu0 0.0
    %2155 = vmatprep.subr.mxu0 0.0
    %2156 = vmatpush1.msra.mxu0 %v2007
    %2157 = vmatprep.subr.mxu0 0.0
    %2158 = vmatpush1.msra.mxu0 %v2002
    %2159 = vmatprep.subr.mxu0 0.0
    %2160 = vmatpush2.msra.mxu0 0.0
    %2161 = vmatprep.subr.mxu0 0.0
    %2162 = vmatpush2.msra.mxu0 0.0
    %2163 = vmatprep.subr.mxu0 0.0
    %2164 = vmatpush2.msra.mxu0 0.0
    %2165 = vmatprep.subr.mxu0 0.0
    %2166 = vmatpush2.msra.mxu0 0.0
    %2167 = vmatprep.subr.mxu0 0.0
    %2168 = vmatpush2.msra.mxu0 0.0
    %2169 = vmatprep.subr.mxu0 0.0
    %2170 = vmatpush2.msra.mxu0 0.0
    %2171 = vmatprep.subr.mxu0 0.0
    %2172 = vmatpush2.msra.mxu0 0.0
    %2173 = vmatprep.subr.mxu0 0.0
    %2174 = vmatpush2.msra.mxu0 0.0
    %2175 = vmatprep.subr.mxu0 0.0
    %2176 = vmatpush2.msra.mxu0 0.0
    %2177 = vmatprep.subr.mxu0 0.0
    %2178 = vmatpush2.msra.mxu0 0.0
    %2179 = vmatprep.subr.mxu0 0.0
    %2180 = vmatpush2.msra.mxu0 0.0
    %2181 = vmatprep.subr.mxu0 0.0
    %2182 = vmatpush2.msra.mxu0 0.0
    %2183 = vmatprep.subr.mxu0 0.0
    %2184 = vmatpush2.msra.mxu0 0.0
    %2185 = vmatprep.subr.mxu0 0.0
    %2186 = vmatpush2.msra.mxu0 0.0
    %2187 = vmatprep.subr.mxu0 0.0
    %2188 = vmatpush2.msra.mxu0 0.0
    %2189 = vmatprep.subr.mxu0 0.0
    %2190 = vmatpush2.msra.mxu0 0.0
    %2191 = vmatprep.mubr.f32.mxu0 0.0
    %2192 = vmatmul.mubr.f32.gmra.mxu0 %v2122
    %v2193 = vpop.f32.mrf.mxu0
    %v2194 = vadd.f32 0.0, %v2193
    %v2195 = vpop.f32.mrf.mxu0
    %2196 = vmatprep.mubr.f32.mxu0 0.0
    %2197 = vmatmul.mubr.f32.gmra.mxu0 %v2125
    %v2198 = vpop.f32.mrf.mxu0
    %v2199 = vadd.f32 0.0, %v2198
    %v2200 = vpop.f32.mrf.mxu0
    %2201 = vdwg.mxu0
    %2202 = vrot.lane.b32.xlu0 %v1836, 120
    %v2203 = vpop.permute.xlu0 %2202
    %2204 = vrot.lane.b32.xlu0 %v1837, 120
    %v2205 = vpop.permute.xlu0 %2204
    %2206 = vrot.lane.b32.xlu0 %v1916, 120
    %v2207 = vpop.permute.xlu0 %2206
    %2208 = vrot.lane.b32.xlu0 %v1921, 120
    %v2209 = vpop.permute.xlu0 %2208
    %v2210 = vsel %vm491, %v2203, 0
    %v2212 = vsel %vm491, %v2205, 0
    %v2214 = vsel %vm491, %v2207, 0
    %v2216 = vsel %vm491, %v2209, 0
    %2218 = vmatprep.subr.mxu0 0.0
    %2219 = vmatpush1.xpose.msra.mxu0 0.0
    %2220 = vmatprep.subr.mxu0 0.0
    %2221 = vmatpush1.xpose.msra.mxu0 0.0
    %2222 = vmatprep.subr.mxu0 0.0
    %2223 = vmatpush1.xpose.msra.mxu0 0.0
    %2224 = vmatprep.subr.mxu0 0.0
    %2225 = vmatpush1.xpose.msra.mxu0 0.0
    %2226 = vmatprep.subr.mxu0 0.0
    %2227 = vmatpush1.xpose.msra.mxu0 0.0
    %2228 = vmatprep.subr.mxu0 0.0
    %2229 = vmatpush1.xpose.msra.mxu0 0.0
    %2230 = vmatprep.subr.mxu0 0.0
    %2231 = vmatpush1.xpose.msra.mxu0 0.0
    %2232 = vmatprep.subr.mxu0 0.0
    %2233 = vmatpush1.xpose.msra.mxu0 0.0
    %2234 = vmatprep.subr.mxu0 0.0
    %2235 = vmatpush1.xpose.msra.mxu0 0.0
    %2236 = vmatprep.subr.mxu0 0.0
    %2237 = vmatpush1.xpose.msra.mxu0 0.0
    %2238 = vmatprep.subr.mxu0 0.0
    %2239 = vmatpush1.xpose.msra.mxu0 0.0
    %2240 = vmatprep.subr.mxu0 0.0
    %2241 = vmatpush1.xpose.msra.mxu0 0.0
    %2242 = vmatprep.subr.mxu0 0.0
    %2243 = vmatpush1.xpose.msra.mxu0 0.0
    %2244 = vmatprep.subr.mxu0 0.0
    %2245 = vmatpush1.xpose.msra.mxu0 0.0
    %2246 = vmatprep.subr.mxu0 0.0
    %2247 = vmatpush1.xpose.msra.mxu0 %v2216
    %2248 = vmatprep.subr.mxu0 0.0
    %2249 = vmatpush1.xpose.msra.mxu0 %v2214
    %2250 = vmatprep.subr.mxu0 0.0
    %2251 = vmatpush2.xpose.msra.mxu0 0.0
    %2252 = vmatprep.subr.mxu0 0.0
    %2253 = vmatpush2.xpose.msra.mxu0 0.0
    %2254 = vmatprep.subr.mxu0 0.0
    %2255 = vmatpush2.xpose.msra.mxu0 0.0
    %2256 = vmatprep.subr.mxu0 0.0
    %2257 = vmatpush2.xpose.msra.mxu0 0.0
    %2258 = vmatprep.subr.mxu0 0.0
    %2259 = vmatpush2.xpose.msra.mxu0 0.0
    %2260 = vmatprep.subr.mxu0 0.0
    %2261 = vmatpush2.xpose.msra.mxu0 0.0
    %2262 = vmatprep.subr.mxu0 0.0
    %2263 = vmatpush2.xpose.msra.mxu0 0.0
    %2264 = vmatprep.subr.mxu0 0.0
    %2265 = vmatpush2.xpose.msra.mxu0 0.0
    %2266 = vmatprep.subr.mxu0 0.0
    %2267 = vmatpush2.xpose.msra.mxu0 0.0
    %2268 = vmatprep.subr.mxu0 0.0
    %2269 = vmatpush2.xpose.msra.mxu0 0.0
    %2270 = vmatprep.subr.mxu0 0.0
    %2271 = vmatpush2.xpose.msra.mxu0 0.0
    %2272 = vmatprep.subr.mxu0 0.0
    %2273 = vmatpush2.xpose.msra.mxu0 0.0
    %2274 = vmatprep.subr.mxu0 0.0
    %2275 = vmatpush2.xpose.msra.mxu0 0.0
    %2276 = vmatprep.subr.mxu0 0.0
    %2277 = vmatpush2.xpose.msra.mxu0 0.0
    %2278 = vmatprep.subr.mxu0 0.0
    %2279 = vmatpush2.xpose.msra.mxu0 0.0
    %2280 = vmatprep.subr.mxu0 0.0
    %2281 = vmatpush2.xpose.msra.mxu0 0.0
    %2282 = vmatprep.mubr.f32.mxu0 0.0
    %2283 = vmatmul.mubr.f32.gmra.mxu0 %v2210
    %v2284 = vpop.f32.mrf.mxu0
    %v2285 = vadd.f32 0.0, %v2284
    %v2286 = vpop.f32.mrf.mxu0
    %2287 = vmatprep.mubr.f32.mxu0 0.0
    %2288 = vmatmul.mubr.f32.gmra.mxu0 %v2212
    %v2289 = vpop.f32.mrf.mxu0
    %v2290 = vadd.f32 0.0, %v2289
    %v2291 = vpop.f32.mrf.mxu0
    %2292 = vdwg.mxu0
    %v2293 = vsel %vm163, %v2285, -10000.0
    %v2294 = vsel %vm164, %v2290, -10000.0
    %v2295 = vsel %vm581, %v2293, -inf
    %2296 = vmax.xlane.f32.xlu0 %v2295
    %v2297 = vpop.xlane.xlu0 %2296
    %v2298 = vsel %vm581, %v2294, -inf
    %2299 = vmax.xlane.f32.xlu0 %v2298
    %v2300 = vpop.xlane.xlu0 %2299
    %v2301 = vsub.f32 %v2293, %v2297
    %v2302 = vsub.f32 %v2294, %v2300
    %v2303 = vmul.f32 %v2301, 1.442695
    %v2304 = vpow.pop %v2303
    %v2305 = vmul.f32 %v2302, 1.442695
    %v2306 = vpow.pop %v2305
    %v2307 = vsel %vm581, %v2304, 0.0
    %2308 = vadd.xlane.f32.xlu0 %v2307
    %v2309 = vpop.xlane.xlu0 %2308
    %v2310 = vsel %vm581, %v2306, 0.0
    %2311 = vadd.xlane.f32.xlu0 %v2310
    %v2312 = vpop.xlane.xlu0 %2311
    %v2313 = vrcp.pop %v2309
    %v2314 = vmul.f32 %v2304, %v2313
    %v2315 = vrcp.pop %v2312
    %v2316 = vmul.f32 %v2306, %v2315
    %2319 = vrot.lane.b32.xlu0 %v2002, 120
    %v2320 = vpop.permute.xlu0 %2319
    %2321 = vrot.lane.b32.xlu0 %v2007, 120
    %v2322 = vpop.permute.xlu0 %2321
    %v2326 = vsel %vm581, %v2314, 0
    %v2329 = vsel %vm581, %v2316, 0
    %2331 = vmatprep.subr.mxu0 0.0
    %2332 = vmatpush1.msra.mxu0 0.0
    %2333 = vmatprep.subr.mxu0 0.0
    %2334 = vmatpush1.msra.mxu0 0.0
    %2335 = vmatprep.subr.mxu0 0.0
    %2336 = vmatpush1.msra.mxu0 0.0
    %2337 = vmatprep.subr.mxu0 0.0
    %2338 = vmatpush1.msra.mxu0 0.0
    %2339 = vmatprep.subr.mxu0 0.0
    %2340 = vmatpush1.msra.mxu0 0.0
    %2341 = vmatprep.subr.mxu0 0.0
    %2342 = vmatpush1.msra.mxu0 0.0
    %2343 = vmatprep.subr.mxu0 0.0
    %2344 = vmatpush1.msra.mxu0 0.0
    %2345 = vmatprep.subr.mxu0 0.0
    %2346 = vmatpush1.msra.mxu0 0.0
    %2347 = vmatprep.subr.mxu0 0.0
    %2348 = vmatpush1.msra.mxu0 0.0
    %2349 = vmatprep.subr.mxu0 0.0
    %2350 = vmatpush1.msra.mxu0 0.0
    %2351 = vmatprep.subr.mxu0 0.0
    %2352 = vmatpush1.msra.mxu0 0.0
    %2353 = vmatprep.subr.mxu0 0.0
    %2354 = vmatpush1.msra.mxu0 0.0
    %2355 = vmatprep.subr.mxu0 0.0
    %2356 = vmatpush1.msra.mxu0 0.0
    %2357 = vmatprep.subr.mxu0 0.0
    %2358 = vmatpush1.msra.mxu0 0.0
    %2359 = vmatprep.subr.mxu0 0.0
    %2360 = vmatpush1.msra.mxu0 %v2322
    %2361 = vmatprep.subr.mxu0 0.0
    %2362 = vmatpush1.msra.mxu0 %v2320
    %2363 = vmatprep.subr.mxu0 0.0
    %2364 = vmatpush2.msra.mxu0 0.0
    %2365 = vmatprep.subr.mxu0 0.0
    %2366 = vmatpush2.msra.mxu0 0.0
    %2367 = vmatprep.subr.mxu0 0.0
    %2368 = vmatpush2.msra.mxu0 0.0
    %2369 = vmatprep.subr.mxu0 0.0
    %2370 = vmatpush2.msra.mxu0 0.0
    %2371 = vmatprep.subr.mxu0 0.0
    %2372 = vmatpush2.msra.mxu0 0.0
    %2373 = vmatprep.subr.mxu0 0.0
    %2374 = vmatpush2.msra.mxu0 0.0
    %2375 = vmatprep.subr.mxu0 0.0
    %2376 = vmatpush2.msra.mxu0 0.0
    %2377 = vmatprep.subr.mxu0 0.0
    %2378 = vmatpush2.msra.mxu0 0.0
    %2379 = vmatprep.subr.mxu0 0.0
    %2380 = vmatpush2.msra.mxu0 0.0
    %2381 = vmatprep.subr.mxu0 0.0
    %2382 = vmatpush2.msra.mxu0 0.0
    %2383 = vmatprep.subr.mxu0 0.0
    %2384 = vmatpush2.msra.mxu0 0.0
    %2385 = vmatprep.subr.mxu0 0.0
    %2386 = vmatpush2.msra.mxu0 0.0
    %2387 = vmatprep.subr.mxu0 0.0
    %2388 = vmatpush2.msra.mxu0 0.0
    %2389 = vmatprep.subr.mxu0 0.0
    %2390 = vmatpush2.msra.mxu0 0.0
    %2391 = vmatprep.subr.mxu0 0.0
    %2392 = vmatpush2.msra.mxu0 0.0
    %2393 = vmatprep.subr.mxu0 0.0
    %2394 = vmatpush2.msra.mxu0 0.0
    %2395 = vmatprep.mubr.f32.mxu0 0.0
    %2396 = vmatmul.mubr.f32.gmra.mxu0 %v2326
    %v2397 = vpop.f32.mrf.mxu0
    %v2398 = vadd.f32 0.0, %v2397
    %v2399 = vpop.f32.mrf.mxu0
    %2400 = vmatprep.mubr.f32.mxu0 0.0
    %2401 = vmatmul.mubr.f32.gmra.mxu0 %v2329
    %v2402 = vpop.f32.mrf.mxu0
    %v2403 = vadd.f32 0.0, %v2402
    %v2404 = vpop.f32.mrf.mxu0
    %2405 = vdwg.mxu0
    %2406 = vrot.lane.b32.xlu0 %v1836, 112
    %v2407 = vpop.permute.xlu0 %2406
    %2408 = vrot.lane.b32.xlu0 %v1837, 112
    %v2409 = vpop.permute.xlu0 %2408
    %2410 = vrot.lane.b32.xlu0 %v1916, 112
    %v2411 = vpop.permute.xlu0 %2410
    %2412 = vrot.lane.b32.xlu0 %v1921, 112
    %v2413 = vpop.permute.xlu0 %2412
    %v2414 = vsel %vm491, %v2407, 0
    %v2416 = vsel %vm491, %v2409, 0
    %v2418 = vsel %vm491, %v2411, 0
    %v2420 = vsel %vm491, %v2413, 0
    %2422 = vmatprep.subr.mxu0 0.0
    %2423 = vmatpush1.xpose.msra.mxu0 0.0
    %2424 = vmatprep.subr.mxu0 0.0
    %2425 = vmatpush1.xpose.msra.mxu0 0.0
    %2426 = vmatprep.subr.mxu0 0.0
    %2427 = vmatpush1.xpose.msra.mxu0 0.0
    %2428 = vmatprep.subr.mxu0 0.0
    %2429 = vmatpush1.xpose.msra.mxu0 0.0
    %2430 = vmatprep.subr.mxu0 0.0
    %2431 = vmatpush1.xpose.msra.mxu0 0.0
    %2432 = vmatprep.subr.mxu0 0.0
    %2433 = vmatpush1.xpose.msra.mxu0 0.0
    %2434 = vmatprep.subr.mxu0 0.0
    %2435 = vmatpush1.xpose.msra.mxu0 0.0
    %2436 = vmatprep.subr.mxu0 0.0
    %2437 = vmatpush1.xpose.msra.mxu0 0.0
    %2438 = vmatprep.subr.mxu0 0.0
    %2439 = vmatpush1.xpose.msra.mxu0 0.0
    %2440 = vmatprep.subr.mxu0 0.0
    %2441 = vmatpush1.xpose.msra.mxu0 0.0
    %2442 = vmatprep.subr.mxu0 0.0
    %2443 = vmatpush1.xpose.msra.mxu0 0.0
    %2444 = vmatprep.subr.mxu0 0.0
    %2445 = vmatpush1.xpose.msra.mxu0 0.0
    %2446 = vmatprep.subr.mxu0 0.0
    %2447 = vmatpush1.xpose.msra.mxu0 0.0
    %2448 = vmatprep.subr.mxu0 0.0
    %2449 = vmatpush1.xpose.msra.mxu0 0.0
    %2450 = vmatprep.subr.mxu0 0.0
    %2451 = vmatpush1.xpose.msra.mxu0 %v2420
    %2452 = vmatprep.subr.mxu0 0.0
    %2453 = vmatpush1.xpose.msra.mxu0 %v2418
    %2454 = vmatprep.subr.mxu0 0.0
    %2455 = vmatpush2.xpose.msra.mxu0 0.0
    %2456 = vmatprep.subr.mxu0 0.0
    %2457 = vmatpush2.xpose.msra.mxu0 0.0
    %2458 = vmatprep.subr.mxu0 0.0
    %2459 = vmatpush2.xpose.msra.mxu0 0.0
    %2460 = vmatprep.subr.mxu0 0.0
    %2461 = vmatpush2.xpose.msra.mxu0 0.0
    %2462 = vmatprep.subr.mxu0 0.0
    %2463 = vmatpush2.xpose.msra.mxu0 0.0
    %2464 = vmatprep.subr.mxu0 0.0
    %2465 = vmatpush2.xpose.msra.mxu0 0.0
    %2466 = vmatprep.subr.mxu0 0.0
    %2467 = vmatpush2.xpose.msra.mxu0 0.0
    %2468 = vmatprep.subr.mxu0 0.0
    %2469 = vmatpush2.xpose.msra.mxu0 0.0
    %2470 = vmatprep.subr.mxu0 0.0
    %2471 = vmatpush2.xpose.msra.mxu0 0.0
    %2472 = vmatprep.subr.mxu0 0.0
    %2473 = vmatpush2.xpose.msra.mxu0 0.0
    %2474 = vmatprep.subr.mxu0 0.0
    %2475 = vmatpush2.xpose.msra.mxu0 0.0
    %2476 = vmatprep.subr.mxu0 0.0
    %2477 = vmatpush2.xpose.msra.mxu0 0.0
    %2478 = vmatprep.subr.mxu0 0.0
    %2479 = vmatpush2.xpose.msra.mxu0 0.0
    %2480 = vmatprep.subr.mxu0 0.0
    %2481 = vmatpush2.xpose.msra.mxu0 0.0
    %2482 = vmatprep.subr.mxu0 0.0
    %2483 = vmatpush2.xpose.msra.mxu0 0.0
    %2484 = vmatprep.subr.mxu0 0.0
    %2485 = vmatpush2.xpose.msra.mxu0 0.0
    %2486 = vmatprep.mubr.f32.mxu0 0.0
    %2487 = vmatmul.mubr.f32.gmra.mxu0 %v2414
    %v2488 = vpop.f32.mrf.mxu0
    %v2489 = vadd.f32 0.0, %v2488
    %v2490 = vpop.f32.mrf.mxu0
    %2491 = vmatprep.mubr.f32.mxu0 0.0
    %2492 = vmatmul.mubr.f32.gmra.mxu0 %v2416
    %v2493 = vpop.f32.mrf.mxu0
    %v2494 = vadd.f32 0.0, %v2493
    %v2495 = vpop.f32.mrf.mxu0
    %2496 = vdwg.mxu0
    %v2497 = vsel %vm163, %v2489, -10000.0
    %v2498 = vsel %vm164, %v2494, -10000.0
    %v2499 = vsel %vm581, %v2497, -inf
    %2500 = vmax.xlane.f32.xlu0 %v2499
    %v2501 = vpop.xlane.xlu0 %2500
    %v2502 = vsel %vm581, %v2498, -inf
    %2503 = vmax.xlane.f32.xlu0 %v2502
    %v2504 = vpop.xlane.xlu0 %2503
    %v2505 = vsub.f32 %v2497, %v2501
    %v2506 = vsub.f32 %v2498, %v2504
    %v2507 = vmul.f32 %v2505, 1.442695
    %v2508 = vpow.pop %v2507
    %v2509 = vmul.f32 %v2506, 1.442695
    %v2510 = vpow.pop %v2509
    %v2511 = vsel %vm581, %v2508, 0.0
    %2512 = vadd.xlane.f32.xlu0 %v2511
    %v2513 = vpop.xlane.xlu0 %2512
    %v2514 = vsel %vm581, %v2510, 0.0
    %2515 = vadd.xlane.f32.xlu0 %v2514
    %v2516 = vpop.xlane.xlu0 %2515
    %v2517 = vrcp.pop %v2513
    %v2518 = vmul.f32 %v2508, %v2517
    %v2519 = vrcp.pop %v2516
    %v2520 = vmul.f32 %v2510, %v2519
    %2521 = vrot.lane.b32.xlu0 %v2002, 112
    %v2522 = vpop.permute.xlu0 %2521
    %2523 = vrot.lane.b32.xlu0 %v2007, 112
    %v2524 = vpop.permute.xlu0 %2523
    %v2528 = vsel %vm581, %v2518, 0
    %v2531 = vsel %vm581, %v2520, 0
    %2533 = vmatprep.subr.mxu0 0.0
    %2534 = vmatpush1.msra.mxu0 0.0
    %2535 = vmatprep.subr.mxu0 0.0
    %2536 = vmatpush1.msra.mxu0 0.0
    %2537 = vmatprep.subr.mxu0 0.0
    %2538 = vmatpush1.msra.mxu0 0.0
    %2539 = vmatprep.subr.mxu0 0.0
    %2540 = vmatpush1.msra.mxu0 0.0
    %2541 = vmatprep.subr.mxu0 0.0
    %2542 = vmatpush1.msra.mxu0 0.0
    %2543 = vmatprep.subr.mxu0 0.0
    %2544 = vmatpush1.msra.mxu0 0.0
    %2545 = vmatprep.subr.mxu0 0.0
    %2546 = vmatpush1.msra.mxu0 0.0
    %2547 = vmatprep.subr.mxu0 0.0
    %2548 = vmatpush1.msra.mxu0 0.0
    %2549 = vmatprep.subr.mxu0 0.0
    %2550 = vmatpush1.msra.mxu0 0.0
    %2551 = vmatprep.subr.mxu0 0.0
    %2552 = vmatpush1.msra.mxu0 0.0
    %2553 = vmatprep.subr.mxu0 0.0
    %2554 = vmatpush1.msra.mxu0 0.0
    %2555 = vmatprep.subr.mxu0 0.0
    %2556 = vmatpush1.msra.mxu0 0.0
    %2557 = vmatprep.subr.mxu0 0.0
    %2558 = vmatpush1.msra.mxu0 0.0
    %2559 = vmatprep.subr.mxu0 0.0
    %2560 = vmatpush1.msra.mxu0 0.0
    %2561 = vmatprep.subr.mxu0 0.0
    %2562 = vmatpush1.msra.mxu0 %v2524
    %2563 = vmatprep.subr.mxu0 0.0
    %2564 = vmatpush1.msra.mxu0 %v2522
    %2565 = vmatprep.subr.mxu0 0.0
    %2566 = vmatpush2.msra.mxu0 0.0
    %2567 = vmatprep.subr.mxu0 0.0
    %2568 = vmatpush2.msra.mxu0 0.0
    %2569 = vmatprep.subr.mxu0 0.0
    %2570 = vmatpush2.msra.mxu0 0.0
    %2571 = vmatprep.subr.mxu0 0.0
    %2572 = vmatpush2.msra.mxu0 0.0
    %2573 = vmatprep.subr.mxu0 0.0
    %2574 = vmatpush2.msra.mxu0 0.0
    %2575 = vmatprep.subr.mxu0 0.0
    %2576 = vmatpush2.msra.mxu0 0.0
    %2577 = vmatprep.subr.mxu0 0.0
    %2578 = vmatpush2.msra.mxu0 0.0
    %2579 = vmatprep.subr.mxu0 0.0
    %2580 = vmatpush2.msra.mxu0 0.0
    %2581 = vmatprep.subr.mxu0 0.0
    %2582 = vmatpush2.msra.mxu0 0.0
    %2583 = vmatprep.subr.mxu0 0.0
    %2584 = vmatpush2.msra.mxu0 0.0
    %2585 = vmatprep.subr.mxu0 0.0
    %2586 = vmatpush2.msra.mxu0 0.0
    %2587 = vmatprep.subr.mxu0 0.0
    %2588 = vmatpush2.msra.mxu0 0.0
    %2589 = vmatprep.subr.mxu0 0.0
    %2590 = vmatpush2.msra.mxu0 0.0
    %2591 = vmatprep.subr.mxu0 0.0
    %2592 = vmatpush2.msra.mxu0 0.0
    %2593 = vmatprep.subr.mxu0 0.0
    %2594 = vmatpush2.msra.mxu0 0.0
    %2595 = vmatprep.subr.mxu0 0.0
    %2596 = vmatpush2.msra.mxu0 0.0
    %2597 = vmatprep.mubr.f32.mxu0 0.0
    %2598 = vmatmul.mubr.f32.gmra.mxu0 %v2528
    %v2599 = vpop.f32.mrf.mxu0
    %v2600 = vadd.f32 0.0, %v2599
    %v2601 = vpop.f32.mrf.mxu0
    %2602 = vmatprep.mubr.f32.mxu0 0.0
    %2603 = vmatmul.mubr.f32.gmra.mxu0 %v2531
    %v2604 = vpop.f32.mrf.mxu0
    %v2605 = vadd.f32 0.0, %v2604
    %v2606 = vpop.f32.mrf.mxu0
    %2607 = vdwg.mxu0
    %2608 = vrot.lane.b32.xlu0 %v1836, 104
    %v2609 = vpop.permute.xlu0 %2608
    %2610 = vrot.lane.b32.xlu0 %v1837, 104
    %v2611 = vpop.permute.xlu0 %2610
    %2612 = vrot.lane.b32.xlu0 %v1916, 104
    %v2613 = vpop.permute.xlu0 %2612
    %2614 = vrot.lane.b32.xlu0 %v1921, 104
    %v2615 = vpop.permute.xlu0 %2614
    %v2616 = vsel %vm491, %v2609, 0
    %v2618 = vsel %vm491, %v2611, 0
    %v2620 = vsel %vm491, %v2613, 0
    %v2622 = vsel %vm491, %v2615, 0
    %2624 = vmatprep.subr.mxu0 0.0
    %2625 = vmatpush1.xpose.msra.mxu0 0.0
    %2626 = vmatprep.subr.mxu0 0.0
    %2627 = vmatpush1.xpose.msra.mxu0 0.0
    %2628 = vmatprep.subr.mxu0 0.0
    %2629 = vmatpush1.xpose.msra.mxu0 0.0
    %2630 = vmatprep.subr.mxu0 0.0
    %2631 = vmatpush1.xpose.msra.mxu0 0.0
    %2632 = vmatprep.subr.mxu0 0.0
    %2633 = vmatpush1.xpose.msra.mxu0 0.0
    %2634 = vmatprep.subr.mxu0 0.0
    %2635 = vmatpush1.xpose.msra.mxu0 0.0
    %2636 = vmatprep.subr.mxu0 0.0
    %2637 = vmatpush1.xpose.msra.mxu0 0.0
    %2638 = vmatprep.subr.mxu0 0.0
    %2639 = vmatpush1.xpose.msra.mxu0 0.0
    %2640 = vmatprep.subr.mxu0 0.0
    %2641 = vmatpush1.xpose.msra.mxu0 0.0
    %2642 = vmatprep.subr.mxu0 0.0
    %2643 = vmatpush1.xpose.msra.mxu0 0.0
    %2644 = vmatprep.subr.mxu0 0.0
    %2645 = vmatpush1.xpose.msra.mxu0 0.0
    %2646 = vmatprep.subr.mxu0 0.0
    %2647 = vmatpush1.xpose.msra.mxu0 0.0
    %2648 = vmatprep.subr.mxu0 0.0
    %2649 = vmatpush1.xpose.msra.mxu0 0.0
    %2650 = vmatprep.subr.mxu0 0.0
    %2651 = vmatpush1.xpose.msra.mxu0 0.0
    %2652 = vmatprep.subr.mxu0 0.0
    %2653 = vmatpush1.xpose.msra.mxu0 %v2622
    %2654 = vmatprep.subr.mxu0 0.0
    %2655 = vmatpush1.xpose.msra.mxu0 %v2620
    %2656 = vmatprep.subr.mxu0 0.0
    %2657 = vmatpush2.xpose.msra.mxu0 0.0
    %2658 = vmatprep.subr.mxu0 0.0
    %2659 = vmatpush2.xpose.msra.mxu0 0.0
    %2660 = vmatprep.subr.mxu0 0.0
    %2661 = vmatpush2.xpose.msra.mxu0 0.0
    %2662 = vmatprep.subr.mxu0 0.0
    %2663 = vmatpush2.xpose.msra.mxu0 0.0
    %2664 = vmatprep.subr.mxu0 0.0
    %2665 = vmatpush2.xpose.msra.mxu0 0.0
    %2666 = vmatprep.subr.mxu0 0.0
    %2667 = vmatpush2.xpose.msra.mxu0 0.0
    %2668 = vmatprep.subr.mxu0 0.0
    %2669 = vmatpush2.xpose.msra.mxu0 0.0
    %2670 = vmatprep.subr.mxu0 0.0
    %2671 = vmatpush2.xpose.msra.mxu0 0.0
    %2672 = vmatprep.subr.mxu0 0.0
    %2673 = vmatpush2.xpose.msra.mxu0 0.0
    %2674 = vmatprep.subr.mxu0 0.0
    %2675 = vmatpush2.xpose.msra.mxu0 0.0
    %2676 = vmatprep.subr.mxu0 0.0
    %2677 = vmatpush2.xpose.msra.mxu0 0.0
    %2678 = vmatprep.subr.mxu0 0.0
    %2679 = vmatpush2.xpose.msra.mxu0 0.0
    %2680 = vmatprep.subr.mxu0 0.0
    %2681 = vmatpush2.xpose.msra.mxu0 0.0
    %2682 = vmatprep.subr.mxu0 0.0
    %2683 = vmatpush2.xpose.msra.mxu0 0.0
    %2684 = vmatprep.subr.mxu0 0.0
    %2685 = vmatpush2.xpose.msra.mxu0 0.0
    %2686 = vmatprep.subr.mxu0 0.0
    %2687 = vmatpush2.xpose.msra.mxu0 0.0
    %2688 = vmatprep.mubr.f32.mxu0 0.0
    %2689 = vmatmul.mubr.f32.gmra.mxu0 %v2616
    %v2690 = vpop.f32.mrf.mxu0
    %v2691 = vadd.f32 0.0, %v2690
    %v2692 = vpop.f32.mrf.mxu0
    %2693 = vmatprep.mubr.f32.mxu0 0.0
    %2694 = vmatmul.mubr.f32.gmra.mxu0 %v2618
    %v2695 = vpop.f32.mrf.mxu0
    %v2696 = vadd.f32 0.0, %v2695
    %v2697 = vpop.f32.mrf.mxu0
    %2698 = vdwg.mxu0
    %v2699 = vsel %vm163, %v2691, -10000.0
    %v2700 = vsel %vm164, %v2696, -10000.0
    %v2701 = vsel %vm581, %v2699, -inf
    %2702 = vmax.xlane.f32.xlu0 %v2701
    %v2703 = vpop.xlane.xlu0 %2702
    %v2704 = vsel %vm581, %v2700, -inf
    %2705 = vmax.xlane.f32.xlu0 %v2704
    %v2706 = vpop.xlane.xlu0 %2705
    %v2707 = vsub.f32 %v2699, %v2703
    %v2708 = vsub.f32 %v2700, %v2706
    %v2709 = vmul.f32 %v2707, 1.442695
    %v2710 = vpow.pop %v2709
    %v2711 = vmul.f32 %v2708, 1.442695
    %v2712 = vpow.pop %v2711
    %v2713 = vsel %vm581, %v2710, 0.0
    %2714 = vadd.xlane.f32.xlu0 %v2713
    %v2715 = vpop.xlane.xlu0 %2714
    %v2716 = vsel %vm581, %v2712, 0.0
    %2717 = vadd.xlane.f32.xlu0 %v2716
    %v2718 = vpop.xlane.xlu0 %2717
    %v2719 = vrcp.pop %v2715
    %v2720 = vmul.f32 %v2710, %v2719
    %v2721 = vrcp.pop %v2718
    %v2722 = vmul.f32 %v2712, %v2721
    %2723 = vrot.lane.b32.xlu0 %v2002, 104
    %v2724 = vpop.permute.xlu0 %2723
    %2725 = vrot.lane.b32.xlu0 %v2007, 104
    %v2726 = vpop.permute.xlu0 %2725
    %v2730 = vsel %vm581, %v2720, 0
    %v2733 = vsel %vm581, %v2722, 0
    %2735 = vmatprep.subr.mxu0 0.0
    %2736 = vmatpush1.msra.mxu0 0.0
    %2737 = vmatprep.subr.mxu0 0.0
    %2738 = vmatpush1.msra.mxu0 0.0
    %2739 = vmatprep.subr.mxu0 0.0
    %2740 = vmatpush1.msra.mxu0 0.0
    %2741 = vmatprep.subr.mxu0 0.0
    %2742 = vmatpush1.msra.mxu0 0.0
    %2743 = vmatprep.subr.mxu0 0.0
    %2744 = vmatpush1.msra.mxu0 0.0
    %2745 = vmatprep.subr.mxu0 0.0
    %2746 = vmatpush1.msra.mxu0 0.0
    %2747 = vmatprep.subr.mxu0 0.0
    %2748 = vmatpush1.msra.mxu0 0.0
    %2749 = vmatprep.subr.mxu0 0.0
    %2750 = vmatpush1.msra.mxu0 0.0
    %2751 = vmatprep.subr.mxu0 0.0
    %2752 = vmatpush1.msra.mxu0 0.0
    %2753 = vmatprep.subr.mxu0 0.0
    %2754 = vmatpush1.msra.mxu0 0.0
    %2755 = vmatprep.subr.mxu0 0.0
    %2756 = vmatpush1.msra.mxu0 0.0
    %2757 = vmatprep.subr.mxu0 0.0
    %2758 = vmatpush1.msra.mxu0 0.0
    %2759 = vmatprep.subr.mxu0 0.0
    %2760 = vmatpush1.msra.mxu0 0.0
    %2761 = vmatprep.subr.mxu0 0.0
    %2762 = vmatpush1.msra.mxu0 0.0
    %2763 = vmatprep.subr.mxu0 0.0
    %2764 = vmatpush1.msra.mxu0 %v2726
    %2765 = vmatprep.subr.mxu0 0.0
    %2766 = vmatpush1.msra.mxu0 %v2724
    %2767 = vmatprep.subr.mxu0 0.0
    %2768 = vmatpush2.msra.mxu0 0.0
    %2769 = vmatprep.subr.mxu0 0.0
    %2770 = vmatpush2.msra.mxu0 0.0
    %2771 = vmatprep.subr.mxu0 0.0
    %2772 = vmatpush2.msra.mxu0 0.0
    %2773 = vmatprep.subr.mxu0 0.0
    %2774 = vmatpush2.msra.mxu0 0.0
    %2775 = vmatprep.subr.mxu0 0.0
    %2776 = vmatpush2.msra.mxu0 0.0
    %2777 = vmatprep.subr.mxu0 0.0
    %2778 = vmatpush2.msra.mxu0 0.0
    %2779 = vmatprep.subr.mxu0 0.0
    %2780 = vmatpush2.msra.mxu0 0.0
    %2781 = vmatprep.subr.mxu0 0.0
    %2782 = vmatpush2.msra.mxu0 0.0
    %2783 = vmatprep.subr.mxu0 0.0
    %2784 = vmatpush2.msra.mxu0 0.0
    %2785 = vmatprep.subr.mxu0 0.0
    %2786 = vmatpush2.msra.mxu0 0.0
    %2787 = vmatprep.subr.mxu0 0.0
    %2788 = vmatpush2.msra.mxu0 0.0
    %2789 = vmatprep.subr.mxu0 0.0
    %2790 = vmatpush2.msra.mxu0 0.0
    %2791 = vmatprep.subr.mxu0 0.0
    %2792 = vmatpush2.msra.mxu0 0.0
    %2793 = vmatprep.subr.mxu0 0.0
    %2794 = vmatpush2.msra.mxu0 0.0
    %2795 = vmatprep.subr.mxu0 0.0
    %2796 = vmatpush2.msra.mxu0 0.0
    %2797 = vmatprep.subr.mxu0 0.0
    %2798 = vmatpush2.msra.mxu0 0.0
    %2799 = vmatprep.mubr.f32.mxu0 0.0
    %2800 = vmatmul.mubr.f32.gmra.mxu0 %v2730
    %v2801 = vpop.f32.mrf.mxu0
    %v2802 = vadd.f32 0.0, %v2801
    %v2803 = vpop.f32.mrf.mxu0
    %2804 = vmatprep.mubr.f32.mxu0 0.0
    %2805 = vmatmul.mubr.f32.gmra.mxu0 %v2733
    %v2806 = vpop.f32.mrf.mxu0
    %v2807 = vadd.f32 0.0, %v2806
    %v2808 = vpop.f32.mrf.mxu0
    %2809 = vdwg.mxu0
    %2812 = vrot.lane.b32.xlu0 %v2398, 8
    %v2813 = vpop.permute.xlu0 %2812
    %2814 = vrot.lane.b32.xlu0 %v2403, 8
    %v2815 = vpop.permute.xlu0 %2814
    %2820 = vrot.lane.b32.xlu0 %v2600, 16
    %v2821 = vpop.permute.xlu0 %2820
    %2822 = vrot.lane.b32.xlu0 %v2605, 16
    %v2823 = vpop.permute.xlu0 %2822
    %2828 = vrot.lane.b32.xlu0 %v2802, 24
    %v2829 = vpop.permute.xlu0 %2828
    %2830 = vrot.lane.b32.xlu0 %v2807, 24
    %v2831 = vpop.permute.xlu0 %2830
    %v2834 = vsel %vm491, %v2194, %v2813
    %v2835 = vsel %vm491, %v2199, %v2815
    %v2836 = vsel %vm581, %v2834, %v2821
    %v2837 = vsel %vm581, %v2835, %v2823
    %v2838 = vsel %vm1321, %v2836, %v2829
    %v2839 = vsel %vm1321, %v2837, %v2831
    %v2840 = vld [vmem:[%s53] sm:$0xff]
    %v2841 = vld [vmem:[%s53 + $0x8] sm:$0xff]
    %v2842 = vld [vmem:[%s53 + $0x10] sm:$0xff]
    %v2843 = vld [vmem:[%s53 + $0x18] sm:$0xff]
    %v2844 = vld [vmem:[%s55] sm:$0x1]
    %v2846 = vlaneseq
    %v2847 = vshrl.u32 %v2846, 7
    %v2848 = vsub.s32 0, %v2847
    %v2849 = vrot.slane %v2844, %v2848
    %v2852 = vsel %vm167, %v2838, 0
    %v2855 = vsel %vm167, %v2839, 0
    %2857 = vmatprep.subr.mxu0 0.0
    %2858 = vmatpush1.msra.mxu0 0.0
    %2859 = vmatprep.subr.mxu0 0.0
    %2860 = vmatpush1.msra.mxu0 0.0
    %2861 = vmatprep.subr.mxu0 0.0
    %2862 = vmatpush1.msra.mxu0 0.0
    %2863 = vmatprep.subr.mxu0 0.0
    %2864 = vmatpush1.msra.mxu0 0.0
    %2865 = vmatprep.subr.mxu0 0.0
    %2866 = vmatpush1.msra.mxu0 0.0
    %2867 = vmatprep.subr.mxu0 0.0
    %2868 = vmatpush1.msra.mxu0 0.0
    %2869 = vmatprep.subr.mxu0 0.0
    %2870 = vmatpush1.msra.mxu0 0.0
    %2871 = vmatprep.subr.mxu0 0.0
    %2872 = vmatpush1.msra.mxu0 0.0
    %2873 = vmatprep.subr.mxu0 0.0
    %2874 = vmatpush1.msra.mxu0 0.0
    %2875 = vmatprep.subr.mxu0 0.0
    %2876 = vmatpush1.msra.mxu0 0.0
    %2877 = vmatprep.subr.mxu0 0.0
    %2878 = vmatpush1.msra.mxu0 0.0
    %2879 = vmatprep.subr.mxu0 0.0
    %2880 = vmatpush1.msra.mxu0 0.0
    %2881 = vmatprep.subr.mxu0 0.0
    %2882 = vmatpush1.msra.mxu0 %v2843
    %2883 = vmatprep.subr.mxu0 0.0
    %2884 = vmatpush1.msra.mxu0 %v2842
    %2885 = vmatprep.subr.mxu0 0.0
    %2886 = vmatpush1.msra.mxu0 %v2841
    %2887 = vmatprep.subr.mxu0 0.0
    %2888 = vmatpush1.msra.mxu0 %v2840
    %2889 = vmatprep.subr.mxu0 0.0
    %2890 = vmatpush2.msra.mxu0 0.0
    %2891 = vmatprep.subr.mxu0 0.0
    %2892 = vmatpush2.msra.mxu0 0.0
    %2893 = vmatprep.subr.mxu0 0.0
    %2894 = vmatpush2.msra.mxu0 0.0
    %2895 = vmatprep.subr.mxu0 0.0
    %2896 = vmatpush2.msra.mxu0 0.0
    %2897 = vmatprep.subr.mxu0 0.0
    %2898 = vmatpush2.msra.mxu0 0.0
    %2899 = vmatprep.subr.mxu0 0.0
    %2900 = vmatpush2.msra.mxu0 0.0
    %2901 = vmatprep.subr.mxu0 0.0
    %2902 = vmatpush2.msra.mxu0 0.0
    %2903 = vmatprep.subr.mxu0 0.0
    %2904 = vmatpush2.msra.mxu0 0.0
    %2905 = vmatprep.subr.mxu0 0.0
    %2906 = vmatpush2.msra.mxu0 0.0
    %2907 = vmatprep.subr.mxu0 0.0
    %2908 = vmatpush2.msra.mxu0 0.0
    %2909 = vmatprep.subr.mxu0 0.0
    %2910 = vmatpush2.msra.mxu0 0.0
    %2911 = vmatprep.subr.mxu0 0.0
    %2912 = vmatpush2.msra.mxu0 0.0
    %2913 = vmatprep.subr.mxu0 0.0
    %2914 = vmatpush2.msra.mxu0 0.0
    %2915 = vmatprep.subr.mxu0 0.0
    %2916 = vmatpush2.msra.mxu0 0.0
    %2917 = vmatprep.subr.mxu0 0.0
    %2918 = vmatpush2.msra.mxu0 0.0
    %2919 = vmatprep.subr.mxu0 0.0
    %2920 = vmatpush2.msra.mxu0 0.0
    %2921 = vmatprep.mubr.f32.mxu0 0.0
    %2922 = vmatmul.mubr.f32.gmra.mxu0 %v2852
    %v2923 = vpop.f32.mrf.mxu0
    %v2924 = vadd.f32 %v2849, %v2923
    %v2925 = vpop.f32.mrf.mxu0
    %2926 = vmatprep.mubr.f32.mxu0 0.0
    %2927 = vmatmul.mubr.f32.gmra.mxu0 %v2855
    %v2928 = vpop.f32.mrf.mxu0
    %v2929 = vadd.f32 %v2849, %v2928
    %v2930 = vpop.f32.mrf.mxu0
    %2931 = vdwg.mxu0
    %v2932 = vadd.f32 %v1684, %v2924
    %v2933 = vadd.f32 %v1685, %v2929
    %v2934 = vld [vmem:[%s57] sm:$0x1]
    %v2935 = vld [vmem:[%s59] sm:$0x1]
    %v2936 = vsel %vm167, %v2932, 0.0
    %2937 = vadd.xlane.f32.xlu0 %v2936
    %v2938 = vpop.xlane.xlu0 %2937
    %v2939 = vsel %vm167, %v2933, 0.0
    %2940 = vadd.xlane.f32.xlu0 %v2939
    %v2941 = vpop.xlane.xlu0 %2940
    %v2942 = vmul.f32 %v2938, %v174
    %v2943 = vmul.f32 %v2941, %v174
    %v2944 = vsub.f32 %v2932, %v2942
    %v2945 = vsub.f32 %v2933, %v2943
    %v2946 = vmul.f32 %v2944, %v2944
    %v2947 = vmul.f32 %v2945, %v2945
    %v2948 = vsel %vm167, %v2946, 0.0
    %2949 = vadd.xlane.f32.xlu0 %v2948
    %v2950 = vpop.xlane.xlu0 %2949
    %v2951 = vsel %vm167, %v2947, 0.0
    %2952 = vadd.xlane.f32.xlu0 %v2951
    %v2953 = vpop.xlane.xlu0 %2952
    %v2954 = vmul.f32 %v2950, %v174
    %v2955 = vmul.f32 %v2953, %v174
    %v2956 = vadd.f32 %v2954, 1e-05
    %v2957 = vadd.f32 %v2955, 1e-05
    %v2958 = vrsqrt.pop %v2956
    %v2959 = vmul.f32 %v2956, %v2958
    %vm2960 = vcmp.eq.f32.partialorder %v2956, inf
    %v2961 = vsel %vm2960, %v2956, %v2959
    %vm2962 = vcmp.eq.f32.partialorder %v2956, 0.0
    %v2963 = vand.u32 %v2956, 2147483648
    %v2964 = vsel %vm2962, %v2963, %v2961
    %v2965 = vrsqrt.pop %v2957
    %v2966 = vmul.f32 %v2957, %v2965
    %vm2967 = vcmp.eq.f32.partialorder %v2957, inf
    %v2968 = vsel %vm2967, %v2957, %v2966
    %vm2969 = vcmp.eq.f32.partialorder %v2957, 0.0
    %v2970 = vand.u32 %v2957, 2147483648
    %v2971 = vsel %vm2969, %v2970, %v2968
    %v2972 = vrcp.pop %v2964
    %v2973 = vmul.f32 %v2944, %v2972
    %v2974 = vrcp.pop %v2971
    %v2975 = vmul.f32 %v2945, %v2974
    %v2977 = vlaneseq
    %v2978 = vshrl.u32 %v2977, 7
    %v2979 = vsub.s32 0, %v2978
    %v2980 = vrot.slane %v2934, %v2979
    %v2982 = vmul.f32 %v2973, %v2980
    %v2983 = vmul.f32 %v2975, %v2980
    %v2985 = vlaneseq
    %v2986 = vshrl.u32 %v2985, 7
    %v2987 = vsub.s32 0, %v2986
    %v2988 = vrot.slane %v2935, %v2987
    %v2990 = vadd.f32 %v2982, %v2988
    %v2991 = vadd.f32 %v2983, %v2988
    %v2992 = vld [vmem:[%s61] sm:$0xff]
    %v2993 = vld [vmem:[%s61 + $0x8] sm:$0xff]
    %v2994 = vld [vmem:[%s61 + $0x10] sm:$0xff]
    %v2995 = vld [vmem:[%s61 + $0x18] sm:$0xff]
    %v2996 = vld [vmem:[%s63] sm:$0x1]
    %v2998 = vlaneseq
    %v2999 = vshrl.u32 %v2998, 7
    %v3000 = vsub.s32 0, %v2999
    %v3001 = vrot.slane %v2996, %v3000
    %v3004 = vsel %vm167, %v2990, 0
    %v3007 = vsel %vm167, %v2991, 0
    %3009 = vmatprep.subr.mxu0 0.0
    %3010 = vmatpush1.msra.mxu0 0.0
    %3011 = vmatprep.subr.mxu0 0.0
    %3012 = vmatpush1.msra.mxu0 0.0
    %3013 = vmatprep.subr.mxu0 0.0
    %3014 = vmatpush1.msra.mxu0 0.0
    %3015 = vmatprep.subr.mxu0 0.0
    %3016 = vmatpush1.msra.mxu0 0.0
    %3017 = vmatprep.subr.mxu0 0.0
    %3018 = vmatpush1.msra.mxu0 0.0
    %3019 = vmatprep.subr.mxu0 0.0
    %3020 = vmatpush1.msra.mxu0 0.0
    %3021 = vmatprep.subr.mxu0 0.0
    %3022 = vmatpush1.msra.mxu0 0.0
    %3023 = vmatprep.subr.mxu0 0.0
    %3024 = vmatpush1.msra.mxu0 0.0
    %3025 = vmatprep.subr.mxu0 0.0
    %3026 = vmatpush1.msra.mxu0 0.0
    %3027 = vmatprep.subr.mxu0 0.0
    %3028 = vmatpush1.msra.mxu0 0.0
    %3029 = vmatprep.subr.mxu0 0.0
    %3030 = vmatpush1.msra.mxu0 0.0
    %3031 = vmatprep.subr.mxu0 0.0
    %3032 = vmatpush1.msra.mxu0 0.0
    %3033 = vmatprep.subr.mxu0 0.0
    %3034 = vmatpush1.msra.mxu0 %v2995
    %3035 = vmatprep.subr.mxu0 0.0
    %3036 = vmatpush1.msra.mxu0 %v2994
    %3037 = vmatprep.subr.mxu0 0.0
    %3038 = vmatpush1.msra.mxu0 %v2993
    %3039 = vmatprep.subr.mxu0 0.0
    %3040 = vmatpush1.msra.mxu0 %v2992
    %3041 = vmatprep.subr.mxu0 0.0
    %3042 = vmatpush2.msra.mxu0 0.0
    %3043 = vmatprep.subr.mxu0 0.0
    %3044 = vmatpush2.msra.mxu0 0.0
    %3045 = vmatprep.subr.mxu0 0.0
    %3046 = vmatpush2.msra.mxu0 0.0
    %3047 = vmatprep.subr.mxu0 0.0
    %3048 = vmatpush2.msra.mxu0 0.0
    %3049 = vmatprep.subr.mxu0 0.0
    %3050 = vmatpush2.msra.mxu0 0.0
    %3051 = vmatprep.subr.mxu0 0.0
    %3052 = vmatpush2.msra.mxu0 0.0
    %3053 = vmatprep.subr.mxu0 0.0
    %3054 = vmatpush2.msra.mxu0 0.0
    %3055 = vmatprep.subr.mxu0 0.0
    %3056 = vmatpush2.msra.mxu0 0.0
    %3057 = vmatprep.subr.mxu0 0.0
    %3058 = vmatpush2.msra.mxu0 0.0
    %3059 = vmatprep.subr.mxu0 0.0
    %3060 = vmatpush2.msra.mxu0 0.0
    %3061 = vmatprep.subr.mxu0 0.0
    %3062 = vmatpush2.msra.mxu0 0.0
    %3063 = vmatprep.subr.mxu0 0.0
    %3064 = vmatpush2.msra.mxu0 0.0
    %3065 = vmatprep.subr.mxu0 0.0
    %3066 = vmatpush2.msra.mxu0 0.0
    %3067 = vmatprep.subr.mxu0 0.0
    %3068 = vmatpush2.msra.mxu0 0.0
    %3069 = vmatprep.subr.mxu0 0.0
    %3070 = vmatpush2.msra.mxu0 0.0
    %3071 = vmatprep.subr.mxu0 0.0
    %3072 = vmatpush2.msra.mxu0 0.0
    %3073 = vmatprep.mubr.f32.mxu0 0.0
    %3074 = vmatmul.mubr.f32.gmra.mxu0 %v3004
    %v3075 = vpop.f32.mrf.mxu0
    %v3076 = vadd.f32 %v3001, %v3075
    %v3077 = vpop.f32.mrf.mxu0
    %3078 = vmatprep.mubr.f32.mxu0 0.0
    %3079 = vmatmul.mubr.f32.gmra.mxu0 %v3007
    %v3080 = vpop.f32.mrf.mxu0
    %v3081 = vadd.f32 %v3001, %v3080
    %v3082 = vpop.f32.mrf.mxu0
    %3083 = vdwg.mxu0
    %v3084 = vmul.f32 %v3076, 0.5
    %v3085 = vmul.f32 %v3081, 0.5
    %v3086 = vmul.f32 %v3076, 0.044715
    %v3087 = vmul.f32 %v3081, 0.044715
    %v3088 = vmul.f32 %v3086, %v3076
    %v3089 = vmul.f32 %v3087, %v3081
    %v3090 = vmul.f32 %v3088, %v3076
    %v3091 = vmul.f32 %v3089, %v3081
    %v3092 = vadd.f32 %v3076, %v3090
    %v3093 = vadd.f32 %v3081, %v3091
    %v3094 = vmul.f32 %v3092, 0.7978845
    %v3095 = vmul.f32 %v3093, 0.7978845
    %v3096 = vtanh.pop %v3094
    %v3097 = vtanh.pop %v3095
    %v3098 = vadd.f32 %v3096, 1.0
    %v3099 = vadd.f32 %v3097, 1.0
    %v3100 = vmul.f32 %v3084, %v3098
    %v3101 = vmul.f32 %v3085, %v3099
    %v3102 = vld [vmem:[%s65] sm:$0xff]
    %v3103 = vld [vmem:[%s65 + $0x8] sm:$0xff]
    %v3104 = vld [vmem:[%s65 + $0x10] sm:$0xff]
    %v3105 = vld [vmem:[%s65 + $0x18] sm:$0xff]
    %v3106 = vld [vmem:[%s65 + $0x20] sm:$0xff]
    %v3107 = vld [vmem:[%s65 + $0x28] sm:$0xff]
    %v3108 = vld [vmem:[%s65 + $0x30] sm:$0xff]
    %v3109 = vld [vmem:[%s65 + $0x38] sm:$0xff]
    %v3110 = vld [vmem:[%s65 + $0x40] sm:$0xff]
    %v3111 = vld [vmem:[%s65 + $0x48] sm:$0xff]
    %v3112 = vld [vmem:[%s65 + $0x50] sm:$0xff]
    %v3113 = vld [vmem:[%s65 + $0x58] sm:$0xff]
    %v3114 = vld [vmem:[%s65 + $0x60] sm:$0xff]
    %v3115 = vld [vmem:[%s65 + $0x68] sm:$0xff]
    %v3116 = vld [vmem:[%s65 + $0x70] sm:$0xff]
    %v3117 = vld [vmem:[%s65 + $0x78] sm:$0xff]
    %v3118 = vld [vmem:[%s67] sm:$0x1]
    %v3120 = vlaneseq
    %v3121 = vshrl.u32 %v3120, 7
    %v3122 = vsub.s32 0, %v3121
    %v3123 = vrot.slane %v3118, %v3122
    %3125 = vmatprep.subr.mxu0 0.0
    %3126 = vmatpush1.msra.mxu0 %v3117
    %3127 = vmatprep.subr.mxu0 0.0
    %3128 = vmatpush1.msra.mxu0 %v3116
    %3129 = vmatprep.subr.mxu0 0.0
    %3130 = vmatpush1.msra.mxu0 %v3115
    %3131 = vmatprep.subr.mxu0 0.0
    %3132 = vmatpush1.msra.mxu0 %v3114
    %3133 = vmatprep.subr.mxu0 0.0
    %3134 = vmatpush1.msra.mxu0 %v3113
    %3135 = vmatprep.subr.mxu0 0.0
    %3136 = vmatpush1.msra.mxu0 %v3112
    %3137 = vmatprep.subr.mxu0 0.0
    %3138 = vmatpush1.msra.mxu0 %v3111
    %3139 = vmatprep.subr.mxu0 0.0
    %3140 = vmatpush1.msra.mxu0 %v3110
    %3141 = vmatprep.subr.mxu0 0.0
    %3142 = vmatpush1.msra.mxu0 %v3109
    %3143 = vmatprep.subr.mxu0 0.0
    %3144 = vmatpush1.msra.mxu0 %v3108
    %3145 = vmatprep.subr.mxu0 0.0
    %3146 = vmatpush1.msra.mxu0 %v3107
    %3147 = vmatprep.subr.mxu0 0.0
    %3148 = vmatpush1.msra.mxu0 %v3106
    %3149 = vmatprep.subr.mxu0 0.0
    %3150 = vmatpush1.msra.mxu0 %v3105
    %3151 = vmatprep.subr.mxu0 0.0
    %3152 = vmatpush1.msra.mxu0 %v3104
    %3153 = vmatprep.subr.mxu0 0.0
    %3154 = vmatpush1.msra.mxu0 %v3103
    %3155 = vmatprep.subr.mxu0 0.0
    %3156 = vmatpush1.msra.mxu0 %v3102
    %3157 = vmatprep.subr.mxu0 0.0
    %3158 = vmatpush2.msra.mxu0 0.0
    %3159 = vmatprep.subr.mxu0 0.0
    %3160 = vmatpush2.msra.mxu0 0.0
    %3161 = vmatprep.subr.mxu0 0.0
    %3162 = vmatpush2.msra.mxu0 0.0
    %3163 = vmatprep.subr.mxu0 0.0
    %3164 = vmatpush2.msra.mxu0 0.0
    %3165 = vmatprep.subr.mxu0 0.0
    %3166 = vmatpush2.msra.mxu0 0.0
    %3167 = vmatprep.subr.mxu0 0.0
    %3168 = vmatpush2.msra.mxu0 0.0
    %3169 = vmatprep.subr.mxu0 0.0
    %3170 = vmatpush2.msra.mxu0 0.0
    %3171 = vmatprep.subr.mxu0 0.0
    %3172 = vmatpush2.msra.mxu0 0.0
    %3173 = vmatprep.subr.mxu0 0.0
    %3174 = vmatpush2.msra.mxu0 0.0
    %3175 = vmatprep.subr.mxu0 0.0
    %3176 = vmatpush2.msra.mxu0 0.0
    %3177 = vmatprep.subr.mxu0 0.0
    %3178 = vmatpush2.msra.mxu0 0.0
    %3179 = vmatprep.subr.mxu0 0.0
    %3180 = vmatpush2.msra.mxu0 0.0
    %3181 = vmatprep.subr.mxu0 0.0
    %3182 = vmatpush2.msra.mxu0 0.0
    %3183 = vmatprep.subr.mxu0 0.0
    %3184 = vmatpush2.msra.mxu0 0.0
    %3185 = vmatprep.subr.mxu0 0.0
    %3186 = vmatpush2.msra.mxu0 0.0
    %3187 = vmatprep.subr.mxu0 0.0
    %3188 = vmatpush2.msra.mxu0 0.0
    %3189 = vmatprep.mubr.f32.mxu0 0.0
    %3190 = vmatmul.mubr.f32.gmra.mxu0 %v3100
    %v3191 = vpop.f32.mrf.mxu0
    %v3192 = vadd.f32 %v3123, %v3191
    %v3193 = vpop.f32.mrf.mxu0
    %3194 = vmatprep.mubr.f32.mxu0 0.0
    %3195 = vmatmul.mubr.f32.gmra.mxu0 %v3101
    %v3196 = vpop.f32.mrf.mxu0
    %v3197 = vadd.f32 %v3123, %v3196
    %v3198 = vpop.f32.mrf.mxu0
    %3199 = vdwg.mxu0
    %v3200 = vadd.f32 %v2932, %v3192
    %v3201 = vadd.f32 %v2933, %v3197
    %v3202 = vld [vmem:[%s69] sm:$0x1]
    %v3203 = vld [vmem:[%s71] sm:$0x1]
    %v3204 = vsel %vm167, %v3200, 0.0
    %3205 = vadd.xlane.f32.xlu0 %v3204
    %v3206 = vpop.xlane.xlu0 %3205
    %v3207 = vsel %vm167, %v3201, 0.0
    %3208 = vadd.xlane.f32.xlu0 %v3207
    %v3209 = vpop.xlane.xlu0 %3208
    %v3210 = vmul.f32 %v3206, %v174
    %v3211 = vmul.f32 %v3209, %v174
    %v3212 = vsub.f32 %v3200, %v3210
    %v3213 = vsub.f32 %v3201, %v3211
    %v3214 = vmul.f32 %v3212, %v3212
    %v3215 = vmul.f32 %v3213, %v3213
    %v3216 = vsel %vm167, %v3214, 0.0
    %3217 = vadd.xlane.f32.xlu0 %v3216
    %v3218 = vpop.xlane.xlu0 %3217
    %v3219 = vsel %vm167, %v3215, 0.0
    %3220 = vadd.xlane.f32.xlu0 %v3219
    %v3221 = vpop.xlane.xlu0 %3220
    %v3222 = vmul.f32 %v3218, %v174
    %v3223 = vmul.f32 %v3221, %v174
    %v3224 = vadd.f32 %v3222, 1e-05
    %v3225 = vadd.f32 %v3223, 1e-05
    %v3226 = vrsqrt.pop %v3224
    %v3227 = vmul.f32 %v3224, %v3226
    %vm3228 = vcmp.eq.f32.partialorder %v3224, inf
    %v3229 = vsel %vm3228, %v3224, %v3227
    %vm3230 = vcmp.eq.f32.partialorder %v3224, 0.0
    %v3231 = vand.u32 %v3224, 2147483648
    %v3232 = vsel %vm3230, %v3231, %v3229
    %v3233 = vrsqrt.pop %v3225
    %v3234 = vmul.f32 %v3225, %v3233
    %vm3235 = vcmp.eq.f32.partialorder %v3225, inf
    %v3236 = vsel %vm3235, %v3225, %v3234
    %vm3237 = vcmp.eq.f32.partialorder %v3225, 0.0
    %v3238 = vand.u32 %v3225, 2147483648
    %v3239 = vsel %vm3237, %v3238, %v3236
    %v3240 = vrcp.pop %v3232
    %v3241 = vmul.f32 %v3212, %v3240
    %v3242 = vrcp.pop %v3239
    %v3243 = vmul.f32 %v3213, %v3242
    %v3245 = vlaneseq
    %v3246 = vshrl.u32 %v3245, 7
    %v3247 = vsub.s32 0, %v3246
    %v3248 = vrot.slane %v3202, %v3247
    %v3250 = vmul.f32 %v3241, %v3248
    %v3251 = vmul.f32 %v3243, %v3248
    %v3253 = vlaneseq
    %v3254 = vshrl.u32 %v3253, 7
    %v3255 = vsub.s32 0, %v3254
    %v3256 = vrot.slane %v3203, %v3255
    %v3258 = vadd.f32 %v3250, %v3256
    %v3259 = vadd.f32 %v3251, %v3256
    %v3260 = vld [vmem:[%s73] sm:$0xff]
    %v3261 = vld [vmem:[%s73 + $0x8] sm:$0xff]
    %v3262 = vld [vmem:[%s73 + $0x10] sm:$0xff]
    %v3263 = vld [vmem:[%s73 + $0x18] sm:$0xff]
    %v3264 = vld [vmem:[%s73 + $0x20] sm:$0xff]
    %v3265 = vld [vmem:[%s73 + $0x28] sm:$0xff]
    %v3266 = vld [vmem:[%s73 + $0x30] sm:$0xff]
    %v3267 = vld [vmem:[%s73 + $0x38] sm:$0xff]
    %v3268 = vld [vmem:[%s73 + $0x40] sm:$0xff]
    %v3269 = vld [vmem:[%s73 + $0x48] sm:$0xff]
    %v3270 = vld [vmem:[%s73 + $0x50] sm:$0xff]
    %v3271 = vld [vmem:[%s73 + $0x58] sm:$0xff]
    %v3272 = vld [vmem:[%s73 + $0x60] sm:$0xff]
    %v3273 = vld [vmem:[%s73 + $0x68] sm:$0xff]
    %v3274 = vld [vmem:[%s73 + $0x70] sm:$0xff]
    %v3275 = vld [vmem:[%s73 + $0x78] sm:$0xff]
    %v3276 = vld [vmem:[%s75] sm:$0x1]
    %v3278 = vlaneseq
    %v3279 = vshrl.u32 %v3278, 7
    %v3280 = vsub.s32 0, %v3279
    %v3281 = vrot.slane %v3276, %v3280
    %v3284 = vsel %vm167, %v3258, 0
    %v3287 = vsel %vm167, %v3259, 0
    %v3290 = vsel %vm167, %v3260, 0
    %v3293 = vsel %vm167, %v3261, 0
    %v3296 = vsel %vm167, %v3262, 0
    %v3299 = vsel %vm167, %v3263, 0
    %v3302 = vsel %vm167, %v3264, 0
    %v3305 = vsel %vm167, %v3265, 0
    %v3308 = vsel %vm167, %v3266, 0
    %v3311 = vsel %vm167, %v3267, 0
    %v3314 = vsel %vm167, %v3268, 0
    %v3317 = vsel %vm167, %v3269, 0
    %v3320 = vsel %vm167, %v3270, 0
    %v3323 = vsel %vm167, %v3271, 0
    %v3326 = vsel %vm167, %v3272, 0
    %v3329 = vsel %vm167, %v3273, 0
    %v3332 = vsel %vm167, %v3274, 0
    %v3335 = vsel %vm167, %v3275, 0
    %3337 = vmatprep.subr.mxu0 0.0
    %3338 = vmatpush1.xpose.msra.mxu0 %v3335
    %3339 = vmatprep.subr.mxu0 0.0
    %3340 = vmatpush1.xpose.msra.mxu0 %v3332
    %3341 = vmatprep.subr.mxu0 0.0
    %3342 = vmatpush1.xpose.msra.mxu0 %v3329
    %3343 = vmatprep.subr.mxu0 0.0
    %3344 = vmatpush1.xpose.msra.mxu0 %v3326
    %3345 = vmatprep.subr.mxu0 0.0
    %3346 = vmatpush1.xpose.msra.mxu0 %v3323
    %3347 = vmatprep.subr.mxu0 0.0
    %3348 = vmatpush1.xpose.msra.mxu0 %v3320
    %3349 = vmatprep.subr.mxu0 0.0
    %3350 = vmatpush1.xpose.msra.mxu0 %v3317
    %3351 = vmatprep.subr.mxu0 0.0
    %3352 = vmatpush1.xpose.msra.mxu0 %v3314
    %3353 = vmatprep.subr.mxu0 0.0
    %3354 = vmatpush1.xpose.msra.mxu0 %v3311
    %3355 = vmatprep.subr.mxu0 0.0
    %3356 = vmatpush1.xpose.msra.mxu0 %v3308
    %3357 = vmatprep.subr.mxu0 0.0
    %3358 = vmatpush1.xpose.msra.mxu0 %v3305
    %3359 = vmatprep.subr.mxu0 0.0
    %3360 = vmatpush1.xpose.msra.mxu0 %v3302
    %3361 = vmatprep.subr.mxu0 0.0
    %3362 = vmatpush1.xpose.msra.mxu0 %v3299
    %3363 = vmatprep.subr.mxu0 0.0
    %3364 = vmatpush1.xpose.msra.mxu0 %v3296
    %3365 = vmatprep.subr.mxu0 0.0
    %3366 = vmatpush1.xpose.msra.mxu0 %v3293
    %3367 = vmatprep.subr.mxu0 0.0
    %3368 = vmatpush1.xpose.msra.mxu0 %v3290
    %3369 = vmatprep.subr.mxu0 0.0
    %3370 = vmatpush2.xpose.msra.mxu0 0.0
    %3371 = vmatprep.subr.mxu0 0.0
    %3372 = vmatpush2.xpose.msra.mxu0 0.0
    %3373 = vmatprep.subr.mxu0 0.0
    %3374 = vmatpush2.xpose.msra.mxu0 0.0
    %3375 = vmatprep.subr.mxu0 0.0
    %3376 = vmatpush2.xpose.msra.mxu0 0.0
    %3377 = vmatprep.subr.mxu0 0.0
    %3378 = vmatpush2.xpose.msra.mxu0 0.0
    %3379 = vmatprep.subr.mxu0 0.0
    %3380 = vmatpush2.xpose.msra.mxu0 0.0
    %3381 = vmatprep.subr.mxu0 0.0
    %3382 = vmatpush2.xpose.msra.mxu0 0.0
    %3383 = vmatprep.subr.mxu0 0.0
    %3384 = vmatpush2.xpose.msra.mxu0 0.0
    %3385 = vmatprep.subr.mxu0 0.0
    %3386 = vmatpush2.xpose.msra.mxu0 0.0
    %3387 = vmatprep.subr.mxu0 0.0
    %3388 = vmatpush2.xpose.msra.mxu0 0.0
    %3389 = vmatprep.subr.mxu0 0.0
    %3390 = vmatpush2.xpose.msra.mxu0 0.0
    %3391 = vmatprep.subr.mxu0 0.0
    %3392 = vmatpush2.xpose.msra.mxu0 0.0
    %3393 = vmatprep.subr.mxu0 0.0
    %3394 = vmatpush2.xpose.msra.mxu0 0.0
    %3395 = vmatprep.subr.mxu0 0.0
    %3396 = vmatpush2.xpose.msra.mxu0 0.0
    %3397 = vmatprep.subr.mxu0 0.0
    %3398 = vmatpush2.xpose.msra.mxu0 0.0
    %3399 = vmatprep.subr.mxu0 0.0
    %3400 = vmatpush2.xpose.msra.mxu0 0.0
    %3401 = vmatprep.mubr.f32.mxu0 0.0
    %3402 = vmatmul.mubr.f32.gmra.mxu0 %v3284
    %v3403 = vpop.f32.mrf.mxu0
    %v3404 = vadd.f32 %v3281, %v3403
    %v3405 = vpop.f32.mrf.mxu0
    %3406 = vmatprep.mubr.f32.mxu0 0.0
    %3407 = vmatmul.mubr.f32.gmra.mxu0 %v3287
    %v3408 = vpop.f32.mrf.mxu0
    %v3409 = vadd.f32 %v3281, %v3408
    %v3410 = vpop.f32.mrf.mxu0
    %3411 = vdwg.mxu0
    %3412 = vst [vmem:[#allocation2] sm:$0xff] %v3404
    %3413 = vst [vmem:[#allocation2 + $0x8] sm:$0xff] %v3409
    // Predicated region
    $region154: #{gpt2_lm_head_forward.1} parent=1 // pred_check
      _
    $region155: #{gpt2_lm_head_forward.1} parent=1 // pred_check_branch
      %3415 = sbr.rel (0) target = $region157
    $region156: #{gpt2_lm_head_forward.1} parent=1 // pred_region
      %s3417 = ssub.s32 256, 256
      %3418 = vsyncadd [#allocation3], %s3417
      %s3419 = sshll.u32 [#allocation2], 4
      %s3420 = int_to_ptr.vmem [resolvable:$true] %s3419
      %3425 = dma.vmem_to_hbm [thread:$0]  %s3420, 256, %s77, [#allocation3], 128, 128, 8
    $region157: #{gpt2_lm_head_forward.1} parent=1 // pred_fallthru
      _
    // Predicated region
    $region158: #{gpt2_lm_head_forward.1} parent=1 // pred_check
      _
    $region159: #{gpt2_lm_head_forward.1} parent=1 // pred_check_branch
      %3427 = sbr.rel (0) target = $region161
    $region160: #{gpt2_lm_head_forward.1} parent=1 // pred_region
      %3428 = dma.done [#allocation3], 256
    $region161: #{gpt2_lm_head_forward.1} parent=1 // pred_fallthru
      _
    %3429 = vsyncpa [#allocation3], 1

</llo_original>
